<compile_context>
chip_gen: v7x
topology: tpu7x:2x2x1
jax: 0.10.0
libtpu: 0.0.40
codegen_flags: <defaults>
</compile_context>

<pallas_src>
import jax
import jax.numpy as jnp
from jax.experimental import pallas as pl
from jax.experimental.pallas import tpu as pltpu


NUM_CLASSES = 1000
NUM_CLASSES_PAD = 1024   # lane-dense classifier output, sliced back to 1000
VMEM_LIMIT = 32 * 1024 * 1024


# --------------------------------------------------------------------------
# Pallas kernels
# --------------------------------------------------------------------------
def _make_fused_kernel(shifts, tm, c_in, nm, apply_relu, has_residual):
    """out_tile = maybe_relu(sum_t x[rows+shift_t] @ w[t] + shift [+ residual]).

    bf16 x / bf16 (scale-folded) w, f32 accumulation and f32 epilogue.
    """

    def kernel(*refs):
        if has_residual:
            x_ref, w_ref, b_ref, r_ref, o_ref = refs
        else:
            x_ref, w_ref, b_ref, o_ref = refs
            r_ref = None

        if nm > 1:
            row0 = pl.program_id(0) * tm

        acc = None
        for t, off in enumerate(shifts):
            if nm == 1:
                xs = x_ref[off:off + tm, :]                      # static slice
            else:
                # tm and off are multiples of 8 whenever nm > 1 -> aligned.
                start = pl.multiple_of(row0 + off, 8)
                xs = x_ref[pl.ds(start, tm), :]
            ws = w_ref[t * c_in:(t + 1) * c_in, :]               # static slice
            d = jnp.dot(xs, ws, preferred_element_type=jnp.float32)
            acc = d if acc is None else acc + d

        y = acc + b_ref[...]                                     # f32 epilogue
        if has_residual:
            y = y + r_ref[...].astype(jnp.float32)
        if apply_relu:
            y = jnp.maximum(y, 0.0)
        o_ref[...] = y.astype(o_ref.dtype)

    return kernel


def fused_matmul(x, w, bias, residual=None, apply_relu=True,
                 shifts=(0,), rows_out=None, out_dtype=jnp.bfloat16):
    """out = maybe_relu((sum_t x[s_t:s_t+M] @ w[t]) + bias [+ residual]).

    x:    (R_x, c_in) bf16, R_x >= rows_out + max(shifts)
    w:    (len(shifts)*c_in, N) bf16 (BN scale already folded in)
    bias: (N,) f32 additive shift
    Grid is (row_tiles, col_tiles), both "parallel"; x stays resident in VMEM
    and the full-K weight column tile streams per grid step.
    """
    R_x, cx = x.shape
    Kw, N = w.shape
    n_taps = len(shifts)
    assert Kw % n_taps == 0
    c_in = Kw // n_taps
    assert cx == c_in, (cx, c_in)
    if rows_out is None:
        rows_out = R_x
    assert R_x >= rows_out + max(shifts)

    # Output-column tile (lane-dense, full-K weight tiles are small in bf16).
    if N % 512 == 0:
        tn = 512
    elif N % 256 == 0:
        tn = 256
    elif N % 128 == 0:
        tn = 128
    else:
        tn = N
    # Output-row tile: split only when it yields multiple-of-8 tiles, so v7x's
    # two TensorCores get independent row tiles without unaligned slices.
    if rows_out >= 512 and rows_out % 256 == 0:
        tm = 256
    elif rows_out >= 128 and rows_out % 16 == 0:
        tm = rows_out // 2
    else:
        tm = rows_out
    nm, nn = rows_out // tm, N // tn

    in_specs = [
        pl.BlockSpec((R_x, c_in), lambda i, j: (0, 0)),   # x resident (DMA once)
        pl.BlockSpec((Kw, tn), lambda i, j: (0, j)),      # full-K bf16 weight tile
        pl.BlockSpec((1, tn), lambda i, j: (0, j)),       # f32 additive shift
    ]
    args = [x, w, bias.reshape(1, N).astype(jnp.float32)]
    if residual is not None:
        in_specs.append(pl.BlockSpec((tm, tn), lambda i, j: (i, j)))
        args.append(residual)

    return pl.pallas_call(
        _make_fused_kernel(tuple(shifts), tm, c_in, nm, apply_relu,
                           residual is not None),
        out_shape=jax.ShapeDtypeStruct((rows_out, N), out_dtype),
        grid_spec=pltpu.PrefetchScalarGridSpec(
            num_scalar_prefetch=0,
            grid=(nm, nn),
            in_specs=in_specs,
            out_specs=pl.BlockSpec((tm, tn), lambda i, j: (i, j)),
        ),
        compiler_params=pltpu.CompilerParams(
            dimension_semantics=("parallel", "parallel"),
            vmem_limit_bytes=VMEM_LIMIT,
        ),
    )(*args)


def _pooled_linear_kernel(x_ref, w_ref, b_ref, o_ref):
    # Global average pool (mean over the 49 spatial rows, f32) fused with the
    # 2048 -> 1024(padded) linear layer; single grid step so the pooling runs
    # exactly once.
    pooled = jnp.mean(x_ref[...].astype(jnp.float32), axis=1)     # (N, C) f32
    y = jnp.dot(pooled.astype(jnp.bfloat16), w_ref[...],
                preferred_element_type=jnp.float32)
    o_ref[...] = (y + b_ref[...]).astype(o_ref.dtype)


def pooled_linear(x3d, w, bias):
    n, hw, c = x3d.shape
    c2, nout = w.shape
    assert c2 == c
    return pl.pallas_call(
        _pooled_linear_kernel,
        out_shape=jax.ShapeDtypeStruct((n, nout), jnp.float32),
        grid_spec=pltpu.PrefetchScalarGridSpec(
            num_scalar_prefetch=0,
            grid=(1,),
            in_specs=[
                pl.BlockSpec((n, hw, c), lambda j: (0, 0, 0)),
                pl.BlockSpec((c, nout), lambda j: (0, 0)),
                pl.BlockSpec((1, nout), lambda j: (0, 0)),
            ],
            out_specs=pl.BlockSpec((n, nout), lambda j: (0, 0)),
        ),
        compiler_params=pltpu.CompilerParams(
            dimension_semantics=("arbitrary",),
            vmem_limit_bytes=VMEM_LIMIT,
        ),
    )(x3d, w, bias.reshape(1, nout).astype(jnp.float32))


# --------------------------------------------------------------------------
# Glue (layout / padding / param packing) in plain JAX
# --------------------------------------------------------------------------
def conv1x1_bn(x_nhwc, w2d, bias, residual=None, apply_relu=True):
    n, h, w, c = x_nhwc.shape
    x2 = x_nhwc.reshape(n * h * w, c)
    r2 = None if residual is None else residual.reshape(n * h * w, -1)
    y = fused_matmul(x2, w2d, bias, r2, apply_relu)
    return y.reshape(n, h, w, -1)


def conv3x3_bn_s1(x_nhwc, w2d, bias):
    """Stride-1 3x3 conv + BN + ReLU via width expansion + 3 row-shifted dots.

    The padded image is expanded along width only (3 dw-shifted copies
    concatenated on channels, width padded to a multiple of 8) so the in-kernel
    row shifts are 0 / w_row / 2*w_row -- all multiples of 8 (no relayouts).
    Output is the full padded-height frame; the valid interior is sliced here.
    """
    n, h, w, c = x_nhwc.shape
    w_row = ((w + 7) // 8) * 8          # 16 at 14x14, 8 at 7x7
    hp = h + 2
    # one spatial pad: 1 row top/bottom, 1 col left, (w_row + 1 - w) cols right
    xp = jnp.pad(x_nhwc, ((0, 0), (1, 1), (1, w_row + 1 - w), (0, 0)))
    # width expansion: 3 dw-shifted copies on the channel axis -> (n,hp,w_row,3c)
    xe = jnp.concatenate([xp[:, :, dw:dw + w_row, :] for dw in range(3)],
                         axis=-1)
    xf = xe.reshape(n * hp * w_row, 3 * c)
    rows_out = n * hp * w_row
    # guard rows so the (discarded) bottom-frame outputs of the last image
    # never read out of bounds
    xf = jnp.concatenate(
        [xf, jnp.zeros((2 * w_row, 3 * c), dtype=xf.dtype)], axis=0)
    row_shifts = (0, w_row, 2 * w_row)
    y = fused_matmul(xf, w2d, bias, None, apply_relu=True,
                     shifts=row_shifts, rows_out=rows_out)
    y = y.reshape(n, hp, w_row, -1)[:, :h, :w, :]
    return y


def im2col_3x3(x_nhwc, stride):
    n, h, w, c = x_nhwc.shape
    xp = jnp.pad(x_nhwc, ((0, 0), (1, 1), (1, 1), (0, 0)))
    ho = (h + 2 - 3) // stride + 1
    wo = (w + 2 - 3) // stride + 1
    cols = []
    for dh in range(3):
        for dw in range(3):
            cols.append(
                xp[:, dh:dh + stride * (ho - 1) + 1:stride,
                      dw:dw + stride * (wo - 1) + 1:stride, :]
            )
    patches = jnp.concatenate(cols, axis=-1)   # (N, Ho, Wo, 9*C), (kh,kw,cin)
    return patches.reshape(n * ho * wo, 9 * c), (n, ho, wo)


def conv3x3_bn_s2(x_nhwc, w2d, bias):
    # Single stride-2 3x3 conv: im2col (2.25x expansion) keeps it one dense dot.
    x2, (n, ho, wo) = im2col_3x3(x_nhwc, stride=2)
    y = fused_matmul(x2, w2d, bias, None, apply_relu=True)
    return y.reshape(n, ho, wo, -1)


def kaiming_conv(key, cout, cin, kh, kw):
    fan_out = cout * kh * kw
    std = (2.0 / fan_out) ** 0.5
    return jax.random.normal(key, (cout, cin, kh, kw), jnp.float32) * std


def conv_w_to_2d(w):
    cout, cin, kh, kw = w.shape
    if kh == 1 and kw == 1:
        return w.reshape(cout, cin).T                 # (cin, cout)
    # (kh, kw, cin) tap order matches both the row-shift order (dh major) and
    # the width-expansion / im2col channel order (dw, cin).
    return jnp.transpose(w, (2, 3, 1, 0)).reshape(kh * kw * cin, cout)


def bn_params(c, eps=1e-5):
    gamma = jnp.ones((c,), jnp.float32)
    beta = jnp.zeros((c,), jnp.float32)
    running_mean = jnp.zeros((c,), jnp.float32)
    running_var = jnp.ones((c,), jnp.float32)
    scale = gamma / jnp.sqrt(running_var + eps)
    shift = beta - running_mean * scale
    return scale, shift


def make_params(key):
    conv_cfg = {  # name -> (cout, cin, k)
        "w3": (256, 256, 3), "w6": (1024, 256, 1), "w10": (256, 1024, 1),
        "w13": (256, 256, 3), "w16": (1024, 256, 1), "w20": (512, 1024, 1),
        "w23": (512, 512, 3), "w26": (2048, 512, 1), "w28": (2048, 1024, 1),
        "w32": (512, 2048, 1), "w35": (512, 512, 3), "w38": (2048, 512, 1),
        "w42": (512, 2048, 1), "w45": (512, 512, 3), "w48": (2048, 512, 1),
    }
    conv_to_bn = {
        "w3": "bn4", "w6": "bn7", "w10": "bn11", "w13": "bn14", "w16": "bn17",
        "w20": "bn21", "w23": "bn24", "w26": "bn27", "w28": "bn29",
        "w32": "bn33", "w35": "bn36", "w38": "bn39", "w42": "bn43",
        "w45": "bn46", "w48": "bn49",
    }
    keys = jax.random.split(key, len(conv_cfg) + 1)
    params = {}
    for k_rng, (name, (cout, cin, ks)) in zip(keys[:-1], sorted(conv_cfg.items())):
        w4 = kaiming_conv(k_rng, cout, cin, ks, ks)
        scale, shift = bn_params(cout)
        # Fold the BN per-channel scale into the weight columns, keep the shift.
        params[name] = (conv_w_to_2d(w4) * scale[None, :]).astype(jnp.bfloat16)
        params[conv_to_bn[name]] = shift

    # Fuse the two branch convs of the downsampling block:
    #   bn27(conv26(a)) + bn29(conv28(b)) == concat(a, b) @ [w26*s27; w28*s29]
    #                                        + (shift27 + shift29)
    params["w26_28"] = jnp.concatenate([params["w26"], params["w28"]], axis=0)
    params["bn27_29"] = params["bn27"] + params["bn29"]
    for k in ("w26", "w28", "bn27", "bn29"):
        del params[k]

    # Linear 2048 -> 1000 (torch init: N(0, 0.01), bias 0), padded to 1024.
    w55 = jax.random.normal(keys[-1], (NUM_CLASSES, 2048), jnp.float32) * 0.01
    w55 = jnp.pad(w55.T, ((0, 0), (0, NUM_CLASSES_PAD - NUM_CLASSES)))
    params["w55"] = w55.astype(jnp.bfloat16)
    params["b55"] = jnp.zeros((NUM_CLASSES_PAD,), jnp.float32)
    return params


# --------------------------------------------------------------------------
# Stage3 forward
# --------------------------------------------------------------------------
@jax.jit
def stage3_forward(params, input1_nchw, input0_nchw):
    p = params
    x0 = jnp.transpose(input0_nchw, (0, 2, 3, 1)).astype(jnp.bfloat16)  # (N,14,14,256)
    x1 = jnp.transpose(input1_nchw, (0, 2, 3, 1)).astype(jnp.bfloat16)  # (N,14,14,1024)

    # layer2: ReLU(input0) — fused by XLA into the pad of the first 3x3 conv.
    out2 = jnp.maximum(x0, 0.0)

    # bottleneck block 1 (residual = input1)
    out5 = conv3x3_bn_s1(out2, p["w3"], p["bn4"])
    out9 = conv1x1_bn(out5, p["w6"], p["bn7"], residual=x1, apply_relu=True)

    # bottleneck block 2 (residual = out9)
    out12 = conv1x1_bn(out9, p["w10"], p["bn11"])
    out15 = conv3x3_bn_s1(out12, p["w13"], p["bn14"])
    out19 = conv1x1_bn(out15, p["w16"], p["bn17"], residual=out9,
                       apply_relu=True)

    # downsampling bottleneck block: the main-path 1x1 expand (conv26/bn27) and
    # the stride-2 shortcut (conv28/bn29) are fused into one kernel.
    out22 = conv1x1_bn(out19, p["w20"], p["bn21"])
    out25 = conv3x3_bn_s2(out22, p["w23"], p["bn24"])
    out19_s2 = out19[:, ::2, ::2, :]
    xcat = jnp.concatenate([out25, out19_s2], axis=-1)           # (N,7,7,1536)
    out31 = conv1x1_bn(xcat, p["w26_28"], p["bn27_29"], apply_relu=True)

    # bottleneck block 4 (residual = out31)
    out34 = conv1x1_bn(out31, p["w32"], p["bn33"])
    out37 = conv3x3_bn_s1(out34, p["w35"], p["bn36"])
    out41 = conv1x1_bn(out37, p["w38"], p["bn39"], residual=out31,
                       apply_relu=True)

    # bottleneck block 5 (residual = out41)
    out44 = conv1x1_bn(out41, p["w42"], p["bn43"])
    out47 = conv3x3_bn_s1(out44, p["w45"], p["bn46"])
    out51 = conv1x1_bn(out47, p["w48"], p["bn49"], residual=out41,
                       apply_relu=True)

    # avgpool(7x7) + linear 2048 -> 1000, fused into one single-step kernel.
    n2, h2, w2, c2 = out51.shape
    logits_pad = pooled_linear(out51.reshape(n2, h2 * w2, c2),
                               p["w55"], p["b55"])
    return logits_pad[:, :NUM_CLASSES]


# --------------------------------------------------------------------------
# Self-check of the shifted-dot 3x3 path against lax.conv (both frame sizes)
# --------------------------------------------------------------------------
def _check_conv3x3_against_lax():
    for h in (14, 7):
        c = 256
        k1, k2 = jax.random.split(jax.random.PRNGKey(h))
        x = jax.random.normal(k1, (2, h, h, c), jnp.float32).astype(jnp.bfloat16)
        w4 = jax.random.normal(k2, (c, c, 3, 3), jnp.float32) * 0.03
        w2d = conv_w_to_2d(w4).astype(jnp.bfloat16)
        zero_shift = jnp.zeros((c,), jnp.float32)
        y = jax.jit(conv3x3_bn_s1)(x, w2d, zero_shift).astype(jnp.float32)
        ref = jax.lax.conv_general_dilated(
            x, jnp.transpose(w4, (2, 3, 1, 0)).astype(jnp.bfloat16),
            window_strides=(1, 1), padding=((1, 1), (1, 1)),
            dimension_numbers=("NHWC", "HWIO", "NHWC"),
            preferred_element_type=jnp.float32)
        ref = jnp.maximum(ref, 0.0)
        err = float(jnp.max(jnp.abs(y - ref)))
        lim = 3e-2 * float(jnp.max(jnp.abs(ref))) + 1e-2
        assert err <= lim, ("conv3x3 mismatch", h, err, lim)


# --------------------------------------------------------------------------
if __name__ == "__main__":
    _check_conv3x3_against_lax()

    key = jax.random.PRNGKey(0)
    k_params, k_in0, k_in1 = jax.random.split(key, 3)

    params = make_params(k_params)

    batch = 2
    # input0: bottleneck pre-activation (256 ch), input1: residual branch (1024 ch)
    input0 = jax.random.normal(k_in0, (batch, 256, 14, 14), jnp.float32)
    input1 = jax.random.normal(k_in1, (batch, 1024, 14, 14), jnp.float32)

    out = stage3_forward(params, input1, input0)
    out = jax.block_until_ready(out)
    assert out.shape == (batch, NUM_CLASSES), out.shape
    assert bool(jnp.all(jnp.isfinite(out)))
    print("KERNEL_OK")
</pallas_src>

<mosaic_0001>
module attributes {stable_mosaic.version = 11 : i64} {
  func.func @kernel(%arg0: i32, %arg1: i32, %arg2: memref<544x768xbf16, #tpu.memory_space<vmem>>, %arg3: memref<2304x256xbf16, #tpu.memory_space<vmem>>, %arg4: memref<1x256xf32, #tpu.memory_space<vmem>>, %arg5: memref<256x256xbf16, #tpu.memory_space<vmem>>) attributes {dimension_semantics = [#tpu.dimension_semantics<parallel>, #tpu.dimension_semantics<parallel>], iteration_bounds = array<i64: 2, 1>, scalar_prefetch = 0 : i64, scratch_operands = 0 : i64, tpu.core_type = #tpu.core_type<tc>, window_params = [{pipeline_mode = #tpu.pipeline_mode<synchronous>, transform_indices = @transform_0, window_bounds = array<i64: 544, 768>}, {transform_indices = @transform_1, window_bounds = array<i64: 2304, 256>}, {transform_indices = @transform_2, window_bounds = array<i64: 1, 256>}, {transform_indices = @transform_3, window_bounds = array<i64: 256, 256>}]} {
    %c256_i32 = arith.constant 256 : i32
    %0 = arith.muli %arg0, %c256_i32 : i32
    %c0_i32 = arith.constant 0 : i32
    %1 = arith.addi %0, %c0_i32 : i32
    %2 = tpu.assume_multiple %1, 8 : i32
    %3 = arith.index_cast %2 : i32 to index
    %c0 = arith.constant 0 : index
    %4 = vector.load %arg2[%3, %c0] : memref<544x768xbf16, #tpu.memory_space<vmem>>, vector<256x768xbf16>
    %c0_0 = arith.constant 0 : index
    %c0_1 = arith.constant 0 : index
    %5 = vector.load %arg3[%c0_0, %c0_1] : memref<2304x256xbf16, #tpu.memory_space<vmem>>, vector<768x256xbf16>
    %cst = arith.constant dense<0.000000e+00> : vector<256x256xf32>
    %6 = tpu.matmul %4, %5, %cst {dimension_numbers = #tpu.dot_dimension_numbers<[1], [0], [0], [1], [0, 0, 1, 1], [], []>} : vector<256x768xbf16>, vector<768x256xbf16>, vector<256x256xf32> -> vector<256x256xf32>
    %c16_i32 = arith.constant 16 : i32
    %7 = arith.addi %0, %c16_i32 : i32
    %8 = tpu.assume_multiple %7, 8 : i32
    %9 = arith.index_cast %8 : i32 to index
    %c0_2 = arith.constant 0 : index
    %10 = vector.load %arg2[%9, %c0_2] : memref<544x768xbf16, #tpu.memory_space<vmem>>, vector<256x768xbf16>
    %c768 = arith.constant 768 : index
    %c0_3 = arith.constant 0 : index
    %11 = vector.load %arg3[%c768, %c0_3] : memref<2304x256xbf16, #tpu.memory_space<vmem>>, vector<768x256xbf16>
    %cst_4 = arith.constant dense<0.000000e+00> : vector<256x256xf32>
    %12 = tpu.matmul %10, %11, %cst_4 {dimension_numbers = #tpu.dot_dimension_numbers<[1], [0], [0], [1], [0, 0, 1, 1], [], []>} : vector<256x768xbf16>, vector<768x256xbf16>, vector<256x256xf32> -> vector<256x256xf32>
    %13 = arith.addf %6, %12 : vector<256x256xf32>
    %c32_i32 = arith.constant 32 : i32
    %14 = arith.addi %0, %c32_i32 : i32
    %15 = tpu.assume_multiple %14, 8 : i32
    %16 = arith.index_cast %15 : i32 to index
    %c0_5 = arith.constant 0 : index
    %17 = vector.load %arg2[%16, %c0_5] : memref<544x768xbf16, #tpu.memory_space<vmem>>, vector<256x768xbf16>
    %c1536 = arith.constant 1536 : index
    %c0_6 = arith.constant 0 : index
    %18 = vector.load %arg3[%c1536, %c0_6] : memref<2304x256xbf16, #tpu.memory_space<vmem>>, vector<768x256xbf16>
    %cst_7 = arith.constant dense<0.000000e+00> : vector<256x256xf32>
    %19 = tpu.matmul %17, %18, %cst_7 {dimension_numbers = #tpu.dot_dimension_numbers<[1], [0], [0], [1], [0, 0, 1, 1], [], []>} : vector<256x768xbf16>, vector<768x256xbf16>, vector<256x256xf32> -> vector<256x256xf32>
    %20 = arith.addf %13, %19 : vector<256x256xf32>
    %c0_8 = arith.constant 0 : index
    %c0_9 = arith.constant 0 : index
    %21 = vector.load %arg4[%c0_8, %c0_9] : memref<1x256xf32, #tpu.memory_space<vmem>>, vector<1x256xf32>
    %22 = vector.broadcast %21 : vector<1x256xf32> to vector<256x256xf32>
    %23 = arith.addf %20, %22 : vector<256x256xf32>
    %cst_10 = arith.constant 0.000000e+00 : f32
    %24 = vector.broadcast %cst_10 : f32 to vector<256x256xf32>
    %25 = arith.maximumf %23, %24 : vector<256x256xf32>
    %26 = arith.truncf %25 : vector<256x256xf32> to vector<256x256xbf16>
    %c0_11 = arith.constant 0 : index
    %c0_12 = arith.constant 0 : index
    %27 = vector.load %arg5[%c0_11, %c0_12] : memref<256x256xbf16, #tpu.memory_space<vmem>>, vector<256x256xbf16>
    tpu.vector_store %arg5[%c0_11, %c0_12], %26 {strides = array<i32>} : memref<256x256xbf16, #tpu.memory_space<vmem>>, vector<256x256xbf16>,
    return
  }
  func.func @transform_0(%arg0: i32, %arg1: i32) -> (i32, i32) {
    %c0_i32 = arith.constant 0 : i32
    %c0_i32_0 = arith.constant 0 : i32
    %c0_i32_1 = arith.constant 0 : i32
    return %c0_i32, %c0_i32_0 : i32, i32
  }
  func.func @transform_1(%arg0: i32, %arg1: i32) -> (i32, i32) {
    %c0_i32 = arith.constant 0 : i32
    %c0_i32_0 = arith.constant 0 : i32
    return %c0_i32, %arg1 : i32, i32
  }
  func.func @transform_2(%arg0: i32, %arg1: i32) -> (i32, i32) {
    %c0_i32 = arith.constant 0 : i32
    %c0_i32_0 = arith.constant 0 : i32
    return %c0_i32, %arg1 : i32, i32
  }
  func.func @transform_3(%arg0: i32, %arg1: i32) -> (i32, i32) {
    %c0_i32 = arith.constant 0 : i32
    return %arg0, %arg1 : i32, i32
  }
}

</mosaic_0001>

<llo_original>
// kernel: conv3x3_bn_s1.1
$region0: #{conv3x3_bn_s1.1}
  #allocation0 [shape = 'u32[]', space=smem, size = 0x4, offset = 0x4, fixed_abs, tag = 'smem constant byte address 0x4 - core index']
  #allocation1 [shape = 'u32[144,128]{1,0:T(1,128)}', space=vmem, size = 0x12000, scoped, tag = 'internal scratch']
  %s0 = inlined_call_operand.vmem [shape: bf16[544,768], index: 0, kind: input, shape index: {}]
  %s1 = inlined_call_operand.vmem [shape: bf16[2304,256], index: 1, kind: input, shape index: {}]
  %s2 = inlined_call_operand.vmem [shape: f32[1,256], index: 2, kind: input, shape index: {}]
  %s3 = inlined_call_operand.vmem [shape: bf16[512,256], index: 3, kind: output, shape index: {}]
  %s4 = sld [smem:[#allocation0]]
  $region45: #{conv3x3_bn_s1.1} parent=0
    _
  %s6 = ssub.s32 1, %s4
  %s7 = scalar_select 0, %s6, %s4
  loop: start=0, step=1, limit=4
  $region2: #{conv3x3_bn_s1.1} parent=0 // loop_pre_header
    _
  $region3: #{conv3x3_bn_s1.1} parent=0 // loop_header
    %s9 = sphi 0, %s13
    %p10 = scmp.ge.s32.totalorder %s9, 4
    %s16 = sphi 0, %s28
    %s17 = sphi 0, %s24
    %s18 = sphi 0, %s16
    %s19 = sphi 0, %s17
    %s20 = sphi 0, %s18
    %s21 = sphi 0, %s19
    %s29 = sphi 0, %s29
    %s31 = sphi 0, %s29
    %s32 = sphi 0, %s31
    %s46 = sphi 0, %s32
    %s52 = sphi 0, %s54
    %s55 = sphi 0, %s52
    %s56 = sphi 0, %s55
    %s72 = sphi 0, %s56
    %s78 = sphi 0, %s80
    %s81 = sphi 0, %s78
    %s82 = sphi 0, %s81
    %s98 = sphi 0, %s82
    %s106 = sphi 0, %s108
    %s109 = sphi 0, %s106
    %s110 = sphi 0, %s109
    %s126 = sphi 0, %s110
  $region4: #{conv3x3_bn_s1.1} parent=0 // loop_header_branch
    %12 = sbr.rel (%p10) target = $region8
  $region5: #{conv3x3_bn_s1.1} parent=0 // loop_body
    %s14 = ssub.s32 %s9, 1
    %s15 = ssub.s32 %s9, 2
    %s22 = sadd.s32 1, %s17
    %p23 = scmp.ge.s32.totalorder %s22, 1
    %s24 = scalar_select %p23, 0, %s22
    %s25 = sadd.s32 1, %s16
    %s26 = scalar_select %p23, %s25, %s16
    %p27 = scmp.ge.s32.totalorder %s26, 2
    %s28 = scalar_select %p27, 0, %s26
    %s30 = sadd.s32 %s29, 1
    %p33 = scmp.eq.s32.totalorder %s9, 1
    %p34 = scmp.ne.s32.totalorder %s29, %s31
    %p35 = scmp.eq.s32.totalorder %s9, 0
    %p36 = por %p34, %p35
    %p37 = scmp.ne.s32.totalorder %s29, %s31
    %p38 = scmp.eq.s32.totalorder %s14, 1
    %p39 = por %p37, %p38
    %p40 = scmp.ne.s32.totalorder %s31, %s32
    %p41 = scmp.eq.s32.totalorder %s14, 0
    %p42 = por %p40, %p41
    %p43 = scmp.ne.s32.totalorder %s31, %s32
    %p44 = scmp.eq.s32.totalorder %s15, 1
    %p45 = por %p43, %p44
    %p47 = scmp.ne.s32.totalorder %s32, %s46
    %p48 = scmp.eq.s32.totalorder %s15, 0
    %p49 = por %p47, %p48
    %s50 = ssub.s32 %s17, %s24
    %p51 = scmp.eq.s32.totalorder %s50, 0
    %s53 = sadd.s32 %s52, 1
    %s54 = scalar_select %p51, %s52, %s53
    %p57 = pneg %p51
    %p58 = scmp.eq.s32.totalorder %s9, 1
    %p59 = por %p57, %p58
    %p60 = scmp.ne.s32.totalorder %s52, %s55
    %p61 = scmp.eq.s32.totalorder %s9, 0
    %p62 = por %p60, %p61
    %p63 = scmp.ne.s32.totalorder %s52, %s55
    %p64 = scmp.eq.s32.totalorder %s14, 1
    %p65 = por %p63, %p64
    %p66 = scmp.ne.s32.totalorder %s55, %s56
    %p67 = scmp.eq.s32.totalorder %s14, 0
    %p68 = por %p66, %p67
    %p69 = scmp.ne.s32.totalorder %s55, %s56
    %p70 = scmp.eq.s32.totalorder %s15, 1
    %p71 = por %p69, %p70
    %p73 = scmp.ne.s32.totalorder %s56, %s72
    %p74 = scmp.eq.s32.totalorder %s15, 0
    %p75 = por %p73, %p74
    %s76 = ssub.s32 %s17, %s24
    %p77 = scmp.eq.s32.totalorder %s76, 0
    %s79 = sadd.s32 %s78, 1
    %s80 = scalar_select %p77, %s78, %s79
    %p83 = pneg %p77
    %p84 = scmp.eq.s32.totalorder %s9, 1
    %p85 = por %p83, %p84
    %p86 = scmp.ne.s32.totalorder %s78, %s81
    %p87 = scmp.eq.s32.totalorder %s9, 0
    %p88 = por %p86, %p87
    %p89 = scmp.ne.s32.totalorder %s78, %s81
    %p90 = scmp.eq.s32.totalorder %s14, 1
    %p91 = por %p89, %p90
    %p92 = scmp.ne.s32.totalorder %s81, %s82
    %p93 = scmp.eq.s32.totalorder %s14, 0
    %p94 = por %p92, %p93
    %p95 = scmp.ne.s32.totalorder %s81, %s82
    %p96 = scmp.eq.s32.totalorder %s15, 1
    %p97 = por %p95, %p96
    %p99 = scmp.ne.s32.totalorder %s82, %s98
    %p100 = scmp.eq.s32.totalorder %s15, 0
    %p101 = por %p99, %p100
    %s102 = ssub.s32 %s16, %s28
    %s103 = ssub.s32 %s17, %s24
    %s104 = sor.u32 %s102, %s103
    %p105 = scmp.eq.s32.totalorder %s104, 0
    %s107 = sadd.s32 %s106, 1
    %s108 = scalar_select %p105, %s106, %s107
    %p111 = pneg %p105
    %p112 = scmp.eq.s32.totalorder %s9, 1
    %p113 = por %p111, %p112
    %p114 = scmp.ne.s32.totalorder %s106, %s109
    %p115 = scmp.eq.s32.totalorder %s9, 0
    %p116 = por %p114, %p115
    %p117 = scmp.ne.s32.totalorder %s106, %s109
    %p118 = scmp.eq.s32.totalorder %s14, 1
    %p119 = por %p117, %p118
    %p120 = scmp.ne.s32.totalorder %s109, %s110
    %p121 = scmp.eq.s32.totalorder %s14, 0
    %p122 = por %p120, %p121
    %p123 = scmp.ne.s32.totalorder %s109, %s110
    %p124 = scmp.eq.s32.totalorder %s15, 1
    %p125 = por %p123, %p124
    %p127 = scmp.ne.s32.totalorder %s110, %s126
    %p128 = scmp.eq.s32.totalorder %s15, 0
    %p129 = por %p127, %p128
    %p130 = scmp.le.s32.totalorder 1, %s9
    %p131 = scmp.lt.s32.totalorder %s9, 3
    %p132 = pnand %p130, %p131
    %p133 = pneg %p132
    // Predicated region
    $region9: #{conv3x3_bn_s1.1} parent=5 // pred_check
      _
    $region10: #{conv3x3_bn_s1.1} parent=5 // pred_check_branch
      %135 = sbr.rel (%p132) target = $region12
    $region11: #{conv3x3_bn_s1.1} parent=5 // pred_region
      %s136 = ssub.s32 %s9, 1
      // Predicated region
      $region13: #{conv3x3_bn_s1.1} parent=11 // pred_check
        %p137 = pneg %p42
      $region14: #{conv3x3_bn_s1.1} parent=11 // pred_check_branch
        %139 = sbr.rel (%p137) target = $region16
      $region15: #{conv3x3_bn_s1.1} parent=11 // pred_region
        _
      $region16: #{conv3x3_bn_s1.1} parent=11 // pred_fallthru
        _
      // Predicated region
      $region17: #{conv3x3_bn_s1.1} parent=11 // pred_check
        %p140 = pneg %p68
      $region18: #{conv3x3_bn_s1.1} parent=11 // pred_check_branch
        %142 = sbr.rel (%p140) target = $region20
      $region19: #{conv3x3_bn_s1.1} parent=11 // pred_region
        %s143 = smul.u32 2, %s19
        %p144 = scmp.lt.s32.totalorder %s143, 1
        %s145 = scalar_select %p144, %s143, 1
        %s146 = smul.addr %s145, 4
        %s147 = scalar_lea.vmem %s1, %s146
        %s148 = smul.u32 2, %s19
      $region20: #{conv3x3_bn_s1.1} parent=11 // pred_fallthru
        _
      // Predicated region
      $region21: #{conv3x3_bn_s1.1} parent=11 // pred_check
        %p149 = pneg %p94
      $region22: #{conv3x3_bn_s1.1} parent=11 // pred_check_branch
        %151 = sbr.rel (%p149) target = $region24
      $region23: #{conv3x3_bn_s1.1} parent=11 // pred_region
        %s152 = smul.u32 2, %s19
        %p153 = scmp.lt.s32.totalorder %s152, 1
        %s154 = scalar_select %p153, %s152, 1
        %s155 = scalar_lea.vmem %s2, %s154
        %s156 = smul.u32 2, %s19
      $region24: #{conv3x3_bn_s1.1} parent=11 // pred_fallthru
        _
    $region12: #{conv3x3_bn_s1.1} parent=5 // pred_fallthru
      _
    %p157 = scmp.lt.s32.totalorder %s9, 2
    // Predicated region
    $region25: #{conv3x3_bn_s1.1} parent=5 // pred_check
      %p158 = pneg %p157
    $region26: #{conv3x3_bn_s1.1} parent=5 // pred_check_branch
      %160 = sbr.rel (%p158) target = $region28
    $region27: #{conv3x3_bn_s1.1} parent=5 // pred_region
      _
    $region28: #{conv3x3_bn_s1.1} parent=5 // pred_fallthru
      _
    %p161 = scmp.le.s32.totalorder 1, %s9
    %p162 = scmp.lt.s32.totalorder %s9, 3
    %p163 = pnand %p161, %p162
    %p164 = pneg %p163
    // Predicated region
    $region29: #{conv3x3_bn_s1.1} parent=5 // pred_check
      _
    $region30: #{conv3x3_bn_s1.1} parent=5 // pred_check_branch
      %166 = sbr.rel (%p163) target = $region32
    $region31: #{conv3x3_bn_s1.1} parent=5 // pred_region
      %s167 = ssub.s32 %s9, 1
      %p168 = pneg %p42
      %p169 = pneg %p39
      %s170 = smul.u32 2, %s19
      %p171 = scmp.lt.s32.totalorder %s170, 1
      %s172 = scalar_select %p171, %s170, 1
      %s173 = smul.addr %s172, 4
      %s174 = scalar_lea.vmem %s1, %s173
      %p175 = pneg %p68
      %p176 = pneg %p65
      %s177 = smul.u32 2, %s19
      %p178 = scmp.lt.s32.totalorder %s177, 1
      %s179 = scalar_select %p178, %s177, 1
      %s180 = scalar_lea.vmem %s2, %s179
      %p181 = pneg %p94
      %p182 = pneg %p91
      %p183 = pneg %p122
      %p184 = pneg %p119
      %s185 = smul.u32 32, %s18
      %s186 = smul.u32 2, %s19
      %p187 = scmp.lt.s32.totalorder %s185, 63
      %s188 = scalar_select %p187, %s185, 63
      %p189 = scmp.lt.s32.totalorder %s186, 1
      %s190 = scalar_select %p189, %s186, 1
      %s191 = smul.addr %s188, 2
      %s192 = sadd.s32 %s190, %s191
      %s193 = smul.addr %s192, 4
      %s194 = scalar_lea.vmem %s3, %s193
      %s195 = smul.u32 2, %s19
      %p196 = scmp.lt.s32.totalorder %s195, 1
      %s197 = scalar_select %p196, %s195, 1
      %s198 = smul.addr %s197, 4
      %s199 = scalar_lea.vmem %s1, %s198
      %s200 = smul.u32 2, %s19
      %s201 = smul.u32 2, %s19
      %p202 = scmp.lt.s32.totalorder %s201, 1
      %s203 = scalar_select %p202, %s201, 1
      %s204 = scalar_lea.vmem %s2, %s203
      %s205 = smul.u32 2, %s19
      %s206 = smul.u32 32, %s18
      %s207 = smul.u32 2, %s19
      %p208 = scmp.lt.s32.totalorder %s206, 63
      %s209 = scalar_select %p208, %s206, 63
      %p210 = scmp.lt.s32.totalorder %s207, 1
      %s211 = scalar_select %p210, %s207, 1
      %s212 = smul.addr %s209, 2
      %s213 = sadd.s32 %s211, %s212
      %s214 = smul.addr %s213, 4
      %s215 = scalar_lea.vmem %s3, %s214
      %s216 = smul.u32 32, %s18
      %s217 = smul.u32 2, %s19
      %s218 = smul.u32 %s18, 256
      %s219 = sshra.s32 %s218, 3
      %s220 = sand.u32 %s218, 7
      %s221 = smul.u32 %s219, 6
      %s222 = smul.addr %s221, 4
      %s223 = scalar_lea.vmem %s0, %s222
      %v224 = vld [vmem:[%s223] sm:$0xff]
      %v225 = vld [vmem:[%s223 + $0x8] sm:$0xff]
      %v226 = vld [vmem:[%s223 + $0x10] sm:$0xff]
      %v227 = vld [vmem:[%s223 + $0x18] sm:$0xff]
      %v228 = vld [vmem:[%s223 + $0x20] sm:$0xff]
      %v229 = vld [vmem:[%s223 + $0x28] sm:$0xff]
      %v230 = vld [vmem:[%s223 + $0x30] sm:$0xff]
      %v231 = vld [vmem:[%s223 + $0x38] sm:$0xff]
      %v232 = vld [vmem:[%s223 + $0x40] sm:$0xff]
      %v233 = vld [vmem:[%s223 + $0x48] sm:$0xff]
      %v234 = vld [vmem:[%s223 + $0x50] sm:$0xff]
      %v235 = vld [vmem:[%s223 + $0x58] sm:$0xff]
      %v236 = vld [vmem:[%s223 + $0x60] sm:$0xff]
      %v237 = vld [vmem:[%s223 + $0x68] sm:$0xff]
      %v238 = vld [vmem:[%s223 + $0x70] sm:$0xff]
      %v239 = vld [vmem:[%s223 + $0x78] sm:$0xff]
      %v240 = vld [vmem:[%s223 + $0x80] sm:$0xff]
      %v241 = vld [vmem:[%s223 + $0x88] sm:$0xff]
      %v242 = vld [vmem:[%s223 + $0x90] sm:$0xff]
      %v243 = vld [vmem:[%s223 + $0x98] sm:$0xff]
      %v244 = vld [vmem:[%s223 + $0xa0] sm:$0xff]
      %v245 = vld [vmem:[%s223 + $0xa8] sm:$0xff]
      %v246 = vld [vmem:[%s223 + $0xb0] sm:$0xff]
      %v247 = vld [vmem:[%s223 + $0xb8] sm:$0xff]
      %v248 = vld [vmem:[%s223 + $0xc0] sm:$0xff]
      %v249 = vld [vmem:[%s223 + $0xc8] sm:$0xff]
      %v250 = vld [vmem:[%s223 + $0xd0] sm:$0xff]
      %v251 = vld [vmem:[%s223 + $0xd8] sm:$0xff]
      %v252 = vld [vmem:[%s223 + $0xe0] sm:$0xff]
      %v253 = vld [vmem:[%s223 + $0xe8] sm:$0xff]
      %v254 = vld [vmem:[%s223 + $0xf0] sm:$0xff]
      %v255 = vld [vmem:[%s223 + $0xf8] sm:$0xff]
      %v256 = vld [vmem:[%s223 + $0x100] sm:$0xff]
      %v257 = vld [vmem:[%s223 + $0x108] sm:$0xff]
      %v258 = vld [vmem:[%s223 + $0x110] sm:$0xff]
      %v259 = vld [vmem:[%s223 + $0x118] sm:$0xff]
      %v260 = vld [vmem:[%s223 + $0x120] sm:$0xff]
      %v261 = vld [vmem:[%s223 + $0x128] sm:$0xff]
      %v262 = vld [vmem:[%s223 + $0x130] sm:$0xff]
      %v263 = vld [vmem:[%s223 + $0x138] sm:$0xff]
      %v264 = vld [vmem:[%s223 + $0x140] sm:$0xff]
      %v265 = vld [vmem:[%s223 + $0x148] sm:$0xff]
      %v266 = vld [vmem:[%s223 + $0x150] sm:$0xff]
      %v267 = vld [vmem:[%s223 + $0x158] sm:$0xff]
      %v268 = vld [vmem:[%s223 + $0x160] sm:$0xff]
      %v269 = vld [vmem:[%s223 + $0x168] sm:$0xff]
      %v270 = vld [vmem:[%s223 + $0x170] sm:$0xff]
      %v271 = vld [vmem:[%s223 + $0x178] sm:$0xff]
      %v272 = vld [vmem:[%s223 + $0x180] sm:$0xff]
      %v273 = vld [vmem:[%s223 + $0x188] sm:$0xff]
      %v274 = vld [vmem:[%s223 + $0x190] sm:$0xff]
      %v275 = vld [vmem:[%s223 + $0x198] sm:$0xff]
      %v276 = vld [vmem:[%s223 + $0x1a0] sm:$0xff]
      %v277 = vld [vmem:[%s223 + $0x1a8] sm:$0xff]
      %v278 = vld [vmem:[%s223 + $0x1b0] sm:$0xff]
      %v279 = vld [vmem:[%s223 + $0x1b8] sm:$0xff]
      %v280 = vld [vmem:[%s223 + $0x1c0] sm:$0xff]
      %v281 = vld [vmem:[%s223 + $0x1c8] sm:$0xff]
      %v282 = vld [vmem:[%s223 + $0x1d0] sm:$0xff]
      %v283 = vld [vmem:[%s223 + $0x1d8] sm:$0xff]
      %v284 = vld [vmem:[%s223 + $0x1e0] sm:$0xff]
      %v285 = vld [vmem:[%s223 + $0x1e8] sm:$0xff]
      %v286 = vld [vmem:[%s223 + $0x1f0] sm:$0xff]
      %v287 = vld [vmem:[%s223 + $0x1f8] sm:$0xff]
      %v288 = vld [vmem:[%s223 + $0x200] sm:$0xff]
      %v289 = vld [vmem:[%s223 + $0x208] sm:$0xff]
      %v290 = vld [vmem:[%s223 + $0x210] sm:$0xff]
      %v291 = vld [vmem:[%s223 + $0x218] sm:$0xff]
      %v292 = vld [vmem:[%s223 + $0x220] sm:$0xff]
      %v293 = vld [vmem:[%s223 + $0x228] sm:$0xff]
      %v294 = vld [vmem:[%s223 + $0x230] sm:$0xff]
      %v295 = vld [vmem:[%s223 + $0x238] sm:$0xff]
      %v296 = vld [vmem:[%s223 + $0x240] sm:$0xff]
      %v297 = vld [vmem:[%s223 + $0x248] sm:$0xff]
      %v298 = vld [vmem:[%s223 + $0x250] sm:$0xff]
      %v299 = vld [vmem:[%s223 + $0x258] sm:$0xff]
      %v300 = vld [vmem:[%s223 + $0x260] sm:$0xff]
      %v301 = vld [vmem:[%s223 + $0x268] sm:$0xff]
      %v302 = vld [vmem:[%s223 + $0x270] sm:$0xff]
      %v303 = vld [vmem:[%s223 + $0x278] sm:$0xff]
      %v304 = vld [vmem:[%s223 + $0x280] sm:$0xff]
      %v305 = vld [vmem:[%s223 + $0x288] sm:$0xff]
      %v306 = vld [vmem:[%s223 + $0x290] sm:$0xff]
      %v307 = vld [vmem:[%s223 + $0x298] sm:$0xff]
      %v308 = vld [vmem:[%s223 + $0x2a0] sm:$0xff]
      %v309 = vld [vmem:[%s223 + $0x2a8] sm:$0xff]
      %v310 = vld [vmem:[%s223 + $0x2b0] sm:$0xff]
      %v311 = vld [vmem:[%s223 + $0x2b8] sm:$0xff]
      %v312 = vld [vmem:[%s223 + $0x2c0] sm:$0xff]
      %v313 = vld [vmem:[%s223 + $0x2c8] sm:$0xff]
      %v314 = vld [vmem:[%s223 + $0x2d0] sm:$0xff]
      %v315 = vld [vmem:[%s223 + $0x2d8] sm:$0xff]
      %v316 = vld [vmem:[%s223 + $0x2e0] sm:$0xff]
      %v317 = vld [vmem:[%s223 + $0x2e8] sm:$0xff]
      %v318 = vld [vmem:[%s223 + $0x2f0] sm:$0xff]
      %v319 = vld [vmem:[%s223 + $0x2f8] sm:$0xff]
      %v320 = vld [vmem:[%s199] sm:$0xff]
      %v321 = vld [vmem:[%s199 + $0x8] sm:$0xff]
      %v322 = vld [vmem:[%s199 + $0x10] sm:$0xff]
      %v323 = vld [vmem:[%s199 + $0x18] sm:$0xff]
      %v324 = vld [vmem:[%s199 + $0x20] sm:$0xff]
      %v325 = vld [vmem:[%s199 + $0x28] sm:$0xff]
      %v326 = vld [vmem:[%s199 + $0x30] sm:$0xff]
      %v327 = vld [vmem:[%s199 + $0x38] sm:$0xff]
      %v328 = vld [vmem:[%s199 + $0x40] sm:$0xff]
      %v329 = vld [vmem:[%s199 + $0x48] sm:$0xff]
      %v330 = vld [vmem:[%s199 + $0x50] sm:$0xff]
      %v331 = vld [vmem:[%s199 + $0x58] sm:$0xff]
      %v332 = vld [vmem:[%s199 + $0x60] sm:$0xff]
      %v333 = vld [vmem:[%s199 + $0x68] sm:$0xff]
      %v334 = vld [vmem:[%s199 + $0x70] sm:$0xff]
      %v335 = vld [vmem:[%s199 + $0x78] sm:$0xff]
      %v336 = vld [vmem:[%s199 + $0x80] sm:$0xff]
      %v337 = vld [vmem:[%s199 + $0x88] sm:$0xff]
      %v338 = vld [vmem:[%s199 + $0x90] sm:$0xff]
      %v339 = vld [vmem:[%s199 + $0x98] sm:$0xff]
      %v340 = vld [vmem:[%s199 + $0xa0] sm:$0xff]
      %v341 = vld [vmem:[%s199 + $0xa8] sm:$0xff]
      %v342 = vld [vmem:[%s199 + $0xb0] sm:$0xff]
      %v343 = vld [vmem:[%s199 + $0xb8] sm:$0xff]
      %v344 = vld [vmem:[%s199 + $0xc0] sm:$0xff]
      %v345 = vld [vmem:[%s199 + $0xc8] sm:$0xff]
      %v346 = vld [vmem:[%s199 + $0xd0] sm:$0xff]
      %v347 = vld [vmem:[%s199 + $0xd8] sm:$0xff]
      %v348 = vld [vmem:[%s199 + $0xe0] sm:$0xff]
      %v349 = vld [vmem:[%s199 + $0xe8] sm:$0xff]
      %v350 = vld [vmem:[%s199 + $0xf0] sm:$0xff]
      %v351 = vld [vmem:[%s199 + $0xf8] sm:$0xff]
      %v352 = vld [vmem:[%s199 + $0x100] sm:$0xff]
      %v353 = vld [vmem:[%s199 + $0x108] sm:$0xff]
      %v354 = vld [vmem:[%s199 + $0x110] sm:$0xff]
      %v355 = vld [vmem:[%s199 + $0x118] sm:$0xff]
      %v356 = vld [vmem:[%s199 + $0x120] sm:$0xff]
      %v357 = vld [vmem:[%s199 + $0x128] sm:$0xff]
      %v358 = vld [vmem:[%s199 + $0x130] sm:$0xff]
      %v359 = vld [vmem:[%s199 + $0x138] sm:$0xff]
      %v360 = vld [vmem:[%s199 + $0x140] sm:$0xff]
      %v361 = vld [vmem:[%s199 + $0x148] sm:$0xff]
      %v362 = vld [vmem:[%s199 + $0x150] sm:$0xff]
      %v363 = vld [vmem:[%s199 + $0x158] sm:$0xff]
      %v364 = vld [vmem:[%s199 + $0x160] sm:$0xff]
      %v365 = vld [vmem:[%s199 + $0x168] sm:$0xff]
      %v366 = vld [vmem:[%s199 + $0x170] sm:$0xff]
      %v367 = vld [vmem:[%s199 + $0x178] sm:$0xff]
      %v368 = vld [vmem:[%s199 + $0x180] sm:$0xff]
      %v369 = vld [vmem:[%s199 + $0x188] sm:$0xff]
      %v370 = vld [vmem:[%s199 + $0x190] sm:$0xff]
      %v371 = vld [vmem:[%s199 + $0x198] sm:$0xff]
      %v372 = vld [vmem:[%s199 + $0x1a0] sm:$0xff]
      %v373 = vld [vmem:[%s199 + $0x1a8] sm:$0xff]
      %v374 = vld [vmem:[%s199 + $0x1b0] sm:$0xff]
      %v375 = vld [vmem:[%s199 + $0x1b8] sm:$0xff]
      %v376 = vld [vmem:[%s199 + $0x1c0] sm:$0xff]
      %v377 = vld [vmem:[%s199 + $0x1c8] sm:$0xff]
      %v378 = vld [vmem:[%s199 + $0x1d0] sm:$0xff]
      %v379 = vld [vmem:[%s199 + $0x1d8] sm:$0xff]
      %v380 = vld [vmem:[%s199 + $0x1e0] sm:$0xff]
      %v381 = vld [vmem:[%s199 + $0x1e8] sm:$0xff]
      %v382 = vld [vmem:[%s199 + $0x1f0] sm:$0xff]
      %v383 = vld [vmem:[%s199 + $0x1f8] sm:$0xff]
      %v384 = vld [vmem:[%s199 + $0x200] sm:$0xff]
      %v385 = vld [vmem:[%s199 + $0x208] sm:$0xff]
      %v386 = vld [vmem:[%s199 + $0x210] sm:$0xff]
      %v387 = vld [vmem:[%s199 + $0x218] sm:$0xff]
      %v388 = vld [vmem:[%s199 + $0x220] sm:$0xff]
      %v389 = vld [vmem:[%s199 + $0x228] sm:$0xff]
      %v390 = vld [vmem:[%s199 + $0x230] sm:$0xff]
      %v391 = vld [vmem:[%s199 + $0x238] sm:$0xff]
      %v392 = vld [vmem:[%s199 + $0x240] sm:$0xff]
      %v393 = vld [vmem:[%s199 + $0x248] sm:$0xff]
      %v394 = vld [vmem:[%s199 + $0x250] sm:$0xff]
      %v395 = vld [vmem:[%s199 + $0x258] sm:$0xff]
      %v396 = vld [vmem:[%s199 + $0x260] sm:$0xff]
      %v397 = vld [vmem:[%s199 + $0x268] sm:$0xff]
      %v398 = vld [vmem:[%s199 + $0x270] sm:$0xff]
      %v399 = vld [vmem:[%s199 + $0x278] sm:$0xff]
      %v400 = vld [vmem:[%s199 + $0x280] sm:$0xff]
      %v401 = vld [vmem:[%s199 + $0x288] sm:$0xff]
      %v402 = vld [vmem:[%s199 + $0x290] sm:$0xff]
      %v403 = vld [vmem:[%s199 + $0x298] sm:$0xff]
      %v404 = vld [vmem:[%s199 + $0x2a0] sm:$0xff]
      %v405 = vld [vmem:[%s199 + $0x2a8] sm:$0xff]
      %v406 = vld [vmem:[%s199 + $0x2b0] sm:$0xff]
      %v407 = vld [vmem:[%s199 + $0x2b8] sm:$0xff]
      %v408 = vld [vmem:[%s199 + $0x2c0] sm:$0xff]
      %v409 = vld [vmem:[%s199 + $0x2c8] sm:$0xff]
      %v410 = vld [vmem:[%s199 + $0x2d0] sm:$0xff]
      %v411 = vld [vmem:[%s199 + $0x2d8] sm:$0xff]
      %v412 = vld [vmem:[%s199 + $0x2e0] sm:$0xff]
      %v413 = vld [vmem:[%s199 + $0x2e8] sm:$0xff]
      %v414 = vld [vmem:[%s199 + $0x2f0] sm:$0xff]
      %v415 = vld [vmem:[%s199 + $0x2f8] sm:$0xff]
      %s416 = sadd.s32 %s218, 16
      %s417 = sshra.s32 %s416, 3
      %s418 = sand.u32 %s416, 7
      %s419 = smul.u32 %s417, 6
      %s420 = smul.addr %s419, 4
      %s421 = scalar_lea.vmem %s0, %s420
      %v422 = vld [vmem:[%s421] sm:$0xff]
      %v423 = vld [vmem:[%s421 + $0x8] sm:$0xff]
      %v424 = vld [vmem:[%s421 + $0x10] sm:$0xff]
      %v425 = vld [vmem:[%s421 + $0x18] sm:$0xff]
      %v426 = vld [vmem:[%s421 + $0x20] sm:$0xff]
      %v427 = vld [vmem:[%s421 + $0x28] sm:$0xff]
      %v428 = vld [vmem:[%s421 + $0x30] sm:$0xff]
      %v429 = vld [vmem:[%s421 + $0x38] sm:$0xff]
      %v430 = vld [vmem:[%s421 + $0x40] sm:$0xff]
      %v431 = vld [vmem:[%s421 + $0x48] sm:$0xff]
      %v432 = vld [vmem:[%s421 + $0x50] sm:$0xff]
      %v433 = vld [vmem:[%s421 + $0x58] sm:$0xff]
      %v434 = vld [vmem:[%s421 + $0x60] sm:$0xff]
      %v435 = vld [vmem:[%s421 + $0x68] sm:$0xff]
      %v436 = vld [vmem:[%s421 + $0x70] sm:$0xff]
      %v437 = vld [vmem:[%s421 + $0x78] sm:$0xff]
      %v438 = vld [vmem:[%s421 + $0x80] sm:$0xff]
      %v439 = vld [vmem:[%s421 + $0x88] sm:$0xff]
      %v440 = vld [vmem:[%s421 + $0x90] sm:$0xff]
      %v441 = vld [vmem:[%s421 + $0x98] sm:$0xff]
      %v442 = vld [vmem:[%s421 + $0xa0] sm:$0xff]
      %v443 = vld [vmem:[%s421 + $0xa8] sm:$0xff]
      %v444 = vld [vmem:[%s421 + $0xb0] sm:$0xff]
      %v445 = vld [vmem:[%s421 + $0xb8] sm:$0xff]
      %v446 = vld [vmem:[%s421 + $0xc0] sm:$0xff]
      %v447 = vld [vmem:[%s421 + $0xc8] sm:$0xff]
      %v448 = vld [vmem:[%s421 + $0xd0] sm:$0xff]
      %v449 = vld [vmem:[%s421 + $0xd8] sm:$0xff]
      %v450 = vld [vmem:[%s421 + $0xe0] sm:$0xff]
      %v451 = vld [vmem:[%s421 + $0xe8] sm:$0xff]
      %v452 = vld [vmem:[%s421 + $0xf0] sm:$0xff]
      %v453 = vld [vmem:[%s421 + $0xf8] sm:$0xff]
      %v454 = vld [vmem:[%s421 + $0x100] sm:$0xff]
      %v455 = vld [vmem:[%s421 + $0x108] sm:$0xff]
      %v456 = vld [vmem:[%s421 + $0x110] sm:$0xff]
      %v457 = vld [vmem:[%s421 + $0x118] sm:$0xff]
      %v458 = vld [vmem:[%s421 + $0x120] sm:$0xff]
      %v459 = vld [vmem:[%s421 + $0x128] sm:$0xff]
      %v460 = vld [vmem:[%s421 + $0x130] sm:$0xff]
      %v461 = vld [vmem:[%s421 + $0x138] sm:$0xff]
      %v462 = vld [vmem:[%s421 + $0x140] sm:$0xff]
      %v463 = vld [vmem:[%s421 + $0x148] sm:$0xff]
      %v464 = vld [vmem:[%s421 + $0x150] sm:$0xff]
      %v465 = vld [vmem:[%s421 + $0x158] sm:$0xff]
      %v466 = vld [vmem:[%s421 + $0x160] sm:$0xff]
      %v467 = vld [vmem:[%s421 + $0x168] sm:$0xff]
      %v468 = vld [vmem:[%s421 + $0x170] sm:$0xff]
      %v469 = vld [vmem:[%s421 + $0x178] sm:$0xff]
      %v470 = vld [vmem:[%s421 + $0x180] sm:$0xff]
      %v471 = vld [vmem:[%s421 + $0x188] sm:$0xff]
      %v472 = vld [vmem:[%s421 + $0x190] sm:$0xff]
      %v473 = vld [vmem:[%s421 + $0x198] sm:$0xff]
      %v474 = vld [vmem:[%s421 + $0x1a0] sm:$0xff]
      %v475 = vld [vmem:[%s421 + $0x1a8] sm:$0xff]
      %v476 = vld [vmem:[%s421 + $0x1b0] sm:$0xff]
      %v477 = vld [vmem:[%s421 + $0x1b8] sm:$0xff]
      %v478 = vld [vmem:[%s421 + $0x1c0] sm:$0xff]
      %v479 = vld [vmem:[%s421 + $0x1c8] sm:$0xff]
      %v480 = vld [vmem:[%s421 + $0x1d0] sm:$0xff]
      %v481 = vld [vmem:[%s421 + $0x1d8] sm:$0xff]
      %v482 = vld [vmem:[%s421 + $0x1e0] sm:$0xff]
      %v483 = vld [vmem:[%s421 + $0x1e8] sm:$0xff]
      %v484 = vld [vmem:[%s421 + $0x1f0] sm:$0xff]
      %v485 = vld [vmem:[%s421 + $0x1f8] sm:$0xff]
      %v486 = vld [vmem:[%s421 + $0x200] sm:$0xff]
      %v487 = vld [vmem:[%s421 + $0x208] sm:$0xff]
      %v488 = vld [vmem:[%s421 + $0x210] sm:$0xff]
      %v489 = vld [vmem:[%s421 + $0x218] sm:$0xff]
      %v490 = vld [vmem:[%s421 + $0x220] sm:$0xff]
      %v491 = vld [vmem:[%s421 + $0x228] sm:$0xff]
      %v492 = vld [vmem:[%s421 + $0x230] sm:$0xff]
      %v493 = vld [vmem:[%s421 + $0x238] sm:$0xff]
      %v494 = vld [vmem:[%s421 + $0x240] sm:$0xff]
      %v495 = vld [vmem:[%s421 + $0x248] sm:$0xff]
      %v496 = vld [vmem:[%s421 + $0x250] sm:$0xff]
      %v497 = vld [vmem:[%s421 + $0x258] sm:$0xff]
      %v498 = vld [vmem:[%s421 + $0x260] sm:$0xff]
      %v499 = vld [vmem:[%s421 + $0x268] sm:$0xff]
      %v500 = vld [vmem:[%s421 + $0x270] sm:$0xff]
      %v501 = vld [vmem:[%s421 + $0x278] sm:$0xff]
      %v502 = vld [vmem:[%s421 + $0x280] sm:$0xff]
      %v503 = vld [vmem:[%s421 + $0x288] sm:$0xff]
      %v504 = vld [vmem:[%s421 + $0x290] sm:$0xff]
      %v505 = vld [vmem:[%s421 + $0x298] sm:$0xff]
      %v506 = vld [vmem:[%s421 + $0x2a0] sm:$0xff]
      %v507 = vld [vmem:[%s421 + $0x2a8] sm:$0xff]
      %v508 = vld [vmem:[%s421 + $0x2b0] sm:$0xff]
      %v509 = vld [vmem:[%s421 + $0x2b8] sm:$0xff]
      %v510 = vld [vmem:[%s421 + $0x2c0] sm:$0xff]
      %v511 = vld [vmem:[%s421 + $0x2c8] sm:$0xff]
      %v512 = vld [vmem:[%s421 + $0x2d0] sm:$0xff]
      %v513 = vld [vmem:[%s421 + $0x2d8] sm:$0xff]
      %v514 = vld [vmem:[%s421 + $0x2e0] sm:$0xff]
      %v515 = vld [vmem:[%s421 + $0x2e8] sm:$0xff]
      %v516 = vld [vmem:[%s421 + $0x2f0] sm:$0xff]
      %v517 = vld [vmem:[%s421 + $0x2f8] sm:$0xff]
      %v518 = vld [vmem:[%s199 + $0x300] sm:$0xff]
      %v519 = vld [vmem:[%s199 + $0x308] sm:$0xff]
      %v520 = vld [vmem:[%s199 + $0x310] sm:$0xff]
      %v521 = vld [vmem:[%s199 + $0x318] sm:$0xff]
      %v522 = vld [vmem:[%s199 + $0x320] sm:$0xff]
      %v523 = vld [vmem:[%s199 + $0x328] sm:$0xff]
      %v524 = vld [vmem:[%s199 + $0x330] sm:$0xff]
      %v525 = vld [vmem:[%s199 + $0x338] sm:$0xff]
      %v526 = vld [vmem:[%s199 + $0x340] sm:$0xff]
      %v527 = vld [vmem:[%s199 + $0x348] sm:$0xff]
      %v528 = vld [vmem:[%s199 + $0x350] sm:$0xff]
      %v529 = vld [vmem:[%s199 + $0x358] sm:$0xff]
      %v530 = vld [vmem:[%s199 + $0x360] sm:$0xff]
      %v531 = vld [vmem:[%s199 + $0x368] sm:$0xff]
      %v532 = vld [vmem:[%s199 + $0x370] sm:$0xff]
      %v533 = vld [vmem:[%s199 + $0x378] sm:$0xff]
      %v534 = vld [vmem:[%s199 + $0x380] sm:$0xff]
      %v535 = vld [vmem:[%s199 + $0x388] sm:$0xff]
      %v536 = vld [vmem:[%s199 + $0x390] sm:$0xff]
      %v537 = vld [vmem:[%s199 + $0x398] sm:$0xff]
      %v538 = vld [vmem:[%s199 + $0x3a0] sm:$0xff]
      %v539 = vld [vmem:[%s199 + $0x3a8] sm:$0xff]
      %v540 = vld [vmem:[%s199 + $0x3b0] sm:$0xff]
      %v541 = vld [vmem:[%s199 + $0x3b8] sm:$0xff]
      %v542 = vld [vmem:[%s199 + $0x3c0] sm:$0xff]
      %v543 = vld [vmem:[%s199 + $0x3c8] sm:$0xff]
      %v544 = vld [vmem:[%s199 + $0x3d0] sm:$0xff]
      %v545 = vld [vmem:[%s199 + $0x3d8] sm:$0xff]
      %v546 = vld [vmem:[%s199 + $0x3e0] sm:$0xff]
      %v547 = vld [vmem:[%s199 + $0x3e8] sm:$0xff]
      %v548 = vld [vmem:[%s199 + $0x3f0] sm:$0xff]
      %v549 = vld [vmem:[%s199 + $0x3f8] sm:$0xff]
      %v550 = vld [vmem:[%s199 + $0x400] sm:$0xff]
      %v551 = vld [vmem:[%s199 + $0x408] sm:$0xff]
      %v552 = vld [vmem:[%s199 + $0x410] sm:$0xff]
      %v553 = vld [vmem:[%s199 + $0x418] sm:$0xff]
      %v554 = vld [vmem:[%s199 + $0x420] sm:$0xff]
      %v555 = vld [vmem:[%s199 + $0x428] sm:$0xff]
      %v556 = vld [vmem:[%s199 + $0x430] sm:$0xff]
      %v557 = vld [vmem:[%s199 + $0x438] sm:$0xff]
      %v558 = vld [vmem:[%s199 + $0x440] sm:$0xff]
      %v559 = vld [vmem:[%s199 + $0x448] sm:$0xff]
      %v560 = vld [vmem:[%s199 + $0x450] sm:$0xff]
      %v561 = vld [vmem:[%s199 + $0x458] sm:$0xff]
      %v562 = vld [vmem:[%s199 + $0x460] sm:$0xff]
      %v563 = vld [vmem:[%s199 + $0x468] sm:$0xff]
      %v564 = vld [vmem:[%s199 + $0x470] sm:$0xff]
      %v565 = vld [vmem:[%s199 + $0x478] sm:$0xff]
      %v566 = vld [vmem:[%s199 + $0x480] sm:$0xff]
      %v567 = vld [vmem:[%s199 + $0x488] sm:$0xff]
      %v568 = vld [vmem:[%s199 + $0x490] sm:$0xff]
      %v569 = vld [vmem:[%s199 + $0x498] sm:$0xff]
      %v570 = vld [vmem:[%s199 + $0x4a0] sm:$0xff]
      %v571 = vld [vmem:[%s199 + $0x4a8] sm:$0xff]
      %v572 = vld [vmem:[%s199 + $0x4b0] sm:$0xff]
      %v573 = vld [vmem:[%s199 + $0x4b8] sm:$0xff]
      %v574 = vld [vmem:[%s199 + $0x4c0] sm:$0xff]
      %v575 = vld [vmem:[%s199 + $0x4c8] sm:$0xff]
      %v576 = vld [vmem:[%s199 + $0x4d0] sm:$0xff]
      %v577 = vld [vmem:[%s199 + $0x4d8] sm:$0xff]
      %v578 = vld [vmem:[%s199 + $0x4e0] sm:$0xff]
      %v579 = vld [vmem:[%s199 + $0x4e8] sm:$0xff]
      %v580 = vld [vmem:[%s199 + $0x4f0] sm:$0xff]
      %v581 = vld [vmem:[%s199 + $0x4f8] sm:$0xff]
      %v582 = vld [vmem:[%s199 + $0x500] sm:$0xff]
      %v583 = vld [vmem:[%s199 + $0x508] sm:$0xff]
      %v584 = vld [vmem:[%s199 + $0x510] sm:$0xff]
      %v585 = vld [vmem:[%s199 + $0x518] sm:$0xff]
      %v586 = vld [vmem:[%s199 + $0x520] sm:$0xff]
      %v587 = vld [vmem:[%s199 + $0x528] sm:$0xff]
      %v588 = vld [vmem:[%s199 + $0x530] sm:$0xff]
      %v589 = vld [vmem:[%s199 + $0x538] sm:$0xff]
      %v590 = vld [vmem:[%s199 + $0x540] sm:$0xff]
      %v591 = vld [vmem:[%s199 + $0x548] sm:$0xff]
      %v592 = vld [vmem:[%s199 + $0x550] sm:$0xff]
      %v593 = vld [vmem:[%s199 + $0x558] sm:$0xff]
      %v594 = vld [vmem:[%s199 + $0x560] sm:$0xff]
      %v595 = vld [vmem:[%s199 + $0x568] sm:$0xff]
      %v596 = vld [vmem:[%s199 + $0x570] sm:$0xff]
      %v597 = vld [vmem:[%s199 + $0x578] sm:$0xff]
      %v598 = vld [vmem:[%s199 + $0x580] sm:$0xff]
      %v599 = vld [vmem:[%s199 + $0x588] sm:$0xff]
      %v600 = vld [vmem:[%s199 + $0x590] sm:$0xff]
      %v601 = vld [vmem:[%s199 + $0x598] sm:$0xff]
      %v602 = vld [vmem:[%s199 + $0x5a0] sm:$0xff]
      %v603 = vld [vmem:[%s199 + $0x5a8] sm:$0xff]
      %v604 = vld [vmem:[%s199 + $0x5b0] sm:$0xff]
      %v605 = vld [vmem:[%s199 + $0x5b8] sm:$0xff]
      %v606 = vld [vmem:[%s199 + $0x5c0] sm:$0xff]
      %v607 = vld [vmem:[%s199 + $0x5c8] sm:$0xff]
      %v608 = vld [vmem:[%s199 + $0x5d0] sm:$0xff]
      %v609 = vld [vmem:[%s199 + $0x5d8] sm:$0xff]
      %v610 = vld [vmem:[%s199 + $0x5e0] sm:$0xff]
      %v611 = vld [vmem:[%s199 + $0x5e8] sm:$0xff]
      %v612 = vld [vmem:[%s199 + $0x5f0] sm:$0xff]
      %v613 = vld [vmem:[%s199 + $0x5f8] sm:$0xff]
      %v710 = vunpack.c.l.b16 %v422
      %v711 = vunpack.c.h.b16 %v422
      %v712 = vunpack.c.l.b16 %v423
      %v713 = vunpack.c.h.b16 %v423
      %v714 = vunpack.c.l.b16 %v424
      %v715 = vunpack.c.h.b16 %v424
      %v716 = vunpack.c.l.b16 %v425
      %v717 = vunpack.c.h.b16 %v425
      %v718 = vunpack.c.l.b16 %v426
      %v719 = vunpack.c.h.b16 %v426
      %v720 = vunpack.c.l.b16 %v427
      %v721 = vunpack.c.h.b16 %v427
      %v722 = vunpack.c.l.b16 %v428
      %v723 = vunpack.c.h.b16 %v428
      %v724 = vunpack.c.l.b16 %v429
      %v725 = vunpack.c.h.b16 %v429
      %v726 = vunpack.c.l.b16 %v430
      %v727 = vunpack.c.h.b16 %v430
      %v728 = vunpack.c.l.b16 %v431
      %v729 = vunpack.c.h.b16 %v431
      %v730 = vunpack.c.l.b16 %v432
      %v731 = vunpack.c.h.b16 %v432
      %v732 = vunpack.c.l.b16 %v433
      %v733 = vunpack.c.h.b16 %v433
      %v734 = vunpack.c.l.b16 %v434
      %v735 = vunpack.c.h.b16 %v434
      %v736 = vunpack.c.l.b16 %v435
      %v737 = vunpack.c.h.b16 %v435
      %v738 = vunpack.c.l.b16 %v436
      %v739 = vunpack.c.h.b16 %v436
      %v740 = vunpack.c.l.b16 %v437
      %v741 = vunpack.c.h.b16 %v437
      %v742 = vunpack.c.l.b16 %v438
      %v743 = vunpack.c.h.b16 %v438
      %v744 = vunpack.c.l.b16 %v439
      %v745 = vunpack.c.h.b16 %v439
      %v746 = vunpack.c.l.b16 %v440
      %v747 = vunpack.c.h.b16 %v440
      %v748 = vunpack.c.l.b16 %v441
      %v749 = vunpack.c.h.b16 %v441
      %v750 = vunpack.c.l.b16 %v442
      %v751 = vunpack.c.h.b16 %v442
      %v752 = vunpack.c.l.b16 %v443
      %v753 = vunpack.c.h.b16 %v443
      %v754 = vunpack.c.l.b16 %v444
      %v755 = vunpack.c.h.b16 %v444
      %v756 = vunpack.c.l.b16 %v445
      %v757 = vunpack.c.h.b16 %v445
      %v758 = vunpack.c.l.b16 %v446
      %v759 = vunpack.c.h.b16 %v446
      %v760 = vunpack.c.l.b16 %v447
      %v761 = vunpack.c.h.b16 %v447
      %v762 = vunpack.c.l.b16 %v448
      %v763 = vunpack.c.h.b16 %v448
      %v764 = vunpack.c.l.b16 %v449
      %v765 = vunpack.c.h.b16 %v449
      %v766 = vunpack.c.l.b16 %v450
      %v767 = vunpack.c.h.b16 %v450
      %v768 = vunpack.c.l.b16 %v451
      %v769 = vunpack.c.h.b16 %v451
      %v770 = vunpack.c.l.b16 %v452
      %v771 = vunpack.c.h.b16 %v452
      %v772 = vunpack.c.l.b16 %v453
      %v773 = vunpack.c.h.b16 %v453
      %v774 = vunpack.c.l.b16 %v454
      %v775 = vunpack.c.h.b16 %v454
      %v776 = vunpack.c.l.b16 %v455
      %v777 = vunpack.c.h.b16 %v455
      %v778 = vunpack.c.l.b16 %v456
      %v779 = vunpack.c.h.b16 %v456
      %v780 = vunpack.c.l.b16 %v457
      %v781 = vunpack.c.h.b16 %v457
      %v782 = vunpack.c.l.b16 %v458
      %v783 = vunpack.c.h.b16 %v458
      %v784 = vunpack.c.l.b16 %v459
      %v785 = vunpack.c.h.b16 %v459
      %v786 = vunpack.c.l.b16 %v460
      %v787 = vunpack.c.h.b16 %v460
      %v788 = vunpack.c.l.b16 %v461
      %v789 = vunpack.c.h.b16 %v461
      %v790 = vunpack.c.l.b16 %v462
      %v791 = vunpack.c.h.b16 %v462
      %v792 = vunpack.c.l.b16 %v463
      %v793 = vunpack.c.h.b16 %v463
      %v794 = vunpack.c.l.b16 %v464
      %v795 = vunpack.c.h.b16 %v464
      %v796 = vunpack.c.l.b16 %v465
      %v797 = vunpack.c.h.b16 %v465
      %v798 = vunpack.c.l.b16 %v466
      %v799 = vunpack.c.h.b16 %v466
      %v800 = vunpack.c.l.b16 %v467
      %v801 = vunpack.c.h.b16 %v467
      %v802 = vunpack.c.l.b16 %v468
      %v803 = vunpack.c.h.b16 %v468
      %v804 = vunpack.c.l.b16 %v469
      %v805 = vunpack.c.h.b16 %v469
      %v806 = vunpack.c.l.b16 %v470
      %v807 = vunpack.c.h.b16 %v470
      %v808 = vunpack.c.l.b16 %v471
      %v809 = vunpack.c.h.b16 %v471
      %v810 = vunpack.c.l.b16 %v472
      %v811 = vunpack.c.h.b16 %v472
      %v812 = vunpack.c.l.b16 %v473
      %v813 = vunpack.c.h.b16 %v473
      %v814 = vunpack.c.l.b16 %v474
      %v815 = vunpack.c.h.b16 %v474
      %v816 = vunpack.c.l.b16 %v475
      %v817 = vunpack.c.h.b16 %v475
      %v818 = vunpack.c.l.b16 %v476
      %v819 = vunpack.c.h.b16 %v476
      %v820 = vunpack.c.l.b16 %v477
      %v821 = vunpack.c.h.b16 %v477
      %v822 = vunpack.c.l.b16 %v478
      %v823 = vunpack.c.h.b16 %v478
      %v824 = vunpack.c.l.b16 %v479
      %v825 = vunpack.c.h.b16 %v479
      %v826 = vunpack.c.l.b16 %v480
      %v827 = vunpack.c.h.b16 %v480
      %v828 = vunpack.c.l.b16 %v481
      %v829 = vunpack.c.h.b16 %v481
      %v830 = vunpack.c.l.b16 %v482
      %v831 = vunpack.c.h.b16 %v482
      %v832 = vunpack.c.l.b16 %v483
      %v833 = vunpack.c.h.b16 %v483
      %v834 = vunpack.c.l.b16 %v484
      %v835 = vunpack.c.h.b16 %v484
      %v836 = vunpack.c.l.b16 %v485
      %v837 = vunpack.c.h.b16 %v485
      %v838 = vunpack.c.l.b16 %v486
      %v839 = vunpack.c.h.b16 %v486
      %v840 = vunpack.c.l.b16 %v487
      %v841 = vunpack.c.h.b16 %v487
      %v842 = vunpack.c.l.b16 %v488
      %v843 = vunpack.c.h.b16 %v488
      %v844 = vunpack.c.l.b16 %v489
      %v845 = vunpack.c.h.b16 %v489
      %v846 = vunpack.c.l.b16 %v490
      %v847 = vunpack.c.h.b16 %v490
      %v848 = vunpack.c.l.b16 %v491
      %v849 = vunpack.c.h.b16 %v491
      %v850 = vunpack.c.l.b16 %v492
      %v851 = vunpack.c.h.b16 %v492
      %v852 = vunpack.c.l.b16 %v493
      %v853 = vunpack.c.h.b16 %v493
      %v854 = vunpack.c.l.b16 %v494
      %v855 = vunpack.c.h.b16 %v494
      %v856 = vunpack.c.l.b16 %v495
      %v857 = vunpack.c.h.b16 %v495
      %v858 = vunpack.c.l.b16 %v496
      %v859 = vunpack.c.h.b16 %v496
      %v860 = vunpack.c.l.b16 %v497
      %v861 = vunpack.c.h.b16 %v497
      %v862 = vunpack.c.l.b16 %v498
      %v863 = vunpack.c.h.b16 %v498
      %v864 = vunpack.c.l.b16 %v499
      %v865 = vunpack.c.h.b16 %v499
      %v866 = vunpack.c.l.b16 %v500
      %v867 = vunpack.c.h.b16 %v500
      %v868 = vunpack.c.l.b16 %v501
      %v869 = vunpack.c.h.b16 %v501
      %v870 = vunpack.c.l.b16 %v502
      %v871 = vunpack.c.h.b16 %v502
      %v872 = vunpack.c.l.b16 %v503
      %v873 = vunpack.c.h.b16 %v503
      %v874 = vunpack.c.l.b16 %v504
      %v875 = vunpack.c.h.b16 %v504
      %v876 = vunpack.c.l.b16 %v505
      %v877 = vunpack.c.h.b16 %v505
      %v878 = vunpack.c.l.b16 %v506
      %v879 = vunpack.c.h.b16 %v506
      %v880 = vunpack.c.l.b16 %v507
      %v881 = vunpack.c.h.b16 %v507
      %v882 = vunpack.c.l.b16 %v508
      %v883 = vunpack.c.h.b16 %v508
      %v884 = vunpack.c.l.b16 %v509
      %v885 = vunpack.c.h.b16 %v509
      %v886 = vunpack.c.l.b16 %v510
      %v887 = vunpack.c.h.b16 %v510
      %v888 = vunpack.c.l.b16 %v511
      %v889 = vunpack.c.h.b16 %v511
      %v890 = vunpack.c.l.b16 %v512
      %v891 = vunpack.c.h.b16 %v512
      %v892 = vunpack.c.l.b16 %v513
      %v893 = vunpack.c.h.b16 %v513
      %v894 = vunpack.c.l.b16 %v514
      %v895 = vunpack.c.h.b16 %v514
      %v896 = vunpack.c.l.b16 %v515
      %v897 = vunpack.c.h.b16 %v515
      %v898 = vunpack.c.l.b16 %v516
      %v899 = vunpack.c.h.b16 %v516
      %v900 = vunpack.c.l.b16 %v517
      %v901 = vunpack.c.h.b16 %v517
      %v902 = vpack.c.b16 %v716, %v710
      %v903 = vpack.c.b16 %v717, %v711
      %v904 = vpack.c.b16 %v718, %v712
      %v905 = vpack.c.b16 %v719, %v713
      %v906 = vpack.c.b16 %v720, %v714
      %v907 = vpack.c.b16 %v721, %v715
      %v908 = vpack.c.b16 %v728, %v722
      %v909 = vpack.c.b16 %v729, %v723
      %v910 = vpack.c.b16 %v730, %v724
      %v911 = vpack.c.b16 %v731, %v725
      %v912 = vpack.c.b16 %v732, %v726
      %v913 = vpack.c.b16 %v733, %v727
      %v914 = vpack.c.b16 %v740, %v734
      %v915 = vpack.c.b16 %v741, %v735
      %v916 = vpack.c.b16 %v742, %v736
      %v917 = vpack.c.b16 %v743, %v737
      %v918 = vpack.c.b16 %v744, %v738
      %v919 = vpack.c.b16 %v745, %v739
      %v920 = vpack.c.b16 %v752, %v746
      %v921 = vpack.c.b16 %v753, %v747
      %v922 = vpack.c.b16 %v754, %v748
      %v923 = vpack.c.b16 %v755, %v749
      %v924 = vpack.c.b16 %v756, %v750
      %v925 = vpack.c.b16 %v757, %v751
      %v926 = vpack.c.b16 %v764, %v758
      %v927 = vpack.c.b16 %v765, %v759
      %v928 = vpack.c.b16 %v766, %v760
      %v929 = vpack.c.b16 %v767, %v761
      %v930 = vpack.c.b16 %v768, %v762
      %v931 = vpack.c.b16 %v769, %v763
      %v932 = vpack.c.b16 %v776, %v770
      %v933 = vpack.c.b16 %v777, %v771
      %v934 = vpack.c.b16 %v778, %v772
      %v935 = vpack.c.b16 %v779, %v773
      %v936 = vpack.c.b16 %v780, %v774
      %v937 = vpack.c.b16 %v781, %v775
      %v938 = vpack.c.b16 %v788, %v782
      %v939 = vpack.c.b16 %v789, %v783
      %v940 = vpack.c.b16 %v790, %v784
      %v941 = vpack.c.b16 %v791, %v785
      %v942 = vpack.c.b16 %v792, %v786
      %v943 = vpack.c.b16 %v793, %v787
      %v944 = vpack.c.b16 %v800, %v794
      %v945 = vpack.c.b16 %v801, %v795
      %v946 = vpack.c.b16 %v802, %v796
      %v947 = vpack.c.b16 %v803, %v797
      %v948 = vpack.c.b16 %v804, %v798
      %v949 = vpack.c.b16 %v805, %v799
      %v950 = vpack.c.b16 %v812, %v806
      %v951 = vpack.c.b16 %v813, %v807
      %v952 = vpack.c.b16 %v814, %v808
      %v953 = vpack.c.b16 %v815, %v809
      %v954 = vpack.c.b16 %v816, %v810
      %v955 = vpack.c.b16 %v817, %v811
      %v956 = vpack.c.b16 %v824, %v818
      %v957 = vpack.c.b16 %v825, %v819
      %v958 = vpack.c.b16 %v826, %v820
      %v959 = vpack.c.b16 %v827, %v821
      %v960 = vpack.c.b16 %v828, %v822
      %v961 = vpack.c.b16 %v829, %v823
      %v962 = vpack.c.b16 %v836, %v830
      %v963 = vpack.c.b16 %v837, %v831
      %v964 = vpack.c.b16 %v838, %v832
      %v965 = vpack.c.b16 %v839, %v833
      %v966 = vpack.c.b16 %v840, %v834
      %v967 = vpack.c.b16 %v841, %v835
      %v968 = vpack.c.b16 %v848, %v842
      %v969 = vpack.c.b16 %v849, %v843
      %v970 = vpack.c.b16 %v850, %v844
      %v971 = vpack.c.b16 %v851, %v845
      %v972 = vpack.c.b16 %v852, %v846
      %v973 = vpack.c.b16 %v853, %v847
      %v974 = vpack.c.b16 %v860, %v854
      %v975 = vpack.c.b16 %v861, %v855
      %v976 = vpack.c.b16 %v862, %v856
      %v977 = vpack.c.b16 %v863, %v857
      %v978 = vpack.c.b16 %v864, %v858
      %v979 = vpack.c.b16 %v865, %v859
      %v980 = vpack.c.b16 %v872, %v866
      %v981 = vpack.c.b16 %v873, %v867
      %v982 = vpack.c.b16 %v874, %v868
      %v983 = vpack.c.b16 %v875, %v869
      %v984 = vpack.c.b16 %v876, %v870
      %v985 = vpack.c.b16 %v877, %v871
      %v986 = vpack.c.b16 %v884, %v878
      %v987 = vpack.c.b16 %v885, %v879
      %v988 = vpack.c.b16 %v886, %v880
      %v989 = vpack.c.b16 %v887, %v881
      %v990 = vpack.c.b16 %v888, %v882
      %v991 = vpack.c.b16 %v889, %v883
      %v992 = vpack.c.b16 %v896, %v890
      %v993 = vpack.c.b16 %v897, %v891
      %v994 = vpack.c.b16 %v898, %v892
      %v995 = vpack.c.b16 %v899, %v893
      %v996 = vpack.c.b16 %v900, %v894
      %v997 = vpack.c.b16 %v901, %v895
      %v1190 = vunpack.c.l.b16 %v518
      %v1191 = vunpack.c.h.b16 %v518
      %v1192 = vunpack.c.l.b16 %v519
      %v1193 = vunpack.c.h.b16 %v519
      %v1194 = vunpack.c.l.b16 %v520
      %v1195 = vunpack.c.h.b16 %v520
      %v1196 = vunpack.c.l.b16 %v521
      %v1197 = vunpack.c.h.b16 %v521
      %v1198 = vunpack.c.l.b16 %v522
      %v1199 = vunpack.c.h.b16 %v522
      %v1200 = vunpack.c.l.b16 %v523
      %v1201 = vunpack.c.h.b16 %v523
      %v1202 = vunpack.c.l.b16 %v524
      %v1203 = vunpack.c.h.b16 %v524
      %v1204 = vunpack.c.l.b16 %v525
      %v1205 = vunpack.c.h.b16 %v525
      %v1206 = vunpack.c.l.b16 %v526
      %v1207 = vunpack.c.h.b16 %v526
      %v1208 = vunpack.c.l.b16 %v527
      %v1209 = vunpack.c.h.b16 %v527
      %v1210 = vunpack.c.l.b16 %v528
      %v1211 = vunpack.c.h.b16 %v528
      %v1212 = vunpack.c.l.b16 %v529
      %v1213 = vunpack.c.h.b16 %v529
      %v1214 = vunpack.c.l.b16 %v530
      %v1215 = vunpack.c.h.b16 %v530
      %v1216 = vunpack.c.l.b16 %v531
      %v1217 = vunpack.c.h.b16 %v531
      %v1218 = vunpack.c.l.b16 %v532
      %v1219 = vunpack.c.h.b16 %v532
      %v1220 = vunpack.c.l.b16 %v533
      %v1221 = vunpack.c.h.b16 %v533
      %v1222 = vunpack.c.l.b16 %v534
      %v1223 = vunpack.c.h.b16 %v534
      %v1224 = vunpack.c.l.b16 %v535
      %v1225 = vunpack.c.h.b16 %v535
      %v1226 = vunpack.c.l.b16 %v536
      %v1227 = vunpack.c.h.b16 %v536
      %v1228 = vunpack.c.l.b16 %v537
      %v1229 = vunpack.c.h.b16 %v537
      %v1230 = vunpack.c.l.b16 %v538
      %v1231 = vunpack.c.h.b16 %v538
      %v1232 = vunpack.c.l.b16 %v539
      %v1233 = vunpack.c.h.b16 %v539
      %v1234 = vunpack.c.l.b16 %v540
      %v1235 = vunpack.c.h.b16 %v540
      %v1236 = vunpack.c.l.b16 %v541
      %v1237 = vunpack.c.h.b16 %v541
      %v1238 = vunpack.c.l.b16 %v542
      %v1239 = vunpack.c.h.b16 %v542
      %v1240 = vunpack.c.l.b16 %v543
      %v1241 = vunpack.c.h.b16 %v543
      %v1242 = vunpack.c.l.b16 %v544
      %v1243 = vunpack.c.h.b16 %v544
      %v1244 = vunpack.c.l.b16 %v545
      %v1245 = vunpack.c.h.b16 %v545
      %v1246 = vunpack.c.l.b16 %v546
      %v1247 = vunpack.c.h.b16 %v546
      %v1248 = vunpack.c.l.b16 %v547
      %v1249 = vunpack.c.h.b16 %v547
      %v1250 = vunpack.c.l.b16 %v548
      %v1251 = vunpack.c.h.b16 %v548
      %v1252 = vunpack.c.l.b16 %v549
      %v1253 = vunpack.c.h.b16 %v549
      %v1254 = vunpack.c.l.b16 %v550
      %v1255 = vunpack.c.h.b16 %v550
      %v1256 = vunpack.c.l.b16 %v551
      %v1257 = vunpack.c.h.b16 %v551
      %v1258 = vunpack.c.l.b16 %v552
      %v1259 = vunpack.c.h.b16 %v552
      %v1260 = vunpack.c.l.b16 %v553
      %v1261 = vunpack.c.h.b16 %v553
      %v1262 = vunpack.c.l.b16 %v554
      %v1263 = vunpack.c.h.b16 %v554
      %v1264 = vunpack.c.l.b16 %v555
      %v1265 = vunpack.c.h.b16 %v555
      %v1266 = vunpack.c.l.b16 %v556
      %v1267 = vunpack.c.h.b16 %v556
      %v1268 = vunpack.c.l.b16 %v557
      %v1269 = vunpack.c.h.b16 %v557
      %v1270 = vunpack.c.l.b16 %v558
      %v1271 = vunpack.c.h.b16 %v558
      %v1272 = vunpack.c.l.b16 %v559
      %v1273 = vunpack.c.h.b16 %v559
      %v1274 = vunpack.c.l.b16 %v560
      %v1275 = vunpack.c.h.b16 %v560
      %v1276 = vunpack.c.l.b16 %v561
      %v1277 = vunpack.c.h.b16 %v561
      %v1278 = vunpack.c.l.b16 %v562
      %v1279 = vunpack.c.h.b16 %v562
      %v1280 = vunpack.c.l.b16 %v563
      %v1281 = vunpack.c.h.b16 %v563
      %v1282 = vunpack.c.l.b16 %v564
      %v1283 = vunpack.c.h.b16 %v564
      %v1284 = vunpack.c.l.b16 %v565
      %v1285 = vunpack.c.h.b16 %v565
      %v1286 = vunpack.c.l.b16 %v566
      %v1287 = vunpack.c.h.b16 %v566
      %v1288 = vunpack.c.l.b16 %v567
      %v1289 = vunpack.c.h.b16 %v567
      %v1290 = vunpack.c.l.b16 %v568
      %v1291 = vunpack.c.h.b16 %v568
      %v1292 = vunpack.c.l.b16 %v569
      %v1293 = vunpack.c.h.b16 %v569
      %v1294 = vunpack.c.l.b16 %v570
      %v1295 = vunpack.c.h.b16 %v570
      %v1296 = vunpack.c.l.b16 %v571
      %v1297 = vunpack.c.h.b16 %v571
      %v1298 = vunpack.c.l.b16 %v572
      %v1299 = vunpack.c.h.b16 %v572
      %v1300 = vunpack.c.l.b16 %v573
      %v1301 = vunpack.c.h.b16 %v573
      %v1302 = vunpack.c.l.b16 %v574
      %v1303 = vunpack.c.h.b16 %v574
      %v1304 = vunpack.c.l.b16 %v575
      %v1305 = vunpack.c.h.b16 %v575
      %v1306 = vunpack.c.l.b16 %v576
      %v1307 = vunpack.c.h.b16 %v576
      %v1308 = vunpack.c.l.b16 %v577
      %v1309 = vunpack.c.h.b16 %v577
      %v1310 = vunpack.c.l.b16 %v578
      %v1311 = vunpack.c.h.b16 %v578
      %v1312 = vunpack.c.l.b16 %v579
      %v1313 = vunpack.c.h.b16 %v579
      %v1314 = vunpack.c.l.b16 %v580
      %v1315 = vunpack.c.h.b16 %v580
      %v1316 = vunpack.c.l.b16 %v581
      %v1317 = vunpack.c.h.b16 %v581
      %v1318 = vunpack.c.l.b16 %v582
      %v1319 = vunpack.c.h.b16 %v582
      %v1320 = vunpack.c.l.b16 %v583
      %v1321 = vunpack.c.h.b16 %v583
      %v1322 = vunpack.c.l.b16 %v584
      %v1323 = vunpack.c.h.b16 %v584
      %v1324 = vunpack.c.l.b16 %v585
      %v1325 = vunpack.c.h.b16 %v585
      %v1326 = vunpack.c.l.b16 %v586
      %v1327 = vunpack.c.h.b16 %v586
      %v1328 = vunpack.c.l.b16 %v587
      %v1329 = vunpack.c.h.b16 %v587
      %v1330 = vunpack.c.l.b16 %v588
      %v1331 = vunpack.c.h.b16 %v588
      %v1332 = vunpack.c.l.b16 %v589
      %v1333 = vunpack.c.h.b16 %v589
      %v1334 = vunpack.c.l.b16 %v590
      %v1335 = vunpack.c.h.b16 %v590
      %v1336 = vunpack.c.l.b16 %v591
      %v1337 = vunpack.c.h.b16 %v591
      %v1338 = vunpack.c.l.b16 %v592
      %v1339 = vunpack.c.h.b16 %v592
      %v1340 = vunpack.c.l.b16 %v593
      %v1341 = vunpack.c.h.b16 %v593
      %v1342 = vunpack.c.l.b16 %v594
      %v1343 = vunpack.c.h.b16 %v594
      %v1344 = vunpack.c.l.b16 %v595
      %v1345 = vunpack.c.h.b16 %v595
      %v1346 = vunpack.c.l.b16 %v596
      %v1347 = vunpack.c.h.b16 %v596
      %v1348 = vunpack.c.l.b16 %v597
      %v1349 = vunpack.c.h.b16 %v597
      %v1350 = vunpack.c.l.b16 %v598
      %v1351 = vunpack.c.h.b16 %v598
      %v1352 = vunpack.c.l.b16 %v599
      %v1353 = vunpack.c.h.b16 %v599
      %v1354 = vunpack.c.l.b16 %v600
      %v1355 = vunpack.c.h.b16 %v600
      %v1356 = vunpack.c.l.b16 %v601
      %v1357 = vunpack.c.h.b16 %v601
      %v1358 = vunpack.c.l.b16 %v602
      %v1359 = vunpack.c.h.b16 %v602
      %v1360 = vunpack.c.l.b16 %v603
      %v1361 = vunpack.c.h.b16 %v603
      %v1362 = vunpack.c.l.b16 %v604
      %v1363 = vunpack.c.h.b16 %v604
      %v1364 = vunpack.c.l.b16 %v605
      %v1365 = vunpack.c.h.b16 %v605
      %v1366 = vunpack.c.l.b16 %v606
      %v1367 = vunpack.c.h.b16 %v606
      %v1368 = vunpack.c.l.b16 %v607
      %v1369 = vunpack.c.h.b16 %v607
      %v1370 = vunpack.c.l.b16 %v608
      %v1371 = vunpack.c.h.b16 %v608
      %v1372 = vunpack.c.l.b16 %v609
      %v1373 = vunpack.c.h.b16 %v609
      %v1374 = vunpack.c.l.b16 %v610
      %v1375 = vunpack.c.h.b16 %v610
      %v1376 = vunpack.c.l.b16 %v611
      %v1377 = vunpack.c.h.b16 %v611
      %v1378 = vunpack.c.l.b16 %v612
      %v1379 = vunpack.c.h.b16 %v612
      %v1380 = vunpack.c.l.b16 %v613
      %v1381 = vunpack.c.h.b16 %v613
      %v1382 = vpack.c.b16 %v1192, %v1190
      %v1383 = vpack.c.b16 %v1193, %v1191
      %v1384 = vpack.c.b16 %v1196, %v1194
      %v1385 = vpack.c.b16 %v1197, %v1195
      %v1386 = vpack.c.b16 %v1200, %v1198
      %v1387 = vpack.c.b16 %v1201, %v1199
      %v1388 = vpack.c.b16 %v1204, %v1202
      %v1389 = vpack.c.b16 %v1205, %v1203
      %v1390 = vpack.c.b16 %v1208, %v1206
      %v1391 = vpack.c.b16 %v1209, %v1207
      %v1392 = vpack.c.b16 %v1212, %v1210
      %v1393 = vpack.c.b16 %v1213, %v1211
      %v1394 = vpack.c.b16 %v1216, %v1214
      %v1395 = vpack.c.b16 %v1217, %v1215
      %v1396 = vpack.c.b16 %v1220, %v1218
      %v1397 = vpack.c.b16 %v1221, %v1219
      %v1398 = vpack.c.b16 %v1224, %v1222
      %v1399 = vpack.c.b16 %v1225, %v1223
      %v1400 = vpack.c.b16 %v1228, %v1226
      %v1401 = vpack.c.b16 %v1229, %v1227
      %v1402 = vpack.c.b16 %v1232, %v1230
      %v1403 = vpack.c.b16 %v1233, %v1231
      %v1404 = vpack.c.b16 %v1236, %v1234
      %v1405 = vpack.c.b16 %v1237, %v1235
      %v1406 = vpack.c.b16 %v1240, %v1238
      %v1407 = vpack.c.b16 %v1241, %v1239
      %v1408 = vpack.c.b16 %v1244, %v1242
      %v1409 = vpack.c.b16 %v1245, %v1243
      %v1410 = vpack.c.b16 %v1248, %v1246
      %v1411 = vpack.c.b16 %v1249, %v1247
      %v1412 = vpack.c.b16 %v1252, %v1250
      %v1413 = vpack.c.b16 %v1253, %v1251
      %v1414 = vpack.c.b16 %v1256, %v1254
      %v1415 = vpack.c.b16 %v1257, %v1255
      %v1416 = vpack.c.b16 %v1260, %v1258
      %v1417 = vpack.c.b16 %v1261, %v1259
      %v1418 = vpack.c.b16 %v1264, %v1262
      %v1419 = vpack.c.b16 %v1265, %v1263
      %v1420 = vpack.c.b16 %v1268, %v1266
      %v1421 = vpack.c.b16 %v1269, %v1267
      %v1422 = vpack.c.b16 %v1272, %v1270
      %v1423 = vpack.c.b16 %v1273, %v1271
      %v1424 = vpack.c.b16 %v1276, %v1274
      %v1425 = vpack.c.b16 %v1277, %v1275
      %v1426 = vpack.c.b16 %v1280, %v1278
      %v1427 = vpack.c.b16 %v1281, %v1279
      %v1428 = vpack.c.b16 %v1284, %v1282
      %v1429 = vpack.c.b16 %v1285, %v1283
      %v1430 = vpack.c.b16 %v1288, %v1286
      %v1431 = vpack.c.b16 %v1289, %v1287
      %v1432 = vpack.c.b16 %v1292, %v1290
      %v1433 = vpack.c.b16 %v1293, %v1291
      %v1434 = vpack.c.b16 %v1296, %v1294
      %v1435 = vpack.c.b16 %v1297, %v1295
      %v1436 = vpack.c.b16 %v1300, %v1298
      %v1437 = vpack.c.b16 %v1301, %v1299
      %v1438 = vpack.c.b16 %v1304, %v1302
      %v1439 = vpack.c.b16 %v1305, %v1303
      %v1440 = vpack.c.b16 %v1308, %v1306
      %v1441 = vpack.c.b16 %v1309, %v1307
      %v1442 = vpack.c.b16 %v1312, %v1310
      %v1443 = vpack.c.b16 %v1313, %v1311
      %v1444 = vpack.c.b16 %v1316, %v1314
      %v1445 = vpack.c.b16 %v1317, %v1315
      %v1446 = vpack.c.b16 %v1320, %v1318
      %v1447 = vpack.c.b16 %v1321, %v1319
      %v1448 = vpack.c.b16 %v1324, %v1322
      %v1449 = vpack.c.b16 %v1325, %v1323
      %v1450 = vpack.c.b16 %v1328, %v1326
      %v1451 = vpack.c.b16 %v1329, %v1327
      %v1452 = vpack.c.b16 %v1332, %v1330
      %v1453 = vpack.c.b16 %v1333, %v1331
      %v1454 = vpack.c.b16 %v1336, %v1334
      %v1455 = vpack.c.b16 %v1337, %v1335
      %v1456 = vpack.c.b16 %v1340, %v1338
      %v1457 = vpack.c.b16 %v1341, %v1339
      %v1458 = vpack.c.b16 %v1344, %v1342
      %v1459 = vpack.c.b16 %v1345, %v1343
      %v1460 = vpack.c.b16 %v1348, %v1346
      %v1461 = vpack.c.b16 %v1349, %v1347
      %v1462 = vpack.c.b16 %v1352, %v1350
      %v1463 = vpack.c.b16 %v1353, %v1351
      %v1464 = vpack.c.b16 %v1356, %v1354
      %v1465 = vpack.c.b16 %v1357, %v1355
      %v1466 = vpack.c.b16 %v1360, %v1358
      %v1467 = vpack.c.b16 %v1361, %v1359
      %v1468 = vpack.c.b16 %v1364, %v1362
      %v1469 = vpack.c.b16 %v1365, %v1363
      %v1470 = vpack.c.b16 %v1368, %v1366
      %v1471 = vpack.c.b16 %v1369, %v1367
      %v1472 = vpack.c.b16 %v1372, %v1370
      %v1473 = vpack.c.b16 %v1373, %v1371
      %v1474 = vpack.c.b16 %v1376, %v1374
      %v1475 = vpack.c.b16 %v1377, %v1375
      %v1476 = vpack.c.b16 %v1380, %v1378
      %v1477 = vpack.c.b16 %v1381, %v1379
      %1574 = vmatprep.subr.bf16.mxu0 %v1383
      %1575 = vmatpush1.bf16.msra.mxu0 %v1382
      %1576 = vmatprep.subr.bf16.mxu0 %v1385
      %1577 = vmatpush1.bf16.msra.mxu0 %v1384
      %1578 = vmatprep.subr.bf16.mxu0 %v1387
      %1579 = vmatpush1.bf16.msra.mxu0 %v1386
      %1580 = vmatprep.subr.bf16.mxu0 %v1389
      %1581 = vmatpush1.bf16.msra.mxu0 %v1388
      %1582 = vmatprep.subr.bf16.mxu0 %v1391
      %1583 = vmatpush1.bf16.msra.mxu0 %v1390
      %1584 = vmatprep.subr.bf16.mxu0 %v1393
      %1585 = vmatpush1.bf16.msra.mxu0 %v1392
      %1586 = vmatprep.subr.bf16.mxu0 %v1395
      %1587 = vmatpush1.bf16.msra.mxu0 %v1394
      %1588 = vmatprep.subr.bf16.mxu0 %v1397
      %1589 = vmatpush1.bf16.msra.mxu0 %v1396
      %1590 = vmatprep.subr.bf16.mxu0 %v1399
      %1591 = vmatpush1.bf16.msra.mxu0 %v1398
      %1592 = vmatprep.subr.bf16.mxu0 %v1401
      %1593 = vmatpush1.bf16.msra.mxu0 %v1400
      %1594 = vmatprep.subr.bf16.mxu0 %v1403
      %1595 = vmatpush1.bf16.msra.mxu0 %v1402
      %1596 = vmatprep.subr.bf16.mxu0 %v1405
      %1597 = vmatpush1.bf16.msra.mxu0 %v1404
      %1598 = vmatprep.subr.bf16.mxu0 %v1407
      %1599 = vmatpush1.bf16.msra.mxu0 %v1406
      %1600 = vmatprep.subr.bf16.mxu0 %v1409
      %1601 = vmatpush1.bf16.msra.mxu0 %v1408
      %1602 = vmatprep.subr.bf16.mxu0 %v1411
      %1603 = vmatpush1.bf16.msra.mxu0 %v1410
      %1604 = vmatprep.subr.bf16.mxu0 %v1413
      %1605 = vmatpush1.bf16.msra.mxu0 %v1412
      %1606 = vmatprep.mubr.bf16.mxu0 %v903
      %1607 = vmatmul.mubr.bf16.gmra.mrb[0].mxu0 %v902
      %v1608 = vpop.f32.mrb[0].mxu0
      %v1609 = vadd.f32 0.0, %v1608
      %v1610 = vpop.f32.mrb[0].mxu0
      %v1611 = vadd.f32 0.0, %v1610
      %v1612 = vpop.f32.mrb[0].mxu0
      %v1613 = vadd.f32 0.0, %v1612
      %v1614 = vpop.f32.mrb[0].mxu0
      %v1615 = vadd.f32 0.0, %v1614
      %1616 = vmatprep.mubr.bf16.mxu0 %v909
      %1617 = vmatmul.mubr.bf16.gmra.mrb[0].mxu0 %v908
      %v1618 = vpop.f32.mrb[0].mxu0
      %v1619 = vadd.f32 0.0, %v1618
      %v1620 = vpop.f32.mrb[0].mxu0
      %v1621 = vadd.f32 0.0, %v1620
      %v1622 = vpop.f32.mrb[0].mxu0
      %v1623 = vadd.f32 0.0, %v1622
      %v1624 = vpop.f32.mrb[0].mxu0
      %v1625 = vadd.f32 0.0, %v1624
      %1626 = vmatprep.mubr.bf16.mxu0 %v915
      %1627 = vmatmul.mubr.bf16.gmra.mrb[0].mxu0 %v914
      %v1628 = vpop.f32.mrb[0].mxu0
      %v1629 = vadd.f32 0.0, %v1628
      %v1630 = vpop.f32.mrb[0].mxu0
      %v1631 = vadd.f32 0.0, %v1630
      %v1632 = vpop.f32.mrb[0].mxu0
      %v1633 = vadd.f32 0.0, %v1632
      %v1634 = vpop.f32.mrb[0].mxu0
      %v1635 = vadd.f32 0.0, %v1634
      %1636 = vmatprep.mubr.bf16.mxu0 %v921
      %1637 = vmatmul.mubr.bf16.gmra.mrb[0].mxu0 %v920
      %v1638 = vpop.f32.mrb[0].mxu0
      %v1639 = vadd.f32 0.0, %v1638
      %v1640 = vpop.f32.mrb[0].mxu0
      %v1641 = vadd.f32 0.0, %v1640
      %v1642 = vpop.f32.mrb[0].mxu0
      %v1643 = vadd.f32 0.0, %v1642
      %v1644 = vpop.f32.mrb[0].mxu0
      %v1645 = vadd.f32 0.0, %v1644
      %1646 = vmatprep.mubr.bf16.mxu0 %v927
      %1647 = vmatmul.mubr.bf16.gmra.mrb[0].mxu0 %v926
      %v1648 = vpop.f32.mrb[0].mxu0
      %v1649 = vadd.f32 0.0, %v1648
      %v1650 = vpop.f32.mrb[0].mxu0
      %v1651 = vadd.f32 0.0, %v1650
      %v1652 = vpop.f32.mrb[0].mxu0
      %v1653 = vadd.f32 0.0, %v1652
      %v1654 = vpop.f32.mrb[0].mxu0
      %v1655 = vadd.f32 0.0, %v1654
      %1656 = vmatprep.mubr.bf16.mxu0 %v933
      %1657 = vmatmul.mubr.bf16.gmra.mrb[0].mxu0 %v932
      %v1658 = vpop.f32.mrb[0].mxu0
      %v1659 = vadd.f32 0.0, %v1658
      %v1660 = vpop.f32.mrb[0].mxu0
      %v1661 = vadd.f32 0.0, %v1660
      %v1662 = vpop.f32.mrb[0].mxu0
      %v1663 = vadd.f32 0.0, %v1662
      %v1664 = vpop.f32.mrb[0].mxu0
      %v1665 = vadd.f32 0.0, %v1664
      %1666 = vmatprep.mubr.bf16.mxu0 %v939
      %1667 = vmatmul.mubr.bf16.gmra.mrb[0].mxu0 %v938
      %v1668 = vpop.f32.mrb[0].mxu0
      %v1669 = vadd.f32 0.0, %v1668
      %v1670 = vpop.f32.mrb[0].mxu0
      %v1671 = vadd.f32 0.0, %v1670
      %v1672 = vpop.f32.mrb[0].mxu0
      %v1673 = vadd.f32 0.0, %v1672
      %v1674 = vpop.f32.mrb[0].mxu0
      %v1675 = vadd.f32 0.0, %v1674
      %1676 = vmatprep.mubr.bf16.mxu0 %v945
      %1677 = vmatmul.mubr.bf16.gmra.mrb[0].mxu0 %v944
      %v1678 = vpop.f32.mrb[0].mxu0
      %v1679 = vadd.f32 0.0, %v1678
      %v1680 = vpop.f32.mrb[0].mxu0
      %v1681 = vadd.f32 0.0, %v1680
      %v1682 = vpop.f32.mrb[0].mxu0
      %v1683 = vadd.f32 0.0, %v1682
      %v1684 = vpop.f32.mrb[0].mxu0
      %v1685 = vadd.f32 0.0, %v1684
      %1686 = vmatprep.mubr.bf16.mxu0 %v951
      %1687 = vmatmul.mubr.bf16.gmra.mrb[0].mxu0 %v950
      %v1688 = vpop.f32.mrb[0].mxu0
      %v1689 = vadd.f32 0.0, %v1688
      %v1690 = vpop.f32.mrb[0].mxu0
      %v1691 = vadd.f32 0.0, %v1690
      %v1692 = vpop.f32.mrb[0].mxu0
      %v1693 = vadd.f32 0.0, %v1692
      %v1694 = vpop.f32.mrb[0].mxu0
      %v1695 = vadd.f32 0.0, %v1694
      %1696 = vmatprep.mubr.bf16.mxu0 %v957
      %1697 = vmatmul.mubr.bf16.gmra.mrb[0].mxu0 %v956
      %v1698 = vpop.f32.mrb[0].mxu0
      %v1699 = vadd.f32 0.0, %v1698
      %v1700 = vpop.f32.mrb[0].mxu0
      %v1701 = vadd.f32 0.0, %v1700
      %v1702 = vpop.f32.mrb[0].mxu0
      %v1703 = vadd.f32 0.0, %v1702
      %v1704 = vpop.f32.mrb[0].mxu0
      %v1705 = vadd.f32 0.0, %v1704
      %1706 = vmatprep.mubr.bf16.mxu0 %v963
      %1707 = vmatmul.mubr.bf16.gmra.mrb[0].mxu0 %v962
      %v1708 = vpop.f32.mrb[0].mxu0
      %v1709 = vadd.f32 0.0, %v1708
      %v1710 = vpop.f32.mrb[0].mxu0
      %v1711 = vadd.f32 0.0, %v1710
      %v1712 = vpop.f32.mrb[0].mxu0
      %v1713 = vadd.f32 0.0, %v1712
      %v1714 = vpop.f32.mrb[0].mxu0
      %v1715 = vadd.f32 0.0, %v1714
      %1716 = vmatprep.mubr.bf16.mxu0 %v969
      %1717 = vmatmul.mubr.bf16.gmra.mrb[0].mxu0 %v968
      %v1718 = vpop.f32.mrb[0].mxu0
      %v1719 = vadd.f32 0.0, %v1718
      %v1720 = vpop.f32.mrb[0].mxu0
      %v1721 = vadd.f32 0.0, %v1720
      %v1722 = vpop.f32.mrb[0].mxu0
      %v1723 = vadd.f32 0.0, %v1722
      %v1724 = vpop.f32.mrb[0].mxu0
      %v1725 = vadd.f32 0.0, %v1724
      %1726 = vmatprep.mubr.bf16.mxu0 %v975
      %1727 = vmatmul.mubr.bf16.gmra.mrb[0].mxu0 %v974
      %v1728 = vpop.f32.mrb[0].mxu0
      %v1729 = vadd.f32 0.0, %v1728
      %v1730 = vpop.f32.mrb[0].mxu0
      %v1731 = vadd.f32 0.0, %v1730
      %v1732 = vpop.f32.mrb[0].mxu0
      %v1733 = vadd.f32 0.0, %v1732
      %v1734 = vpop.f32.mrb[0].mxu0
      %v1735 = vadd.f32 0.0, %v1734
      %1736 = vmatprep.mubr.bf16.mxu0 %v981
      %1737 = vmatmul.mubr.bf16.gmra.mrb[0].mxu0 %v980
      %v1738 = vpop.f32.mrb[0].mxu0
      %v1739 = vadd.f32 0.0, %v1738
      %v1740 = vpop.f32.mrb[0].mxu0
      %v1741 = vadd.f32 0.0, %v1740
      %v1742 = vpop.f32.mrb[0].mxu0
      %v1743 = vadd.f32 0.0, %v1742
      %v1744 = vpop.f32.mrb[0].mxu0
      %v1745 = vadd.f32 0.0, %v1744
      %1746 = vmatprep.mubr.bf16.mxu0 %v987
      %1747 = vmatmul.mubr.bf16.gmra.mrb[0].mxu0 %v986
      %v1748 = vpop.f32.mrb[0].mxu0
      %v1749 = vadd.f32 0.0, %v1748
      %v1750 = vpop.f32.mrb[0].mxu0
      %v1751 = vadd.f32 0.0, %v1750
      %v1752 = vpop.f32.mrb[0].mxu0
      %v1753 = vadd.f32 0.0, %v1752
      %v1754 = vpop.f32.mrb[0].mxu0
      %v1755 = vadd.f32 0.0, %v1754
      %1756 = vmatprep.mubr.bf16.mxu0 %v993
      %1757 = vmatmul.mubr.bf16.gmra.mrb[0].mxu0 %v992
      %v1758 = vpop.f32.mrb[0].mxu0
      %v1759 = vadd.f32 0.0, %v1758
      %v1760 = vpop.f32.mrb[0].mxu0
      %v1761 = vadd.f32 0.0, %v1760
      %v1762 = vpop.f32.mrb[0].mxu0
      %v1763 = vadd.f32 0.0, %v1762
      %v1764 = vpop.f32.mrb[0].mxu0
      %v1765 = vadd.f32 0.0, %v1764
      %1766 = vdwg.mxu0
      %1767 = vmatprep.subr.bf16.mxu0 %v1415
      %1768 = vmatpush1.bf16.msra.mxu0 %v1414
      %1769 = vmatprep.subr.bf16.mxu0 %v1417
      %1770 = vmatpush1.bf16.msra.mxu0 %v1416
      %1771 = vmatprep.subr.bf16.mxu0 %v1419
      %1772 = vmatpush1.bf16.msra.mxu0 %v1418
      %1773 = vmatprep.subr.bf16.mxu0 %v1421
      %1774 = vmatpush1.bf16.msra.mxu0 %v1420
      %1775 = vmatprep.subr.bf16.mxu0 %v1423
      %1776 = vmatpush1.bf16.msra.mxu0 %v1422
      %1777 = vmatprep.subr.bf16.mxu0 %v1425
      %1778 = vmatpush1.bf16.msra.mxu0 %v1424
      %1779 = vmatprep.subr.bf16.mxu0 %v1427
      %1780 = vmatpush1.bf16.msra.mxu0 %v1426
      %1781 = vmatprep.subr.bf16.mxu0 %v1429
      %1782 = vmatpush1.bf16.msra.mxu0 %v1428
      %1783 = vmatprep.subr.bf16.mxu0 %v1431
      %1784 = vmatpush1.bf16.msra.mxu0 %v1430
      %1785 = vmatprep.subr.bf16.mxu0 %v1433
      %1786 = vmatpush1.bf16.msra.mxu0 %v1432
      %1787 = vmatprep.subr.bf16.mxu0 %v1435
      %1788 = vmatpush1.bf16.msra.mxu0 %v1434
      %1789 = vmatprep.subr.bf16.mxu0 %v1437
      %1790 = vmatpush1.bf16.msra.mxu0 %v1436
      %1791 = vmatprep.subr.bf16.mxu0 %v1439
      %1792 = vmatpush1.bf16.msra.mxu0 %v1438
      %1793 = vmatprep.subr.bf16.mxu0 %v1441
      %1794 = vmatpush1.bf16.msra.mxu0 %v1440
      %1795 = vmatprep.subr.bf16.mxu0 %v1443
      %1796 = vmatpush1.bf16.msra.mxu0 %v1442
      %1797 = vmatprep.subr.bf16.mxu0 %v1445
      %1798 = vmatpush1.bf16.msra.mxu0 %v1444
      %1799 = vmatprep.mubr.bf16.mxu0 %v905
      %1800 = vmatmul.mubr.bf16.gmra.mrb[0].mxu0 %v904
      %v1801 = vpop.f32.mrb[0].mxu0
      %v1802 = vadd.f32 %v1609, %v1801
      %v1803 = vpop.f32.mrb[0].mxu0
      %v1804 = vadd.f32 %v1611, %v1803
      %v1805 = vpop.f32.mrb[0].mxu0
      %v1806 = vadd.f32 %v1613, %v1805
      %v1807 = vpop.f32.mrb[0].mxu0
      %v1808 = vadd.f32 %v1615, %v1807
      %1809 = vmatprep.mubr.bf16.mxu0 %v911
      %1810 = vmatmul.mubr.bf16.gmra.mrb[0].mxu0 %v910
      %v1811 = vpop.f32.mrb[0].mxu0
      %v1812 = vadd.f32 %v1619, %v1811
      %v1813 = vpop.f32.mrb[0].mxu0
      %v1814 = vadd.f32 %v1621, %v1813
      %v1815 = vpop.f32.mrb[0].mxu0
      %v1816 = vadd.f32 %v1623, %v1815
      %v1817 = vpop.f32.mrb[0].mxu0
      %v1818 = vadd.f32 %v1625, %v1817
      %1819 = vmatprep.mubr.bf16.mxu0 %v917
      %1820 = vmatmul.mubr.bf16.gmra.mrb[0].mxu0 %v916
      %v1821 = vpop.f32.mrb[0].mxu0
      %v1822 = vadd.f32 %v1629, %v1821
      %v1823 = vpop.f32.mrb[0].mxu0
      %v1824 = vadd.f32 %v1631, %v1823
      %v1825 = vpop.f32.mrb[0].mxu0
      %v1826 = vadd.f32 %v1633, %v1825
      %v1827 = vpop.f32.mrb[0].mxu0
      %v1828 = vadd.f32 %v1635, %v1827
      %1829 = vmatprep.mubr.bf16.mxu0 %v923
      %1830 = vmatmul.mubr.bf16.gmra.mrb[0].mxu0 %v922
      %v1831 = vpop.f32.mrb[0].mxu0
      %v1832 = vadd.f32 %v1639, %v1831
      %v1833 = vpop.f32.mrb[0].mxu0
      %v1834 = vadd.f32 %v1641, %v1833
      %v1835 = vpop.f32.mrb[0].mxu0
      %v1836 = vadd.f32 %v1643, %v1835
      %v1837 = vpop.f32.mrb[0].mxu0
      %v1838 = vadd.f32 %v1645, %v1837
      %1839 = vmatprep.mubr.bf16.mxu0 %v929
      %1840 = vmatmul.mubr.bf16.gmra.mrb[0].mxu0 %v928
      %v1841 = vpop.f32.mrb[0].mxu0
      %v1842 = vadd.f32 %v1649, %v1841
      %v1843 = vpop.f32.mrb[0].mxu0
      %v1844 = vadd.f32 %v1651, %v1843
      %v1845 = vpop.f32.mrb[0].mxu0
      %v1846 = vadd.f32 %v1653, %v1845
      %v1847 = vpop.f32.mrb[0].mxu0
      %v1848 = vadd.f32 %v1655, %v1847
      %1849 = vmatprep.mubr.bf16.mxu0 %v935
      %1850 = vmatmul.mubr.bf16.gmra.mrb[0].mxu0 %v934
      %v1851 = vpop.f32.mrb[0].mxu0
      %v1852 = vadd.f32 %v1659, %v1851
      %v1853 = vpop.f32.mrb[0].mxu0
      %v1854 = vadd.f32 %v1661, %v1853
      %v1855 = vpop.f32.mrb[0].mxu0
      %v1856 = vadd.f32 %v1663, %v1855
      %v1857 = vpop.f32.mrb[0].mxu0
      %v1858 = vadd.f32 %v1665, %v1857
      %1859 = vmatprep.mubr.bf16.mxu0 %v941
      %1860 = vmatmul.mubr.bf16.gmra.mrb[0].mxu0 %v940
      %v1861 = vpop.f32.mrb[0].mxu0
      %v1862 = vadd.f32 %v1669, %v1861
      %v1863 = vpop.f32.mrb[0].mxu0
      %v1864 = vadd.f32 %v1671, %v1863
      %v1865 = vpop.f32.mrb[0].mxu0
      %v1866 = vadd.f32 %v1673, %v1865
      %v1867 = vpop.f32.mrb[0].mxu0
      %v1868 = vadd.f32 %v1675, %v1867
      %1869 = vmatprep.mubr.bf16.mxu0 %v947
      %1870 = vmatmul.mubr.bf16.gmra.mrb[0].mxu0 %v946
      %v1871 = vpop.f32.mrb[0].mxu0
      %v1872 = vadd.f32 %v1679, %v1871
      %v1873 = vpop.f32.mrb[0].mxu0
      %v1874 = vadd.f32 %v1681, %v1873
      %v1875 = vpop.f32.mrb[0].mxu0
      %v1876 = vadd.f32 %v1683, %v1875
      %v1877 = vpop.f32.mrb[0].mxu0
      %v1878 = vadd.f32 %v1685, %v1877
      %1879 = vmatprep.mubr.bf16.mxu0 %v953
      %1880 = vmatmul.mubr.bf16.gmra.mrb[0].mxu0 %v952
      %v1881 = vpop.f32.mrb[0].mxu0
      %v1882 = vadd.f32 %v1689, %v1881
      %v1883 = vpop.f32.mrb[0].mxu0
      %v1884 = vadd.f32 %v1691, %v1883
      %v1885 = vpop.f32.mrb[0].mxu0
      %v1886 = vadd.f32 %v1693, %v1885
      %v1887 = vpop.f32.mrb[0].mxu0
      %v1888 = vadd.f32 %v1695, %v1887
      %1889 = vmatprep.mubr.bf16.mxu0 %v959
      %1890 = vmatmul.mubr.bf16.gmra.mrb[0].mxu0 %v958
      %v1891 = vpop.f32.mrb[0].mxu0
      %v1892 = vadd.f32 %v1699, %v1891
      %v1893 = vpop.f32.mrb[0].mxu0
      %v1894 = vadd.f32 %v1701, %v1893
      %v1895 = vpop.f32.mrb[0].mxu0
      %v1896 = vadd.f32 %v1703, %v1895
      %v1897 = vpop.f32.mrb[0].mxu0
      %v1898 = vadd.f32 %v1705, %v1897
      %1899 = vmatprep.mubr.bf16.mxu0 %v965
      %1900 = vmatmul.mubr.bf16.gmra.mrb[0].mxu0 %v964
      %v1901 = vpop.f32.mrb[0].mxu0
      %v1902 = vadd.f32 %v1709, %v1901
      %v1903 = vpop.f32.mrb[0].mxu0
      %v1904 = vadd.f32 %v1711, %v1903
      %v1905 = vpop.f32.mrb[0].mxu0
      %v1906 = vadd.f32 %v1713, %v1905
      %v1907 = vpop.f32.mrb[0].mxu0
      %v1908 = vadd.f32 %v1715, %v1907
      %1909 = vmatprep.mubr.bf16.mxu0 %v971
      %1910 = vmatmul.mubr.bf16.gmra.mrb[0].mxu0 %v970
      %v1911 = vpop.f32.mrb[0].mxu0
      %v1912 = vadd.f32 %v1719, %v1911
      %v1913 = vpop.f32.mrb[0].mxu0
      %v1914 = vadd.f32 %v1721, %v1913
      %v1915 = vpop.f32.mrb[0].mxu0
      %v1916 = vadd.f32 %v1723, %v1915
      %v1917 = vpop.f32.mrb[0].mxu0
      %v1918 = vadd.f32 %v1725, %v1917
      %1919 = vmatprep.mubr.bf16.mxu0 %v977
      %1920 = vmatmul.mubr.bf16.gmra.mrb[0].mxu0 %v976
      %v1921 = vpop.f32.mrb[0].mxu0
      %v1922 = vadd.f32 %v1729, %v1921
      %v1923 = vpop.f32.mrb[0].mxu0
      %v1924 = vadd.f32 %v1731, %v1923
      %v1925 = vpop.f32.mrb[0].mxu0
      %v1926 = vadd.f32 %v1733, %v1925
      %v1927 = vpop.f32.mrb[0].mxu0
      %v1928 = vadd.f32 %v1735, %v1927
      %1929 = vmatprep.mubr.bf16.mxu0 %v983
      %1930 = vmatmul.mubr.bf16.gmra.mrb[0].mxu0 %v982
      %v1931 = vpop.f32.mrb[0].mxu0
      %v1932 = vadd.f32 %v1739, %v1931
      %v1933 = vpop.f32.mrb[0].mxu0
      %v1934 = vadd.f32 %v1741, %v1933
      %v1935 = vpop.f32.mrb[0].mxu0
      %v1936 = vadd.f32 %v1743, %v1935
      %v1937 = vpop.f32.mrb[0].mxu0
      %v1938 = vadd.f32 %v1745, %v1937
      %1939 = vmatprep.mubr.bf16.mxu0 %v989
      %1940 = vmatmul.mubr.bf16.gmra.mrb[0].mxu0 %v988
      %v1941 = vpop.f32.mrb[0].mxu0
      %v1942 = vadd.f32 %v1749, %v1941
      %v1943 = vpop.f32.mrb[0].mxu0
      %v1944 = vadd.f32 %v1751, %v1943
      %v1945 = vpop.f32.mrb[0].mxu0
      %v1946 = vadd.f32 %v1753, %v1945
      %v1947 = vpop.f32.mrb[0].mxu0
      %v1948 = vadd.f32 %v1755, %v1947
      %1949 = vmatprep.mubr.bf16.mxu0 %v995
      %1950 = vmatmul.mubr.bf16.gmra.mrb[0].mxu0 %v994
      %v1951 = vpop.f32.mrb[0].mxu0
      %v1952 = vadd.f32 %v1759, %v1951
      %v1953 = vpop.f32.mrb[0].mxu0
      %v1954 = vadd.f32 %v1761, %v1953
      %v1955 = vpop.f32.mrb[0].mxu0
      %v1956 = vadd.f32 %v1763, %v1955
      %v1957 = vpop.f32.mrb[0].mxu0
      %v1958 = vadd.f32 %v1765, %v1957
      %1959 = vdwg.mxu0
      %1960 = vmatprep.subr.bf16.mxu0 %v1447
      %1961 = vmatpush1.bf16.msra.mxu0 %v1446
      %1962 = vmatprep.subr.bf16.mxu0 %v1449
      %1963 = vmatpush1.bf16.msra.mxu0 %v1448
      %1964 = vmatprep.subr.bf16.mxu0 %v1451
      %1965 = vmatpush1.bf16.msra.mxu0 %v1450
      %1966 = vmatprep.subr.bf16.mxu0 %v1453
      %1967 = vmatpush1.bf16.msra.mxu0 %v1452
      %1968 = vmatprep.subr.bf16.mxu0 %v1455
      %1969 = vmatpush1.bf16.msra.mxu0 %v1454
      %1970 = vmatprep.subr.bf16.mxu0 %v1457
      %1971 = vmatpush1.bf16.msra.mxu0 %v1456
      %1972 = vmatprep.subr.bf16.mxu0 %v1459
      %1973 = vmatpush1.bf16.msra.mxu0 %v1458
      %1974 = vmatprep.subr.bf16.mxu0 %v1461
      %1975 = vmatpush1.bf16.msra.mxu0 %v1460
      %1976 = vmatprep.subr.bf16.mxu0 %v1463
      %1977 = vmatpush1.bf16.msra.mxu0 %v1462
      %1978 = vmatprep.subr.bf16.mxu0 %v1465
      %1979 = vmatpush1.bf16.msra.mxu0 %v1464
      %1980 = vmatprep.subr.bf16.mxu0 %v1467
      %1981 = vmatpush1.bf16.msra.mxu0 %v1466
      %1982 = vmatprep.subr.bf16.mxu0 %v1469
      %1983 = vmatpush1.bf16.msra.mxu0 %v1468
      %1984 = vmatprep.subr.bf16.mxu0 %v1471
      %1985 = vmatpush1.bf16.msra.mxu0 %v1470
      %1986 = vmatprep.subr.bf16.mxu0 %v1473
      %1987 = vmatpush1.bf16.msra.mxu0 %v1472
      %1988 = vmatprep.subr.bf16.mxu0 %v1475
      %1989 = vmatpush1.bf16.msra.mxu0 %v1474
      %1990 = vmatprep.subr.bf16.mxu0 %v1477
      %1991 = vmatpush1.bf16.msra.mxu0 %v1476
      %1992 = vmatprep.mubr.bf16.mxu0 %v907
      %1993 = vmatmul.mubr.bf16.gmra.mrb[0].mxu0 %v906
      %v1994 = vpop.f32.mrb[0].mxu0
      %v1995 = vadd.f32 %v1802, %v1994
      %v1996 = vpop.f32.mrb[0].mxu0
      %v1997 = vadd.f32 %v1804, %v1996
      %v1998 = vpop.f32.mrb[0].mxu0
      %v1999 = vadd.f32 %v1806, %v1998
      %v2000 = vpop.f32.mrb[0].mxu0
      %v2001 = vadd.f32 %v1808, %v2000
      %2002 = vmatprep.mubr.bf16.mxu0 %v913
      %2003 = vmatmul.mubr.bf16.gmra.mrb[0].mxu0 %v912
      %v2004 = vpop.f32.mrb[0].mxu0
      %v2005 = vadd.f32 %v1812, %v2004
      %v2006 = vpop.f32.mrb[0].mxu0
      %v2007 = vadd.f32 %v1814, %v2006
      %v2008 = vpop.f32.mrb[0].mxu0
      %v2009 = vadd.f32 %v1816, %v2008
      %v2010 = vpop.f32.mrb[0].mxu0
      %v2011 = vadd.f32 %v1818, %v2010
      %2012 = vmatprep.mubr.bf16.mxu0 %v919
      %2013 = vmatmul.mubr.bf16.gmra.mrb[0].mxu0 %v918
      %v2014 = vpop.f32.mrb[0].mxu0
      %v2015 = vadd.f32 %v1822, %v2014
      %v2016 = vpop.f32.mrb[0].mxu0
      %v2017 = vadd.f32 %v1824, %v2016
      %v2018 = vpop.f32.mrb[0].mxu0
      %v2019 = vadd.f32 %v1826, %v2018
      %v2020 = vpop.f32.mrb[0].mxu0
      %v2021 = vadd.f32 %v1828, %v2020
      %2022 = vmatprep.mubr.bf16.mxu0 %v925
      %2023 = vmatmul.mubr.bf16.gmra.mrb[0].mxu0 %v924
      %v2024 = vpop.f32.mrb[0].mxu0
      %v2025 = vadd.f32 %v1832, %v2024
      %v2026 = vpop.f32.mrb[0].mxu0
      %v2027 = vadd.f32 %v1834, %v2026
      %v2028 = vpop.f32.mrb[0].mxu0
      %v2029 = vadd.f32 %v1836, %v2028
      %v2030 = vpop.f32.mrb[0].mxu0
      %v2031 = vadd.f32 %v1838, %v2030
      %2032 = vmatprep.mubr.bf16.mxu0 %v931
      %2033 = vmatmul.mubr.bf16.gmra.mrb[0].mxu0 %v930
      %v2034 = vpop.f32.mrb[0].mxu0
      %v2035 = vadd.f32 %v1842, %v2034
      %v2036 = vpop.f32.mrb[0].mxu0
      %v2037 = vadd.f32 %v1844, %v2036
      %v2038 = vpop.f32.mrb[0].mxu0
      %v2039 = vadd.f32 %v1846, %v2038
      %v2040 = vpop.f32.mrb[0].mxu0
      %v2041 = vadd.f32 %v1848, %v2040
      %2042 = vmatprep.mubr.bf16.mxu0 %v937
      %2043 = vmatmul.mubr.bf16.gmra.mrb[0].mxu0 %v936
      %v2044 = vpop.f32.mrb[0].mxu0
      %v2045 = vadd.f32 %v1852, %v2044
      %v2046 = vpop.f32.mrb[0].mxu0
      %v2047 = vadd.f32 %v1854, %v2046
      %v2048 = vpop.f32.mrb[0].mxu0
      %v2049 = vadd.f32 %v1856, %v2048
      %v2050 = vpop.f32.mrb[0].mxu0
      %v2051 = vadd.f32 %v1858, %v2050
      %2052 = vmatprep.mubr.bf16.mxu0 %v943
      %2053 = vmatmul.mubr.bf16.gmra.mrb[0].mxu0 %v942
      %v2054 = vpop.f32.mrb[0].mxu0
      %v2055 = vadd.f32 %v1862, %v2054
      %v2056 = vpop.f32.mrb[0].mxu0
      %v2057 = vadd.f32 %v1864, %v2056
      %v2058 = vpop.f32.mrb[0].mxu0
      %v2059 = vadd.f32 %v1866, %v2058
      %v2060 = vpop.f32.mrb[0].mxu0
      %v2061 = vadd.f32 %v1868, %v2060
      %2062 = vmatprep.mubr.bf16.mxu0 %v949
      %2063 = vmatmul.mubr.bf16.gmra.mrb[0].mxu0 %v948
      %v2064 = vpop.f32.mrb[0].mxu0
      %v2065 = vadd.f32 %v1872, %v2064
      %v2066 = vpop.f32.mrb[0].mxu0
      %v2067 = vadd.f32 %v1874, %v2066
      %v2068 = vpop.f32.mrb[0].mxu0
      %v2069 = vadd.f32 %v1876, %v2068
      %v2070 = vpop.f32.mrb[0].mxu0
      %v2071 = vadd.f32 %v1878, %v2070
      %2072 = vmatprep.mubr.bf16.mxu0 %v955
      %2073 = vmatmul.mubr.bf16.gmra.mrb[0].mxu0 %v954
      %v2074 = vpop.f32.mrb[0].mxu0
      %v2075 = vadd.f32 %v1882, %v2074
      %v2076 = vpop.f32.mrb[0].mxu0
      %v2077 = vadd.f32 %v1884, %v2076
      %v2078 = vpop.f32.mrb[0].mxu0
      %v2079 = vadd.f32 %v1886, %v2078
      %v2080 = vpop.f32.mrb[0].mxu0
      %v2081 = vadd.f32 %v1888, %v2080
      %2082 = vmatprep.mubr.bf16.mxu0 %v961
      %2083 = vmatmul.mubr.bf16.gmra.mrb[0].mxu0 %v960
      %v2084 = vpop.f32.mrb[0].mxu0
      %v2085 = vadd.f32 %v1892, %v2084
      %v2086 = vpop.f32.mrb[0].mxu0
      %v2087 = vadd.f32 %v1894, %v2086
      %v2088 = vpop.f32.mrb[0].mxu0
      %v2089 = vadd.f32 %v1896, %v2088
      %v2090 = vpop.f32.mrb[0].mxu0
      %v2091 = vadd.f32 %v1898, %v2090
      %2092 = vmatprep.mubr.bf16.mxu0 %v967
      %2093 = vmatmul.mubr.bf16.gmra.mrb[0].mxu0 %v966
      %v2094 = vpop.f32.mrb[0].mxu0
      %v2095 = vadd.f32 %v1902, %v2094
      %v2096 = vpop.f32.mrb[0].mxu0
      %v2097 = vadd.f32 %v1904, %v2096
      %v2098 = vpop.f32.mrb[0].mxu0
      %v2099 = vadd.f32 %v1906, %v2098
      %v2100 = vpop.f32.mrb[0].mxu0
      %v2101 = vadd.f32 %v1908, %v2100
      %2102 = vmatprep.mubr.bf16.mxu0 %v973
      %2103 = vmatmul.mubr.bf16.gmra.mrb[0].mxu0 %v972
      %v2104 = vpop.f32.mrb[0].mxu0
      %v2105 = vadd.f32 %v1912, %v2104
      %v2106 = vpop.f32.mrb[0].mxu0
      %v2107 = vadd.f32 %v1914, %v2106
      %v2108 = vpop.f32.mrb[0].mxu0
      %v2109 = vadd.f32 %v1916, %v2108
      %v2110 = vpop.f32.mrb[0].mxu0
      %v2111 = vadd.f32 %v1918, %v2110
      %2112 = vmatprep.mubr.bf16.mxu0 %v979
      %2113 = vmatmul.mubr.bf16.gmra.mrb[0].mxu0 %v978
      %v2114 = vpop.f32.mrb[0].mxu0
      %v2115 = vadd.f32 %v1922, %v2114
      %v2116 = vpop.f32.mrb[0].mxu0
      %v2117 = vadd.f32 %v1924, %v2116
      %v2118 = vpop.f32.mrb[0].mxu0
      %v2119 = vadd.f32 %v1926, %v2118
      %v2120 = vpop.f32.mrb[0].mxu0
      %v2121 = vadd.f32 %v1928, %v2120
      %2122 = vmatprep.mubr.bf16.mxu0 %v985
      %2123 = vmatmul.mubr.bf16.gmra.mrb[0].mxu0 %v984
      %v2124 = vpop.f32.mrb[0].mxu0
      %v2125 = vadd.f32 %v1932, %v2124
      %v2126 = vpop.f32.mrb[0].mxu0
      %v2127 = vadd.f32 %v1934, %v2126
      %v2128 = vpop.f32.mrb[0].mxu0
      %v2129 = vadd.f32 %v1936, %v2128
      %v2130 = vpop.f32.mrb[0].mxu0
      %v2131 = vadd.f32 %v1938, %v2130
      %2132 = vmatprep.mubr.bf16.mxu0 %v991
      %2133 = vmatmul.mubr.bf16.gmra.mrb[0].mxu0 %v990
      %v2134 = vpop.f32.mrb[0].mxu0
      %v2135 = vadd.f32 %v1942, %v2134
      %v2136 = vpop.f32.mrb[0].mxu0
      %v2137 = vadd.f32 %v1944, %v2136
      %v2138 = vpop.f32.mrb[0].mxu0
      %v2139 = vadd.f32 %v1946, %v2138
      %v2140 = vpop.f32.mrb[0].mxu0
      %v2141 = vadd.f32 %v1948, %v2140
      %2142 = vmatprep.mubr.bf16.mxu0 %v997
      %2143 = vmatmul.mubr.bf16.gmra.mrb[0].mxu0 %v996
      %v2144 = vpop.f32.mrb[0].mxu0
      %v2145 = vadd.f32 %v1952, %v2144
      %v2146 = vpop.f32.mrb[0].mxu0
      %v2147 = vadd.f32 %v1954, %v2146
      %v2148 = vpop.f32.mrb[0].mxu0
      %v2149 = vadd.f32 %v1956, %v2148
      %v2150 = vpop.f32.mrb[0].mxu0
      %v2151 = vadd.f32 %v1958, %v2150
      %2152 = vdwg.mxu0
      %v2249 = vunpack.c.l.b16 %v224
      %v2250 = vunpack.c.h.b16 %v224
      %v2251 = vunpack.c.l.b16 %v225
      %v2252 = vunpack.c.h.b16 %v225
      %v2253 = vunpack.c.l.b16 %v226
      %v2254 = vunpack.c.h.b16 %v226
      %v2255 = vunpack.c.l.b16 %v227
      %v2256 = vunpack.c.h.b16 %v227
      %v2257 = vunpack.c.l.b16 %v228
      %v2258 = vunpack.c.h.b16 %v228
      %v2259 = vunpack.c.l.b16 %v229
      %v2260 = vunpack.c.h.b16 %v229
      %v2261 = vunpack.c.l.b16 %v230
      %v2262 = vunpack.c.h.b16 %v230
      %v2263 = vunpack.c.l.b16 %v231
      %v2264 = vunpack.c.h.b16 %v231
      %v2265 = vunpack.c.l.b16 %v232
      %v2266 = vunpack.c.h.b16 %v232
      %v2267 = vunpack.c.l.b16 %v233
      %v2268 = vunpack.c.h.b16 %v233
      %v2269 = vunpack.c.l.b16 %v234
      %v2270 = vunpack.c.h.b16 %v234
      %v2271 = vunpack.c.l.b16 %v235
      %v2272 = vunpack.c.h.b16 %v235
      %v2273 = vunpack.c.l.b16 %v236
      %v2274 = vunpack.c.h.b16 %v236
      %v2275 = vunpack.c.l.b16 %v237
      %v2276 = vunpack.c.h.b16 %v237
      %v2277 = vunpack.c.l.b16 %v238
      %v2278 = vunpack.c.h.b16 %v238
      %v2279 = vunpack.c.l.b16 %v239
      %v2280 = vunpack.c.h.b16 %v239
      %v2281 = vunpack.c.l.b16 %v240
      %v2282 = vunpack.c.h.b16 %v240
      %v2283 = vunpack.c.l.b16 %v241
      %v2284 = vunpack.c.h.b16 %v241
      %v2285 = vunpack.c.l.b16 %v242
      %v2286 = vunpack.c.h.b16 %v242
      %v2287 = vunpack.c.l.b16 %v243
      %v2288 = vunpack.c.h.b16 %v243
      %v2289 = vunpack.c.l.b16 %v244
      %v2290 = vunpack.c.h.b16 %v244
      %v2291 = vunpack.c.l.b16 %v245
      %v2292 = vunpack.c.h.b16 %v245
      %v2293 = vunpack.c.l.b16 %v246
      %v2294 = vunpack.c.h.b16 %v246
      %v2295 = vunpack.c.l.b16 %v247
      %v2296 = vunpack.c.h.b16 %v247
      %v2297 = vunpack.c.l.b16 %v248
      %v2298 = vunpack.c.h.b16 %v248
      %v2299 = vunpack.c.l.b16 %v249
      %v2300 = vunpack.c.h.b16 %v249
      %v2301 = vunpack.c.l.b16 %v250
      %v2302 = vunpack.c.h.b16 %v250
      %v2303 = vunpack.c.l.b16 %v251
      %v2304 = vunpack.c.h.b16 %v251
      %v2305 = vunpack.c.l.b16 %v252
      %v2306 = vunpack.c.h.b16 %v252
      %v2307 = vunpack.c.l.b16 %v253
      %v2308 = vunpack.c.h.b16 %v253
      %v2309 = vunpack.c.l.b16 %v254
      %v2310 = vunpack.c.h.b16 %v254
      %v2311 = vunpack.c.l.b16 %v255
      %v2312 = vunpack.c.h.b16 %v255
      %v2313 = vunpack.c.l.b16 %v256
      %v2314 = vunpack.c.h.b16 %v256
      %v2315 = vunpack.c.l.b16 %v257
      %v2316 = vunpack.c.h.b16 %v257
      %v2317 = vunpack.c.l.b16 %v258
      %v2318 = vunpack.c.h.b16 %v258
      %v2319 = vunpack.c.l.b16 %v259
      %v2320 = vunpack.c.h.b16 %v259
      %v2321 = vunpack.c.l.b16 %v260
      %v2322 = vunpack.c.h.b16 %v260
      %v2323 = vunpack.c.l.b16 %v261
      %v2324 = vunpack.c.h.b16 %v261
      %v2325 = vunpack.c.l.b16 %v262
      %v2326 = vunpack.c.h.b16 %v262
      %v2327 = vunpack.c.l.b16 %v263
      %v2328 = vunpack.c.h.b16 %v263
      %v2329 = vunpack.c.l.b16 %v264
      %v2330 = vunpack.c.h.b16 %v264
      %v2331 = vunpack.c.l.b16 %v265
      %v2332 = vunpack.c.h.b16 %v265
      %v2333 = vunpack.c.l.b16 %v266
      %v2334 = vunpack.c.h.b16 %v266
      %v2335 = vunpack.c.l.b16 %v267
      %v2336 = vunpack.c.h.b16 %v267
      %v2337 = vunpack.c.l.b16 %v268
      %v2338 = vunpack.c.h.b16 %v268
      %v2339 = vunpack.c.l.b16 %v269
      %v2340 = vunpack.c.h.b16 %v269
      %v2341 = vunpack.c.l.b16 %v270
      %v2342 = vunpack.c.h.b16 %v270
      %v2343 = vunpack.c.l.b16 %v271
      %v2344 = vunpack.c.h.b16 %v271
      %v2345 = vunpack.c.l.b16 %v272
      %v2346 = vunpack.c.h.b16 %v272
      %v2347 = vunpack.c.l.b16 %v273
      %v2348 = vunpack.c.h.b16 %v273
      %v2349 = vunpack.c.l.b16 %v274
      %v2350 = vunpack.c.h.b16 %v274
      %v2351 = vunpack.c.l.b16 %v275
      %v2352 = vunpack.c.h.b16 %v275
      %v2353 = vunpack.c.l.b16 %v276
      %v2354 = vunpack.c.h.b16 %v276
      %v2355 = vunpack.c.l.b16 %v277
      %v2356 = vunpack.c.h.b16 %v277
      %v2357 = vunpack.c.l.b16 %v278
      %v2358 = vunpack.c.h.b16 %v278
      %v2359 = vunpack.c.l.b16 %v279
      %v2360 = vunpack.c.h.b16 %v279
      %v2361 = vunpack.c.l.b16 %v280
      %v2362 = vunpack.c.h.b16 %v280
      %v2363 = vunpack.c.l.b16 %v281
      %v2364 = vunpack.c.h.b16 %v281
      %v2365 = vunpack.c.l.b16 %v282
      %v2366 = vunpack.c.h.b16 %v282
      %v2367 = vunpack.c.l.b16 %v283
      %v2368 = vunpack.c.h.b16 %v283
      %v2369 = vunpack.c.l.b16 %v284
      %v2370 = vunpack.c.h.b16 %v284
      %v2371 = vunpack.c.l.b16 %v285
      %v2372 = vunpack.c.h.b16 %v285
      %v2373 = vunpack.c.l.b16 %v286
      %v2374 = vunpack.c.h.b16 %v286
      %v2375 = vunpack.c.l.b16 %v287
      %v2376 = vunpack.c.h.b16 %v287
      %v2377 = vunpack.c.l.b16 %v288
      %v2378 = vunpack.c.h.b16 %v288
      %v2379 = vunpack.c.l.b16 %v289
      %v2380 = vunpack.c.h.b16 %v289
      %v2381 = vunpack.c.l.b16 %v290
      %v2382 = vunpack.c.h.b16 %v290
      %v2383 = vunpack.c.l.b16 %v291
      %v2384 = vunpack.c.h.b16 %v291
      %v2385 = vunpack.c.l.b16 %v292
      %v2386 = vunpack.c.h.b16 %v292
      %v2387 = vunpack.c.l.b16 %v293
      %v2388 = vunpack.c.h.b16 %v293
      %v2389 = vunpack.c.l.b16 %v294
      %v2390 = vunpack.c.h.b16 %v294
      %v2391 = vunpack.c.l.b16 %v295
      %v2392 = vunpack.c.h.b16 %v295
      %v2393 = vunpack.c.l.b16 %v296
      %v2394 = vunpack.c.h.b16 %v296
      %v2395 = vunpack.c.l.b16 %v297
      %v2396 = vunpack.c.h.b16 %v297
      %v2397 = vunpack.c.l.b16 %v298
      %v2398 = vunpack.c.h.b16 %v298
      %v2399 = vunpack.c.l.b16 %v299
      %v2400 = vunpack.c.h.b16 %v299
      %v2401 = vunpack.c.l.b16 %v300
      %v2402 = vunpack.c.h.b16 %v300
      %v2403 = vunpack.c.l.b16 %v301
      %v2404 = vunpack.c.h.b16 %v301
      %v2405 = vunpack.c.l.b16 %v302
      %v2406 = vunpack.c.h.b16 %v302
      %v2407 = vunpack.c.l.b16 %v303
      %v2408 = vunpack.c.h.b16 %v303
      %v2409 = vunpack.c.l.b16 %v304
      %v2410 = vunpack.c.h.b16 %v304
      %v2411 = vunpack.c.l.b16 %v305
      %v2412 = vunpack.c.h.b16 %v305
      %v2413 = vunpack.c.l.b16 %v306
      %v2414 = vunpack.c.h.b16 %v306
      %v2415 = vunpack.c.l.b16 %v307
      %v2416 = vunpack.c.h.b16 %v307
      %v2417 = vunpack.c.l.b16 %v308
      %v2418 = vunpack.c.h.b16 %v308
      %v2419 = vunpack.c.l.b16 %v309
      %v2420 = vunpack.c.h.b16 %v309
      %v2421 = vunpack.c.l.b16 %v310
      %v2422 = vunpack.c.h.b16 %v310
      %v2423 = vunpack.c.l.b16 %v311
      %v2424 = vunpack.c.h.b16 %v311
      %v2425 = vunpack.c.l.b16 %v312
      %v2426 = vunpack.c.h.b16 %v312
      %v2427 = vunpack.c.l.b16 %v313
      %v2428 = vunpack.c.h.b16 %v313
      %v2429 = vunpack.c.l.b16 %v314
      %v2430 = vunpack.c.h.b16 %v314
      %v2431 = vunpack.c.l.b16 %v315
      %v2432 = vunpack.c.h.b16 %v315
      %v2433 = vunpack.c.l.b16 %v316
      %v2434 = vunpack.c.h.b16 %v316
      %v2435 = vunpack.c.l.b16 %v317
      %v2436 = vunpack.c.h.b16 %v317
      %v2437 = vunpack.c.l.b16 %v318
      %v2438 = vunpack.c.h.b16 %v318
      %v2439 = vunpack.c.l.b16 %v319
      %v2440 = vunpack.c.h.b16 %v319
      %v2441 = vpack.c.b16 %v2255, %v2249
      %v2442 = vpack.c.b16 %v2256, %v2250
      %v2443 = vpack.c.b16 %v2257, %v2251
      %v2444 = vpack.c.b16 %v2258, %v2252
      %v2445 = vpack.c.b16 %v2259, %v2253
      %v2446 = vpack.c.b16 %v2260, %v2254
      %v2447 = vpack.c.b16 %v2267, %v2261
      %v2448 = vpack.c.b16 %v2268, %v2262
      %v2449 = vpack.c.b16 %v2269, %v2263
      %v2450 = vpack.c.b16 %v2270, %v2264
      %v2451 = vpack.c.b16 %v2271, %v2265
      %v2452 = vpack.c.b16 %v2272, %v2266
      %v2453 = vpack.c.b16 %v2279, %v2273
      %v2454 = vpack.c.b16 %v2280, %v2274
      %v2455 = vpack.c.b16 %v2281, %v2275
      %v2456 = vpack.c.b16 %v2282, %v2276
      %v2457 = vpack.c.b16 %v2283, %v2277
      %v2458 = vpack.c.b16 %v2284, %v2278
      %v2459 = vpack.c.b16 %v2291, %v2285
      %v2460 = vpack.c.b16 %v2292, %v2286
      %v2461 = vpack.c.b16 %v2293, %v2287
      %v2462 = vpack.c.b16 %v2294, %v2288
      %v2463 = vpack.c.b16 %v2295, %v2289
      %v2464 = vpack.c.b16 %v2296, %v2290
      %v2465 = vpack.c.b16 %v2303, %v2297
      %v2466 = vpack.c.b16 %v2304, %v2298
      %v2467 = vpack.c.b16 %v2305, %v2299
      %v2468 = vpack.c.b16 %v2306, %v2300
      %v2469 = vpack.c.b16 %v2307, %v2301
      %v2470 = vpack.c.b16 %v2308, %v2302
      %v2471 = vpack.c.b16 %v2315, %v2309
      %v2472 = vpack.c.b16 %v2316, %v2310
      %v2473 = vpack.c.b16 %v2317, %v2311
      %v2474 = vpack.c.b16 %v2318, %v2312
      %v2475 = vpack.c.b16 %v2319, %v2313
      %v2476 = vpack.c.b16 %v2320, %v2314
      %v2477 = vpack.c.b16 %v2327, %v2321
      %v2478 = vpack.c.b16 %v2328, %v2322
      %v2479 = vpack.c.b16 %v2329, %v2323
      %v2480 = vpack.c.b16 %v2330, %v2324
      %v2481 = vpack.c.b16 %v2331, %v2325
      %v2482 = vpack.c.b16 %v2332, %v2326
      %v2483 = vpack.c.b16 %v2339, %v2333
      %v2484 = vpack.c.b16 %v2340, %v2334
      %v2485 = vpack.c.b16 %v2341, %v2335
      %v2486 = vpack.c.b16 %v2342, %v2336
      %v2487 = vpack.c.b16 %v2343, %v2337
      %v2488 = vpack.c.b16 %v2344, %v2338
      %v2489 = vpack.c.b16 %v2351, %v2345
      %v2490 = vpack.c.b16 %v2352, %v2346
      %v2491 = vpack.c.b16 %v2353, %v2347
      %v2492 = vpack.c.b16 %v2354, %v2348
      %v2493 = vpack.c.b16 %v2355, %v2349
      %v2494 = vpack.c.b16 %v2356, %v2350
      %v2495 = vpack.c.b16 %v2363, %v2357
      %v2496 = vpack.c.b16 %v2364, %v2358
      %v2497 = vpack.c.b16 %v2365, %v2359
      %v2498 = vpack.c.b16 %v2366, %v2360
      %v2499 = vpack.c.b16 %v2367, %v2361
      %v2500 = vpack.c.b16 %v2368, %v2362
      %v2501 = vpack.c.b16 %v2375, %v2369
      %v2502 = vpack.c.b16 %v2376, %v2370
      %v2503 = vpack.c.b16 %v2377, %v2371
      %v2504 = vpack.c.b16 %v2378, %v2372
      %v2505 = vpack.c.b16 %v2379, %v2373
      %v2506 = vpack.c.b16 %v2380, %v2374
      %v2507 = vpack.c.b16 %v2387, %v2381
      %v2508 = vpack.c.b16 %v2388, %v2382
      %v2509 = vpack.c.b16 %v2389, %v2383
      %v2510 = vpack.c.b16 %v2390, %v2384
      %v2511 = vpack.c.b16 %v2391, %v2385
      %v2512 = vpack.c.b16 %v2392, %v2386
      %v2513 = vpack.c.b16 %v2399, %v2393
      %v2514 = vpack.c.b16 %v2400, %v2394
      %v2515 = vpack.c.b16 %v2401, %v2395
      %v2516 = vpack.c.b16 %v2402, %v2396
      %v2517 = vpack.c.b16 %v2403, %v2397
      %v2518 = vpack.c.b16 %v2404, %v2398
      %v2519 = vpack.c.b16 %v2411, %v2405
      %v2520 = vpack.c.b16 %v2412, %v2406
      %v2521 = vpack.c.b16 %v2413, %v2407
      %v2522 = vpack.c.b16 %v2414, %v2408
      %v2523 = vpack.c.b16 %v2415, %v2409
      %v2524 = vpack.c.b16 %v2416, %v2410
      %v2525 = vpack.c.b16 %v2423, %v2417
      %v2526 = vpack.c.b16 %v2424, %v2418
      %v2527 = vpack.c.b16 %v2425, %v2419
      %v2528 = vpack.c.b16 %v2426, %v2420
      %v2529 = vpack.c.b16 %v2427, %v2421
      %v2530 = vpack.c.b16 %v2428, %v2422
      %v2531 = vpack.c.b16 %v2435, %v2429
      %v2532 = vpack.c.b16 %v2436, %v2430
      %v2533 = vpack.c.b16 %v2437, %v2431
      %v2534 = vpack.c.b16 %v2438, %v2432
      %v2535 = vpack.c.b16 %v2439, %v2433
      %v2536 = vpack.c.b16 %v2440, %v2434
      %v2729 = vunpack.c.l.b16 %v320
      %v2730 = vunpack.c.h.b16 %v320
      %v2731 = vunpack.c.l.b16 %v321
      %v2732 = vunpack.c.h.b16 %v321
      %v2733 = vunpack.c.l.b16 %v322
      %v2734 = vunpack.c.h.b16 %v322
      %v2735 = vunpack.c.l.b16 %v323
      %v2736 = vunpack.c.h.b16 %v323
      %v2737 = vunpack.c.l.b16 %v324
      %v2738 = vunpack.c.h.b16 %v324
      %v2739 = vunpack.c.l.b16 %v325
      %v2740 = vunpack.c.h.b16 %v325
      %v2741 = vunpack.c.l.b16 %v326
      %v2742 = vunpack.c.h.b16 %v326
      %v2743 = vunpack.c.l.b16 %v327
      %v2744 = vunpack.c.h.b16 %v327
      %v2745 = vunpack.c.l.b16 %v328
      %v2746 = vunpack.c.h.b16 %v328
      %v2747 = vunpack.c.l.b16 %v329
      %v2748 = vunpack.c.h.b16 %v329
      %v2749 = vunpack.c.l.b16 %v330
      %v2750 = vunpack.c.h.b16 %v330
      %v2751 = vunpack.c.l.b16 %v331
      %v2752 = vunpack.c.h.b16 %v331
      %v2753 = vunpack.c.l.b16 %v332
      %v2754 = vunpack.c.h.b16 %v332
      %v2755 = vunpack.c.l.b16 %v333
      %v2756 = vunpack.c.h.b16 %v333
      %v2757 = vunpack.c.l.b16 %v334
      %v2758 = vunpack.c.h.b16 %v334
      %v2759 = vunpack.c.l.b16 %v335
      %v2760 = vunpack.c.h.b16 %v335
      %v2761 = vunpack.c.l.b16 %v336
      %v2762 = vunpack.c.h.b16 %v336
      %v2763 = vunpack.c.l.b16 %v337
      %v2764 = vunpack.c.h.b16 %v337
      %v2765 = vunpack.c.l.b16 %v338
      %v2766 = vunpack.c.h.b16 %v338
      %v2767 = vunpack.c.l.b16 %v339
      %v2768 = vunpack.c.h.b16 %v339
      %v2769 = vunpack.c.l.b16 %v340
      %v2770 = vunpack.c.h.b16 %v340
      %v2771 = vunpack.c.l.b16 %v341
      %v2772 = vunpack.c.h.b16 %v341
      %v2773 = vunpack.c.l.b16 %v342
      %v2774 = vunpack.c.h.b16 %v342
      %v2775 = vunpack.c.l.b16 %v343
      %v2776 = vunpack.c.h.b16 %v343
      %v2777 = vunpack.c.l.b16 %v344
      %v2778 = vunpack.c.h.b16 %v344
      %v2779 = vunpack.c.l.b16 %v345
      %v2780 = vunpack.c.h.b16 %v345
      %v2781 = vunpack.c.l.b16 %v346
      %v2782 = vunpack.c.h.b16 %v346
      %v2783 = vunpack.c.l.b16 %v347
      %v2784 = vunpack.c.h.b16 %v347
      %v2785 = vunpack.c.l.b16 %v348
      %v2786 = vunpack.c.h.b16 %v348
      %v2787 = vunpack.c.l.b16 %v349
      %v2788 = vunpack.c.h.b16 %v349
      %v2789 = vunpack.c.l.b16 %v350
      %v2790 = vunpack.c.h.b16 %v350
      %v2791 = vunpack.c.l.b16 %v351
      %v2792 = vunpack.c.h.b16 %v351
      %v2793 = vunpack.c.l.b16 %v352
      %v2794 = vunpack.c.h.b16 %v352
      %v2795 = vunpack.c.l.b16 %v353
      %v2796 = vunpack.c.h.b16 %v353
      %v2797 = vunpack.c.l.b16 %v354
      %v2798 = vunpack.c.h.b16 %v354
      %v2799 = vunpack.c.l.b16 %v355
      %v2800 = vunpack.c.h.b16 %v355
      %v2801 = vunpack.c.l.b16 %v356
      %v2802 = vunpack.c.h.b16 %v356
      %v2803 = vunpack.c.l.b16 %v357
      %v2804 = vunpack.c.h.b16 %v357
      %v2805 = vunpack.c.l.b16 %v358
      %v2806 = vunpack.c.h.b16 %v358
      %v2807 = vunpack.c.l.b16 %v359
      %v2808 = vunpack.c.h.b16 %v359
      %v2809 = vunpack.c.l.b16 %v360
      %v2810 = vunpack.c.h.b16 %v360
      %v2811 = vunpack.c.l.b16 %v361
      %v2812 = vunpack.c.h.b16 %v361
      %v2813 = vunpack.c.l.b16 %v362
      %v2814 = vunpack.c.h.b16 %v362
      %v2815 = vunpack.c.l.b16 %v363
      %v2816 = vunpack.c.h.b16 %v363
      %v2817 = vunpack.c.l.b16 %v364
      %v2818 = vunpack.c.h.b16 %v364
      %v2819 = vunpack.c.l.b16 %v365
      %v2820 = vunpack.c.h.b16 %v365
      %v2821 = vunpack.c.l.b16 %v366
      %v2822 = vunpack.c.h.b16 %v366
      %v2823 = vunpack.c.l.b16 %v367
      %v2824 = vunpack.c.h.b16 %v367
      %v2825 = vunpack.c.l.b16 %v368
      %v2826 = vunpack.c.h.b16 %v368
      %v2827 = vunpack.c.l.b16 %v369
      %v2828 = vunpack.c.h.b16 %v369
      %v2829 = vunpack.c.l.b16 %v370
      %v2830 = vunpack.c.h.b16 %v370
      %v2831 = vunpack.c.l.b16 %v371
      %v2832 = vunpack.c.h.b16 %v371
      %v2833 = vunpack.c.l.b16 %v372
      %v2834 = vunpack.c.h.b16 %v372
      %v2835 = vunpack.c.l.b16 %v373
      %v2836 = vunpack.c.h.b16 %v373
      %v2837 = vunpack.c.l.b16 %v374
      %v2838 = vunpack.c.h.b16 %v374
      %v2839 = vunpack.c.l.b16 %v375
      %v2840 = vunpack.c.h.b16 %v375
      %v2841 = vunpack.c.l.b16 %v376
      %v2842 = vunpack.c.h.b16 %v376
      %v2843 = vunpack.c.l.b16 %v377
      %v2844 = vunpack.c.h.b16 %v377
      %v2845 = vunpack.c.l.b16 %v378
      %v2846 = vunpack.c.h.b16 %v378
      %v2847 = vunpack.c.l.b16 %v379
      %v2848 = vunpack.c.h.b16 %v379
      %v2849 = vunpack.c.l.b16 %v380
      %v2850 = vunpack.c.h.b16 %v380
      %v2851 = vunpack.c.l.b16 %v381
      %v2852 = vunpack.c.h.b16 %v381
      %v2853 = vunpack.c.l.b16 %v382
      %v2854 = vunpack.c.h.b16 %v382
      %v2855 = vunpack.c.l.b16 %v383
      %v2856 = vunpack.c.h.b16 %v383
      %v2857 = vunpack.c.l.b16 %v384
      %v2858 = vunpack.c.h.b16 %v384
      %v2859 = vunpack.c.l.b16 %v385
      %v2860 = vunpack.c.h.b16 %v385
      %v2861 = vunpack.c.l.b16 %v386
      %v2862 = vunpack.c.h.b16 %v386
      %v2863 = vunpack.c.l.b16 %v387
      %v2864 = vunpack.c.h.b16 %v387
      %v2865 = vunpack.c.l.b16 %v388
      %v2866 = vunpack.c.h.b16 %v388
      %v2867 = vunpack.c.l.b16 %v389
      %v2868 = vunpack.c.h.b16 %v389
      %v2869 = vunpack.c.l.b16 %v390
      %v2870 = vunpack.c.h.b16 %v390
      %v2871 = vunpack.c.l.b16 %v391
      %v2872 = vunpack.c.h.b16 %v391
      %v2873 = vunpack.c.l.b16 %v392
      %v2874 = vunpack.c.h.b16 %v392
      %v2875 = vunpack.c.l.b16 %v393
      %v2876 = vunpack.c.h.b16 %v393
      %v2877 = vunpack.c.l.b16 %v394
      %v2878 = vunpack.c.h.b16 %v394
      %v2879 = vunpack.c.l.b16 %v395
      %v2880 = vunpack.c.h.b16 %v395
      %v2881 = vunpack.c.l.b16 %v396
      %v2882 = vunpack.c.h.b16 %v396
      %v2883 = vunpack.c.l.b16 %v397
      %v2884 = vunpack.c.h.b16 %v397
      %v2885 = vunpack.c.l.b16 %v398
      %v2886 = vunpack.c.h.b16 %v398
      %v2887 = vunpack.c.l.b16 %v399
      %v2888 = vunpack.c.h.b16 %v399
      %v2889 = vunpack.c.l.b16 %v400
      %v2890 = vunpack.c.h.b16 %v400
      %v2891 = vunpack.c.l.b16 %v401
      %v2892 = vunpack.c.h.b16 %v401
      %v2893 = vunpack.c.l.b16 %v402
      %v2894 = vunpack.c.h.b16 %v402
      %v2895 = vunpack.c.l.b16 %v403
      %v2896 = vunpack.c.h.b16 %v403
      %v2897 = vunpack.c.l.b16 %v404
      %v2898 = vunpack.c.h.b16 %v404
      %v2899 = vunpack.c.l.b16 %v405
      %v2900 = vunpack.c.h.b16 %v405
      %v2901 = vunpack.c.l.b16 %v406
      %v2902 = vunpack.c.h.b16 %v406
      %v2903 = vunpack.c.l.b16 %v407
      %v2904 = vunpack.c.h.b16 %v407
      %v2905 = vunpack.c.l.b16 %v408
      %v2906 = vunpack.c.h.b16 %v408
      %v2907 = vunpack.c.l.b16 %v409
      %v2908 = vunpack.c.h.b16 %v409
      %v2909 = vunpack.c.l.b16 %v410
      %v2910 = vunpack.c.h.b16 %v410
      %v2911 = vunpack.c.l.b16 %v411
      %v2912 = vunpack.c.h.b16 %v411
      %v2913 = vunpack.c.l.b16 %v412
      %v2914 = vunpack.c.h.b16 %v412
      %v2915 = vunpack.c.l.b16 %v413
      %v2916 = vunpack.c.h.b16 %v413
      %v2917 = vunpack.c.l.b16 %v414
      %v2918 = vunpack.c.h.b16 %v414
      %v2919 = vunpack.c.l.b16 %v415
      %v2920 = vunpack.c.h.b16 %v415
      %v2921 = vpack.c.b16 %v2731, %v2729
      %v2922 = vpack.c.b16 %v2732, %v2730
      %v2923 = vpack.c.b16 %v2735, %v2733
      %v2924 = vpack.c.b16 %v2736, %v2734
      %v2925 = vpack.c.b16 %v2739, %v2737
      %v2926 = vpack.c.b16 %v2740, %v2738
      %v2927 = vpack.c.b16 %v2743, %v2741
      %v2928 = vpack.c.b16 %v2744, %v2742
      %v2929 = vpack.c.b16 %v2747, %v2745
      %v2930 = vpack.c.b16 %v2748, %v2746
      %v2931 = vpack.c.b16 %v2751, %v2749
      %v2932 = vpack.c.b16 %v2752, %v2750
      %v2933 = vpack.c.b16 %v2755, %v2753
      %v2934 = vpack.c.b16 %v2756, %v2754
      %v2935 = vpack.c.b16 %v2759, %v2757
      %v2936 = vpack.c.b16 %v2760, %v2758
      %v2937 = vpack.c.b16 %v2763, %v2761
      %v2938 = vpack.c.b16 %v2764, %v2762
      %v2939 = vpack.c.b16 %v2767, %v2765
      %v2940 = vpack.c.b16 %v2768, %v2766
      %v2941 = vpack.c.b16 %v2771, %v2769
      %v2942 = vpack.c.b16 %v2772, %v2770
      %v2943 = vpack.c.b16 %v2775, %v2773
      %v2944 = vpack.c.b16 %v2776, %v2774
      %v2945 = vpack.c.b16 %v2779, %v2777
      %v2946 = vpack.c.b16 %v2780, %v2778
      %v2947 = vpack.c.b16 %v2783, %v2781
      %v2948 = vpack.c.b16 %v2784, %v2782
      %v2949 = vpack.c.b16 %v2787, %v2785
      %v2950 = vpack.c.b16 %v2788, %v2786
      %v2951 = vpack.c.b16 %v2791, %v2789
      %v2952 = vpack.c.b16 %v2792, %v2790
      %v2953 = vpack.c.b16 %v2795, %v2793
      %v2954 = vpack.c.b16 %v2796, %v2794
      %v2955 = vpack.c.b16 %v2799, %v2797
      %v2956 = vpack.c.b16 %v2800, %v2798
      %v2957 = vpack.c.b16 %v2803, %v2801
      %v2958 = vpack.c.b16 %v2804, %v2802
      %v2959 = vpack.c.b16 %v2807, %v2805
      %v2960 = vpack.c.b16 %v2808, %v2806
      %v2961 = vpack.c.b16 %v2811, %v2809
      %v2962 = vpack.c.b16 %v2812, %v2810
      %v2963 = vpack.c.b16 %v2815, %v2813
      %v2964 = vpack.c.b16 %v2816, %v2814
      %v2965 = vpack.c.b16 %v2819, %v2817
      %v2966 = vpack.c.b16 %v2820, %v2818
      %v2967 = vpack.c.b16 %v2823, %v2821
      %v2968 = vpack.c.b16 %v2824, %v2822
      %v2969 = vpack.c.b16 %v2827, %v2825
      %v2970 = vpack.c.b16 %v2828, %v2826
      %v2971 = vpack.c.b16 %v2831, %v2829
      %v2972 = vpack.c.b16 %v2832, %v2830
      %v2973 = vpack.c.b16 %v2835, %v2833
      %v2974 = vpack.c.b16 %v2836, %v2834
      %v2975 = vpack.c.b16 %v2839, %v2837
      %v2976 = vpack.c.b16 %v2840, %v2838
      %v2977 = vpack.c.b16 %v2843, %v2841
      %v2978 = vpack.c.b16 %v2844, %v2842
      %v2979 = vpack.c.b16 %v2847, %v2845
      %v2980 = vpack.c.b16 %v2848, %v2846
      %v2981 = vpack.c.b16 %v2851, %v2849
      %v2982 = vpack.c.b16 %v2852, %v2850
      %v2983 = vpack.c.b16 %v2855, %v2853
      %v2984 = vpack.c.b16 %v2856, %v2854
      %v2985 = vpack.c.b16 %v2859, %v2857
      %v2986 = vpack.c.b16 %v2860, %v2858
      %v2987 = vpack.c.b16 %v2863, %v2861
      %v2988 = vpack.c.b16 %v2864, %v2862
      %v2989 = vpack.c.b16 %v2867, %v2865
      %v2990 = vpack.c.b16 %v2868, %v2866
      %v2991 = vpack.c.b16 %v2871, %v2869
      %v2992 = vpack.c.b16 %v2872, %v2870
      %v2993 = vpack.c.b16 %v2875, %v2873
      %v2994 = vpack.c.b16 %v2876, %v2874
      %v2995 = vpack.c.b16 %v2879, %v2877
      %v2996 = vpack.c.b16 %v2880, %v2878
      %v2997 = vpack.c.b16 %v2883, %v2881
      %v2998 = vpack.c.b16 %v2884, %v2882
      %v2999 = vpack.c.b16 %v2887, %v2885
      %v3000 = vpack.c.b16 %v2888, %v2886
      %v3001 = vpack.c.b16 %v2891, %v2889
      %v3002 = vpack.c.b16 %v2892, %v2890
      %v3003 = vpack.c.b16 %v2895, %v2893
      %v3004 = vpack.c.b16 %v2896, %v2894
      %v3005 = vpack.c.b16 %v2899, %v2897
      %v3006 = vpack.c.b16 %v2900, %v2898
      %v3007 = vpack.c.b16 %v2903, %v2901
      %v3008 = vpack.c.b16 %v2904, %v2902
      %v3009 = vpack.c.b16 %v2907, %v2905
      %v3010 = vpack.c.b16 %v2908, %v2906
      %v3011 = vpack.c.b16 %v2911, %v2909
      %v3012 = vpack.c.b16 %v2912, %v2910
      %v3013 = vpack.c.b16 %v2915, %v2913
      %v3014 = vpack.c.b16 %v2916, %v2914
      %v3015 = vpack.c.b16 %v2919, %v2917
      %v3016 = vpack.c.b16 %v2920, %v2918
      %3113 = vmatprep.subr.bf16.mxu0 %v2922
      %3114 = vmatpush1.bf16.msra.mxu0 %v2921
      %3115 = vmatprep.subr.bf16.mxu0 %v2924
      %3116 = vmatpush1.bf16.msra.mxu0 %v2923
      %3117 = vmatprep.subr.bf16.mxu0 %v2926
      %3118 = vmatpush1.bf16.msra.mxu0 %v2925
      %3119 = vmatprep.subr.bf16.mxu0 %v2928
      %3120 = vmatpush1.bf16.msra.mxu0 %v2927
      %3121 = vmatprep.subr.bf16.mxu0 %v2930
      %3122 = vmatpush1.bf16.msra.mxu0 %v2929
      %3123 = vmatprep.subr.bf16.mxu0 %v2932
      %3124 = vmatpush1.bf16.msra.mxu0 %v2931
      %3125 = vmatprep.subr.bf16.mxu0 %v2934
      %3126 = vmatpush1.bf16.msra.mxu0 %v2933
      %3127 = vmatprep.subr.bf16.mxu0 %v2936
      %3128 = vmatpush1.bf16.msra.mxu0 %v2935
      %3129 = vmatprep.subr.bf16.mxu0 %v2938
      %3130 = vmatpush1.bf16.msra.mxu0 %v2937
      %3131 = vmatprep.subr.bf16.mxu0 %v2940
      %3132 = vmatpush1.bf16.msra.mxu0 %v2939
      %3133 = vmatprep.subr.bf16.mxu0 %v2942
      %3134 = vmatpush1.bf16.msra.mxu0 %v2941
      %3135 = vmatprep.subr.bf16.mxu0 %v2944
      %3136 = vmatpush1.bf16.msra.mxu0 %v2943
      %3137 = vmatprep.subr.bf16.mxu0 %v2946
      %3138 = vmatpush1.bf16.msra.mxu0 %v2945
      %3139 = vmatprep.subr.bf16.mxu0 %v2948
      %3140 = vmatpush1.bf16.msra.mxu0 %v2947
      %3141 = vmatprep.subr.bf16.mxu0 %v2950
      %3142 = vmatpush1.bf16.msra.mxu0 %v2949
      %3143 = vmatprep.subr.bf16.mxu0 %v2952
      %3144 = vmatpush1.bf16.msra.mxu0 %v2951
      %3145 = vmatprep.mubr.bf16.mxu0 %v2442
      %3146 = vmatmul.mubr.bf16.gmra.mrb[0].mxu0 %v2441
      %v3147 = vpop.f32.mrb[0].mxu0
      %v3148 = vadd.f32 %v1995, %v3147
      %v3149 = vpop.f32.mrb[0].mxu0
      %v3150 = vadd.f32 %v1997, %v3149
      %v3151 = vpop.f32.mrb[0].mxu0
      %v3152 = vadd.f32 %v1999, %v3151
      %v3153 = vpop.f32.mrb[0].mxu0
      %v3154 = vadd.f32 %v2001, %v3153
      %3155 = vmatprep.mubr.bf16.mxu0 %v2448
      %3156 = vmatmul.mubr.bf16.gmra.mrb[0].mxu0 %v2447
      %v3157 = vpop.f32.mrb[0].mxu0
      %v3158 = vadd.f32 %v2005, %v3157
      %v3159 = vpop.f32.mrb[0].mxu0
      %v3160 = vadd.f32 %v2007, %v3159
      %v3161 = vpop.f32.mrb[0].mxu0
      %v3162 = vadd.f32 %v2009, %v3161
      %v3163 = vpop.f32.mrb[0].mxu0
      %v3164 = vadd.f32 %v2011, %v3163
      %3165 = vmatprep.mubr.bf16.mxu0 %v2454
      %3166 = vmatmul.mubr.bf16.gmra.mrb[0].mxu0 %v2453
      %v3167 = vpop.f32.mrb[0].mxu0
      %v3168 = vadd.f32 %v2015, %v3167
      %v3169 = vpop.f32.mrb[0].mxu0
      %v3170 = vadd.f32 %v2017, %v3169
      %v3171 = vpop.f32.mrb[0].mxu0
      %v3172 = vadd.f32 %v2019, %v3171
      %v3173 = vpop.f32.mrb[0].mxu0
      %v3174 = vadd.f32 %v2021, %v3173
      %3175 = vmatprep.mubr.bf16.mxu0 %v2460
      %3176 = vmatmul.mubr.bf16.gmra.mrb[0].mxu0 %v2459
      %v3177 = vpop.f32.mrb[0].mxu0
      %v3178 = vadd.f32 %v2025, %v3177
      %v3179 = vpop.f32.mrb[0].mxu0
      %v3180 = vadd.f32 %v2027, %v3179
      %v3181 = vpop.f32.mrb[0].mxu0
      %v3182 = vadd.f32 %v2029, %v3181
      %v3183 = vpop.f32.mrb[0].mxu0
      %v3184 = vadd.f32 %v2031, %v3183
      %3185 = vmatprep.mubr.bf16.mxu0 %v2466
      %3186 = vmatmul.mubr.bf16.gmra.mrb[0].mxu0 %v2465
      %v3187 = vpop.f32.mrb[0].mxu0
      %v3188 = vadd.f32 %v2035, %v3187
      %v3189 = vpop.f32.mrb[0].mxu0
      %v3190 = vadd.f32 %v2037, %v3189
      %v3191 = vpop.f32.mrb[0].mxu0
      %v3192 = vadd.f32 %v2039, %v3191
      %v3193 = vpop.f32.mrb[0].mxu0
      %v3194 = vadd.f32 %v2041, %v3193
      %3195 = vmatprep.mubr.bf16.mxu0 %v2472
      %3196 = vmatmul.mubr.bf16.gmra.mrb[0].mxu0 %v2471
      %v3197 = vpop.f32.mrb[0].mxu0
      %v3198 = vadd.f32 %v2045, %v3197
      %v3199 = vpop.f32.mrb[0].mxu0
      %v3200 = vadd.f32 %v2047, %v3199
      %v3201 = vpop.f32.mrb[0].mxu0
      %v3202 = vadd.f32 %v2049, %v3201
      %v3203 = vpop.f32.mrb[0].mxu0
      %v3204 = vadd.f32 %v2051, %v3203
      %3205 = vmatprep.mubr.bf16.mxu0 %v2478
      %3206 = vmatmul.mubr.bf16.gmra.mrb[0].mxu0 %v2477
      %v3207 = vpop.f32.mrb[0].mxu0
      %v3208 = vadd.f32 %v2055, %v3207
      %v3209 = vpop.f32.mrb[0].mxu0
      %v3210 = vadd.f32 %v2057, %v3209
      %v3211 = vpop.f32.mrb[0].mxu0
      %v3212 = vadd.f32 %v2059, %v3211
      %v3213 = vpop.f32.mrb[0].mxu0
      %v3214 = vadd.f32 %v2061, %v3213
      %3215 = vmatprep.mubr.bf16.mxu0 %v2484
      %3216 = vmatmul.mubr.bf16.gmra.mrb[0].mxu0 %v2483
      %v3217 = vpop.f32.mrb[0].mxu0
      %v3218 = vadd.f32 %v2065, %v3217
      %v3219 = vpop.f32.mrb[0].mxu0
      %v3220 = vadd.f32 %v2067, %v3219
      %v3221 = vpop.f32.mrb[0].mxu0
      %v3222 = vadd.f32 %v2069, %v3221
      %v3223 = vpop.f32.mrb[0].mxu0
      %v3224 = vadd.f32 %v2071, %v3223
      %3225 = vmatprep.mubr.bf16.mxu0 %v2490
      %3226 = vmatmul.mubr.bf16.gmra.mrb[0].mxu0 %v2489
      %v3227 = vpop.f32.mrb[0].mxu0
      %v3228 = vadd.f32 %v2075, %v3227
      %v3229 = vpop.f32.mrb[0].mxu0
      %v3230 = vadd.f32 %v2077, %v3229
      %v3231 = vpop.f32.mrb[0].mxu0
      %v3232 = vadd.f32 %v2079, %v3231
      %v3233 = vpop.f32.mrb[0].mxu0
      %v3234 = vadd.f32 %v2081, %v3233
      %3235 = vmatprep.mubr.bf16.mxu0 %v2496
      %3236 = vmatmul.mubr.bf16.gmra.mrb[0].mxu0 %v2495
      %v3237 = vpop.f32.mrb[0].mxu0
      %v3238 = vadd.f32 %v2085, %v3237
      %v3239 = vpop.f32.mrb[0].mxu0
      %v3240 = vadd.f32 %v2087, %v3239
      %v3241 = vpop.f32.mrb[0].mxu0
      %v3242 = vadd.f32 %v2089, %v3241
      %v3243 = vpop.f32.mrb[0].mxu0
      %v3244 = vadd.f32 %v2091, %v3243
      %3245 = vmatprep.mubr.bf16.mxu0 %v2502
      %3246 = vmatmul.mubr.bf16.gmra.mrb[0].mxu0 %v2501
      %v3247 = vpop.f32.mrb[0].mxu0
      %v3248 = vadd.f32 %v2095, %v3247
      %v3249 = vpop.f32.mrb[0].mxu0
      %v3250 = vadd.f32 %v2097, %v3249
      %v3251 = vpop.f32.mrb[0].mxu0
      %v3252 = vadd.f32 %v2099, %v3251
      %v3253 = vpop.f32.mrb[0].mxu0
      %v3254 = vadd.f32 %v2101, %v3253
      %3255 = vmatprep.mubr.bf16.mxu0 %v2508
      %3256 = vmatmul.mubr.bf16.gmra.mrb[0].mxu0 %v2507
      %v3257 = vpop.f32.mrb[0].mxu0
      %v3258 = vadd.f32 %v2105, %v3257
      %v3259 = vpop.f32.mrb[0].mxu0
      %v3260 = vadd.f32 %v2107, %v3259
      %v3261 = vpop.f32.mrb[0].mxu0
      %v3262 = vadd.f32 %v2109, %v3261
      %v3263 = vpop.f32.mrb[0].mxu0
      %v3264 = vadd.f32 %v2111, %v3263
      %3265 = vmatprep.mubr.bf16.mxu0 %v2514
      %3266 = vmatmul.mubr.bf16.gmra.mrb[0].mxu0 %v2513
      %v3267 = vpop.f32.mrb[0].mxu0
      %v3268 = vadd.f32 %v2115, %v3267
      %v3269 = vpop.f32.mrb[0].mxu0
      %v3270 = vadd.f32 %v2117, %v3269
      %v3271 = vpop.f32.mrb[0].mxu0
      %v3272 = vadd.f32 %v2119, %v3271
      %v3273 = vpop.f32.mrb[0].mxu0
      %v3274 = vadd.f32 %v2121, %v3273
      %3275 = vmatprep.mubr.bf16.mxu0 %v2520
      %3276 = vmatmul.mubr.bf16.gmra.mrb[0].mxu0 %v2519
      %v3277 = vpop.f32.mrb[0].mxu0
      %v3278 = vadd.f32 %v2125, %v3277
      %v3279 = vpop.f32.mrb[0].mxu0
      %v3280 = vadd.f32 %v2127, %v3279
      %v3281 = vpop.f32.mrb[0].mxu0
      %v3282 = vadd.f32 %v2129, %v3281
      %v3283 = vpop.f32.mrb[0].mxu0
      %v3284 = vadd.f32 %v2131, %v3283
      %3285 = vmatprep.mubr.bf16.mxu0 %v2526
      %3286 = vmatmul.mubr.bf16.gmra.mrb[0].mxu0 %v2525
      %v3287 = vpop.f32.mrb[0].mxu0
      %v3288 = vadd.f32 %v2135, %v3287
      %v3289 = vpop.f32.mrb[0].mxu0
      %v3290 = vadd.f32 %v2137, %v3289
      %v3291 = vpop.f32.mrb[0].mxu0
      %v3292 = vadd.f32 %v2139, %v3291
      %v3293 = vpop.f32.mrb[0].mxu0
      %v3294 = vadd.f32 %v2141, %v3293
      %3295 = vmatprep.mubr.bf16.mxu0 %v2532
      %3296 = vmatmul.mubr.bf16.gmra.mrb[0].mxu0 %v2531
      %v3297 = vpop.f32.mrb[0].mxu0
      %v3298 = vadd.f32 %v2145, %v3297
      %v3299 = vpop.f32.mrb[0].mxu0
      %v3300 = vadd.f32 %v2147, %v3299
      %v3301 = vpop.f32.mrb[0].mxu0
      %v3302 = vadd.f32 %v2149, %v3301
      %v3303 = vpop.f32.mrb[0].mxu0
      %v3304 = vadd.f32 %v2151, %v3303
      %3305 = vdwg.mxu0
      %3306 = vmatprep.subr.bf16.mxu0 %v2954
      %3307 = vmatpush1.bf16.msra.mxu0 %v2953
      %3308 = vmatprep.subr.bf16.mxu0 %v2956
      %3309 = vmatpush1.bf16.msra.mxu0 %v2955
      %3310 = vmatprep.subr.bf16.mxu0 %v2958
      %3311 = vmatpush1.bf16.msra.mxu0 %v2957
      %3312 = vmatprep.subr.bf16.mxu0 %v2960
      %3313 = vmatpush1.bf16.msra.mxu0 %v2959
      %3314 = vmatprep.subr.bf16.mxu0 %v2962
      %3315 = vmatpush1.bf16.msra.mxu0 %v2961
      %3316 = vmatprep.subr.bf16.mxu0 %v2964
      %3317 = vmatpush1.bf16.msra.mxu0 %v2963
      %3318 = vmatprep.subr.bf16.mxu0 %v2966
      %3319 = vmatpush1.bf16.msra.mxu0 %v2965
      %3320 = vmatprep.subr.bf16.mxu0 %v2968
      %3321 = vmatpush1.bf16.msra.mxu0 %v2967
      %3322 = vmatprep.subr.bf16.mxu0 %v2970
      %3323 = vmatpush1.bf16.msra.mxu0 %v2969
      %3324 = vmatprep.subr.bf16.mxu0 %v2972
      %3325 = vmatpush1.bf16.msra.mxu0 %v2971
      %3326 = vmatprep.subr.bf16.mxu0 %v2974
      %3327 = vmatpush1.bf16.msra.mxu0 %v2973
      %3328 = vmatprep.subr.bf16.mxu0 %v2976
      %3329 = vmatpush1.bf16.msra.mxu0 %v2975
      %3330 = vmatprep.subr.bf16.mxu0 %v2978
      %3331 = vmatpush1.bf16.msra.mxu0 %v2977
      %3332 = vmatprep.subr.bf16.mxu0 %v2980
      %3333 = vmatpush1.bf16.msra.mxu0 %v2979
      %3334 = vmatprep.subr.bf16.mxu0 %v2982
      %3335 = vmatpush1.bf16.msra.mxu0 %v2981
      %3336 = vmatprep.subr.bf16.mxu0 %v2984
      %3337 = vmatpush1.bf16.msra.mxu0 %v2983
      %3338 = vmatprep.mubr.bf16.mxu0 %v2444
      %3339 = vmatmul.mubr.bf16.gmra.mrb[0].mxu0 %v2443
      %v3340 = vpop.f32.mrb[0].mxu0
      %v3341 = vadd.f32 %v3148, %v3340
      %v3342 = vpop.f32.mrb[0].mxu0
      %v3343 = vadd.f32 %v3150, %v3342
      %v3344 = vpop.f32.mrb[0].mxu0
      %v3345 = vadd.f32 %v3152, %v3344
      %v3346 = vpop.f32.mrb[0].mxu0
      %v3347 = vadd.f32 %v3154, %v3346
      %3348 = vmatprep.mubr.bf16.mxu0 %v2450
      %3349 = vmatmul.mubr.bf16.gmra.mrb[0].mxu0 %v2449
      %v3350 = vpop.f32.mrb[0].mxu0
      %v3351 = vadd.f32 %v3158, %v3350
      %v3352 = vpop.f32.mrb[0].mxu0
      %v3353 = vadd.f32 %v3160, %v3352
      %v3354 = vpop.f32.mrb[0].mxu0
      %v3355 = vadd.f32 %v3162, %v3354
      %v3356 = vpop.f32.mrb[0].mxu0
      %v3357 = vadd.f32 %v3164, %v3356
      %3358 = vmatprep.mubr.bf16.mxu0 %v2456
      %3359 = vmatmul.mubr.bf16.gmra.mrb[0].mxu0 %v2455
      %v3360 = vpop.f32.mrb[0].mxu0
      %v3361 = vadd.f32 %v3168, %v3360
      %v3362 = vpop.f32.mrb[0].mxu0
      %v3363 = vadd.f32 %v3170, %v3362
      %v3364 = vpop.f32.mrb[0].mxu0
      %v3365 = vadd.f32 %v3172, %v3364
      %v3366 = vpop.f32.mrb[0].mxu0
      %v3367 = vadd.f32 %v3174, %v3366
      %3368 = vmatprep.mubr.bf16.mxu0 %v2462
      %3369 = vmatmul.mubr.bf16.gmra.mrb[0].mxu0 %v2461
      %v3370 = vpop.f32.mrb[0].mxu0
      %v3371 = vadd.f32 %v3178, %v3370
      %v3372 = vpop.f32.mrb[0].mxu0
      %v3373 = vadd.f32 %v3180, %v3372
      %v3374 = vpop.f32.mrb[0].mxu0
      %v3375 = vadd.f32 %v3182, %v3374
      %v3376 = vpop.f32.mrb[0].mxu0
      %v3377 = vadd.f32 %v3184, %v3376
      %3378 = vmatprep.mubr.bf16.mxu0 %v2468
      %3379 = vmatmul.mubr.bf16.gmra.mrb[0].mxu0 %v2467
      %v3380 = vpop.f32.mrb[0].mxu0
      %v3381 = vadd.f32 %v3188, %v3380
      %v3382 = vpop.f32.mrb[0].mxu0
      %v3383 = vadd.f32 %v3190, %v3382
      %v3384 = vpop.f32.mrb[0].mxu0
      %v3385 = vadd.f32 %v3192, %v3384
      %v3386 = vpop.f32.mrb[0].mxu0
      %v3387 = vadd.f32 %v3194, %v3386
      %3388 = vmatprep.mubr.bf16.mxu0 %v2474
      %3389 = vmatmul.mubr.bf16.gmra.mrb[0].mxu0 %v2473
      %v3390 = vpop.f32.mrb[0].mxu0
      %v3391 = vadd.f32 %v3198, %v3390
      %v3392 = vpop.f32.mrb[0].mxu0
      %v3393 = vadd.f32 %v3200, %v3392
      %v3394 = vpop.f32.mrb[0].mxu0
      %v3395 = vadd.f32 %v3202, %v3394
      %v3396 = vpop.f32.mrb[0].mxu0
      %v3397 = vadd.f32 %v3204, %v3396
      %3398 = vmatprep.mubr.bf16.mxu0 %v2480
      %3399 = vmatmul.mubr.bf16.gmra.mrb[0].mxu0 %v2479
      %v3400 = vpop.f32.mrb[0].mxu0
      %v3401 = vadd.f32 %v3208, %v3400
      %v3402 = vpop.f32.mrb[0].mxu0
      %v3403 = vadd.f32 %v3210, %v3402
      %v3404 = vpop.f32.mrb[0].mxu0
      %v3405 = vadd.f32 %v3212, %v3404
      %v3406 = vpop.f32.mrb[0].mxu0
      %v3407 = vadd.f32 %v3214, %v3406
      %3408 = vmatprep.mubr.bf16.mxu0 %v2486
      %3409 = vmatmul.mubr.bf16.gmra.mrb[0].mxu0 %v2485
      %v3410 = vpop.f32.mrb[0].mxu0
      %v3411 = vadd.f32 %v3218, %v3410
      %v3412 = vpop.f32.mrb[0].mxu0
      %v3413 = vadd.f32 %v3220, %v3412
      %v3414 = vpop.f32.mrb[0].mxu0
      %v3415 = vadd.f32 %v3222, %v3414
      %v3416 = vpop.f32.mrb[0].mxu0
      %v3417 = vadd.f32 %v3224, %v3416
      %3418 = vmatprep.mubr.bf16.mxu0 %v2492
      %3419 = vmatmul.mubr.bf16.gmra.mrb[0].mxu0 %v2491
      %v3420 = vpop.f32.mrb[0].mxu0
      %v3421 = vadd.f32 %v3228, %v3420
      %v3422 = vpop.f32.mrb[0].mxu0
      %v3423 = vadd.f32 %v3230, %v3422
      %v3424 = vpop.f32.mrb[0].mxu0
      %v3425 = vadd.f32 %v3232, %v3424
      %v3426 = vpop.f32.mrb[0].mxu0
      %v3427 = vadd.f32 %v3234, %v3426
      %3428 = vmatprep.mubr.bf16.mxu0 %v2498
      %3429 = vmatmul.mubr.bf16.gmra.mrb[0].mxu0 %v2497
      %v3430 = vpop.f32.mrb[0].mxu0
      %v3431 = vadd.f32 %v3238, %v3430
      %v3432 = vpop.f32.mrb[0].mxu0
      %v3433 = vadd.f32 %v3240, %v3432
      %v3434 = vpop.f32.mrb[0].mxu0
      %v3435 = vadd.f32 %v3242, %v3434
      %v3436 = vpop.f32.mrb[0].mxu0
      %v3437 = vadd.f32 %v3244, %v3436
      %3438 = vmatprep.mubr.bf16.mxu0 %v2504
      %3439 = vmatmul.mubr.bf16.gmra.mrb[0].mxu0 %v2503
      %v3440 = vpop.f32.mrb[0].mxu0
      %v3441 = vadd.f32 %v3248, %v3440
      %v3442 = vpop.f32.mrb[0].mxu0
      %v3443 = vadd.f32 %v3250, %v3442
      %v3444 = vpop.f32.mrb[0].mxu0
      %v3445 = vadd.f32 %v3252, %v3444
      %v3446 = vpop.f32.mrb[0].mxu0
      %v3447 = vadd.f32 %v3254, %v3446
      %3448 = vmatprep.mubr.bf16.mxu0 %v2510
      %3449 = vmatmul.mubr.bf16.gmra.mrb[0].mxu0 %v2509
      %v3450 = vpop.f32.mrb[0].mxu0
      %v3451 = vadd.f32 %v3258, %v3450
      %v3452 = vpop.f32.mrb[0].mxu0
      %v3453 = vadd.f32 %v3260, %v3452
      %v3454 = vpop.f32.mrb[0].mxu0
      %v3455 = vadd.f32 %v3262, %v3454
      %v3456 = vpop.f32.mrb[0].mxu0
      %v3457 = vadd.f32 %v3264, %v3456
      %3458 = vmatprep.mubr.bf16.mxu0 %v2516
      %3459 = vmatmul.mubr.bf16.gmra.mrb[0].mxu0 %v2515
      %v3460 = vpop.f32.mrb[0].mxu0
      %v3461 = vadd.f32 %v3268, %v3460
      %v3462 = vpop.f32.mrb[0].mxu0
      %v3463 = vadd.f32 %v3270, %v3462
      %v3464 = vpop.f32.mrb[0].mxu0
      %v3465 = vadd.f32 %v3272, %v3464
      %v3466 = vpop.f32.mrb[0].mxu0
      %v3467 = vadd.f32 %v3274, %v3466
      %3468 = vmatprep.mubr.bf16.mxu0 %v2522
      %3469 = vmatmul.mubr.bf16.gmra.mrb[0].mxu0 %v2521
      %v3470 = vpop.f32.mrb[0].mxu0
      %v3471 = vadd.f32 %v3278, %v3470
      %v3472 = vpop.f32.mrb[0].mxu0
      %v3473 = vadd.f32 %v3280, %v3472
      %v3474 = vpop.f32.mrb[0].mxu0
      %v3475 = vadd.f32 %v3282, %v3474
      %v3476 = vpop.f32.mrb[0].mxu0
      %v3477 = vadd.f32 %v3284, %v3476
      %3478 = vmatprep.mubr.bf16.mxu0 %v2528
      %3479 = vmatmul.mubr.bf16.gmra.mrb[0].mxu0 %v2527
      %v3480 = vpop.f32.mrb[0].mxu0
      %v3481 = vadd.f32 %v3288, %v3480
      %v3482 = vpop.f32.mrb[0].mxu0
      %v3483 = vadd.f32 %v3290, %v3482
      %v3484 = vpop.f32.mrb[0].mxu0
      %v3485 = vadd.f32 %v3292, %v3484
      %v3486 = vpop.f32.mrb[0].mxu0
      %v3487 = vadd.f32 %v3294, %v3486
      %3488 = vmatprep.mubr.bf16.mxu0 %v2534
      %3489 = vmatmul.mubr.bf16.gmra.mrb[0].mxu0 %v2533
      %v3490 = vpop.f32.mrb[0].mxu0
      %v3491 = vadd.f32 %v3298, %v3490
      %v3492 = vpop.f32.mrb[0].mxu0
      %v3493 = vadd.f32 %v3300, %v3492
      %v3494 = vpop.f32.mrb[0].mxu0
      %v3495 = vadd.f32 %v3302, %v3494
      %v3496 = vpop.f32.mrb[0].mxu0
      %v3497 = vadd.f32 %v3304, %v3496
      %3498 = vdwg.mxu0
      %3499 = vmatprep.subr.bf16.mxu0 %v2986
      %3500 = vmatpush1.bf16.msra.mxu0 %v2985
      %3501 = vmatprep.subr.bf16.mxu0 %v2988
      %3502 = vmatpush1.bf16.msra.mxu0 %v2987
      %3503 = vmatprep.subr.bf16.mxu0 %v2990
      %3504 = vmatpush1.bf16.msra.mxu0 %v2989
      %3505 = vmatprep.subr.bf16.mxu0 %v2992
      %3506 = vmatpush1.bf16.msra.mxu0 %v2991
      %3507 = vmatprep.subr.bf16.mxu0 %v2994
      %3508 = vmatpush1.bf16.msra.mxu0 %v2993
      %3509 = vmatprep.subr.bf16.mxu0 %v2996
      %3510 = vmatpush1.bf16.msra.mxu0 %v2995
      %3511 = vmatprep.subr.bf16.mxu0 %v2998
      %3512 = vmatpush1.bf16.msra.mxu0 %v2997
      %3513 = vmatprep.subr.bf16.mxu0 %v3000
      %3514 = vmatpush1.bf16.msra.mxu0 %v2999
      %3515 = vmatprep.subr.bf16.mxu0 %v3002
      %3516 = vmatpush1.bf16.msra.mxu0 %v3001
      %3517 = vmatprep.subr.bf16.mxu0 %v3004
      %3518 = vmatpush1.bf16.msra.mxu0 %v3003
      %3519 = vmatprep.subr.bf16.mxu0 %v3006
      %3520 = vmatpush1.bf16.msra.mxu0 %v3005
      %3521 = vmatprep.subr.bf16.mxu0 %v3008
      %3522 = vmatpush1.bf16.msra.mxu0 %v3007
      %3523 = vmatprep.subr.bf16.mxu0 %v3010
      %3524 = vmatpush1.bf16.msra.mxu0 %v3009
      %3525 = vmatprep.subr.bf16.mxu0 %v3012
      %3526 = vmatpush1.bf16.msra.mxu0 %v3011
      %3527 = vmatprep.subr.bf16.mxu0 %v3014
      %3528 = vmatpush1.bf16.msra.mxu0 %v3013
      %3529 = vmatprep.subr.bf16.mxu0 %v3016
      %3530 = vmatpush1.bf16.msra.mxu0 %v3015
      %3531 = vmatprep.mubr.bf16.mxu0 %v2446
      %3532 = vmatmul.mubr.bf16.gmra.mrb[0].mxu0 %v2445
      %v3533 = vpop.f32.mrb[0].mxu0
      %v3534 = vadd.f32 %v3341, %v3533
      %v3535 = vpop.f32.mrb[0].mxu0
      %v3536 = vadd.f32 %v3343, %v3535
      %v3537 = vpop.f32.mrb[0].mxu0
      %v3538 = vadd.f32 %v3345, %v3537
      %v3539 = vpop.f32.mrb[0].mxu0
      %v3540 = vadd.f32 %v3347, %v3539
      %3541 = vmatprep.mubr.bf16.mxu0 %v2452
      %3542 = vmatmul.mubr.bf16.gmra.mrb[0].mxu0 %v2451
      %v3543 = vpop.f32.mrb[0].mxu0
      %v3544 = vadd.f32 %v3351, %v3543
      %v3545 = vpop.f32.mrb[0].mxu0
      %v3546 = vadd.f32 %v3353, %v3545
      %v3547 = vpop.f32.mrb[0].mxu0
      %v3548 = vadd.f32 %v3355, %v3547
      %v3549 = vpop.f32.mrb[0].mxu0
      %v3550 = vadd.f32 %v3357, %v3549
      %3551 = vmatprep.mubr.bf16.mxu0 %v2458
      %3552 = vmatmul.mubr.bf16.gmra.mrb[0].mxu0 %v2457
      %v3553 = vpop.f32.mrb[0].mxu0
      %v3554 = vadd.f32 %v3361, %v3553
      %v3555 = vpop.f32.mrb[0].mxu0
      %v3556 = vadd.f32 %v3363, %v3555
      %v3557 = vpop.f32.mrb[0].mxu0
      %v3558 = vadd.f32 %v3365, %v3557
      %v3559 = vpop.f32.mrb[0].mxu0
      %v3560 = vadd.f32 %v3367, %v3559
      %3561 = vmatprep.mubr.bf16.mxu0 %v2464
      %3562 = vmatmul.mubr.bf16.gmra.mrb[0].mxu0 %v2463
      %v3563 = vpop.f32.mrb[0].mxu0
      %v3564 = vadd.f32 %v3371, %v3563
      %v3565 = vpop.f32.mrb[0].mxu0
      %v3566 = vadd.f32 %v3373, %v3565
      %v3567 = vpop.f32.mrb[0].mxu0
      %v3568 = vadd.f32 %v3375, %v3567
      %v3569 = vpop.f32.mrb[0].mxu0
      %v3570 = vadd.f32 %v3377, %v3569
      %3571 = vmatprep.mubr.bf16.mxu0 %v2470
      %3572 = vmatmul.mubr.bf16.gmra.mrb[0].mxu0 %v2469
      %v3573 = vpop.f32.mrb[0].mxu0
      %v3574 = vadd.f32 %v3381, %v3573
      %v3575 = vpop.f32.mrb[0].mxu0
      %v3576 = vadd.f32 %v3383, %v3575
      %v3577 = vpop.f32.mrb[0].mxu0
      %v3578 = vadd.f32 %v3385, %v3577
      %v3579 = vpop.f32.mrb[0].mxu0
      %v3580 = vadd.f32 %v3387, %v3579
      %3581 = vmatprep.mubr.bf16.mxu0 %v2476
      %3582 = vmatmul.mubr.bf16.gmra.mrb[0].mxu0 %v2475
      %v3583 = vpop.f32.mrb[0].mxu0
      %v3584 = vadd.f32 %v3391, %v3583
      %v3585 = vpop.f32.mrb[0].mxu0
      %v3586 = vadd.f32 %v3393, %v3585
      %v3587 = vpop.f32.mrb[0].mxu0
      %v3588 = vadd.f32 %v3395, %v3587
      %v3589 = vpop.f32.mrb[0].mxu0
      %v3590 = vadd.f32 %v3397, %v3589
      %3591 = vmatprep.mubr.bf16.mxu0 %v2482
      %3592 = vmatmul.mubr.bf16.gmra.mrb[0].mxu0 %v2481
      %v3593 = vpop.f32.mrb[0].mxu0
      %v3594 = vadd.f32 %v3401, %v3593
      %v3595 = vpop.f32.mrb[0].mxu0
      %v3596 = vadd.f32 %v3403, %v3595
      %v3597 = vpop.f32.mrb[0].mxu0
      %v3598 = vadd.f32 %v3405, %v3597
      %v3599 = vpop.f32.mrb[0].mxu0
      %v3600 = vadd.f32 %v3407, %v3599
      %3601 = vmatprep.mubr.bf16.mxu0 %v2488
      %3602 = vmatmul.mubr.bf16.gmra.mrb[0].mxu0 %v2487
      %v3603 = vpop.f32.mrb[0].mxu0
      %v3604 = vadd.f32 %v3411, %v3603
      %v3605 = vpop.f32.mrb[0].mxu0
      %v3606 = vadd.f32 %v3413, %v3605
      %v3607 = vpop.f32.mrb[0].mxu0
      %v3608 = vadd.f32 %v3415, %v3607
      %v3609 = vpop.f32.mrb[0].mxu0
      %v3610 = vadd.f32 %v3417, %v3609
      %3611 = vmatprep.mubr.bf16.mxu0 %v2494
      %3612 = vmatmul.mubr.bf16.gmra.mrb[0].mxu0 %v2493
      %v3613 = vpop.f32.mrb[0].mxu0
      %v3614 = vadd.f32 %v3421, %v3613
      %v3615 = vpop.f32.mrb[0].mxu0
      %v3616 = vadd.f32 %v3423, %v3615
      %v3617 = vpop.f32.mrb[0].mxu0
      %v3618 = vadd.f32 %v3425, %v3617
      %v3619 = vpop.f32.mrb[0].mxu0
      %v3620 = vadd.f32 %v3427, %v3619
      %3621 = vmatprep.mubr.bf16.mxu0 %v2500
      %3622 = vmatmul.mubr.bf16.gmra.mrb[0].mxu0 %v2499
      %v3623 = vpop.f32.mrb[0].mxu0
      %v3624 = vadd.f32 %v3431, %v3623
      %v3625 = vpop.f32.mrb[0].mxu0
      %v3626 = vadd.f32 %v3433, %v3625
      %v3627 = vpop.f32.mrb[0].mxu0
      %v3628 = vadd.f32 %v3435, %v3627
      %v3629 = vpop.f32.mrb[0].mxu0
      %v3630 = vadd.f32 %v3437, %v3629
      %3631 = vmatprep.mubr.bf16.mxu0 %v2506
      %3632 = vmatmul.mubr.bf16.gmra.mrb[0].mxu0 %v2505
      %v3633 = vpop.f32.mrb[0].mxu0
      %v3634 = vadd.f32 %v3441, %v3633
      %v3635 = vpop.f32.mrb[0].mxu0
      %v3636 = vadd.f32 %v3443, %v3635
      %v3637 = vpop.f32.mrb[0].mxu0
      %v3638 = vadd.f32 %v3445, %v3637
      %v3639 = vpop.f32.mrb[0].mxu0
      %v3640 = vadd.f32 %v3447, %v3639
      %3641 = vmatprep.mubr.bf16.mxu0 %v2512
      %3642 = vmatmul.mubr.bf16.gmra.mrb[0].mxu0 %v2511
      %v3643 = vpop.f32.mrb[0].mxu0
      %v3644 = vadd.f32 %v3451, %v3643
      %v3645 = vpop.f32.mrb[0].mxu0
      %v3646 = vadd.f32 %v3453, %v3645
      %v3647 = vpop.f32.mrb[0].mxu0
      %v3648 = vadd.f32 %v3455, %v3647
      %v3649 = vpop.f32.mrb[0].mxu0
      %v3650 = vadd.f32 %v3457, %v3649
      %3651 = vmatprep.mubr.bf16.mxu0 %v2518
      %3652 = vmatmul.mubr.bf16.gmra.mrb[0].mxu0 %v2517
      %v3653 = vpop.f32.mrb[0].mxu0
      %v3654 = vadd.f32 %v3461, %v3653
      %v3655 = vpop.f32.mrb[0].mxu0
      %v3656 = vadd.f32 %v3463, %v3655
      %v3657 = vpop.f32.mrb[0].mxu0
      %v3658 = vadd.f32 %v3465, %v3657
      %v3659 = vpop.f32.mrb[0].mxu0
      %v3660 = vadd.f32 %v3467, %v3659
      %3661 = vmatprep.mubr.bf16.mxu0 %v2524
      %3662 = vmatmul.mubr.bf16.gmra.mrb[0].mxu0 %v2523
      %v3663 = vpop.f32.mrb[0].mxu0
      %v3664 = vadd.f32 %v3471, %v3663
      %v3665 = vpop.f32.mrb[0].mxu0
      %v3666 = vadd.f32 %v3473, %v3665
      %v3667 = vpop.f32.mrb[0].mxu0
      %v3668 = vadd.f32 %v3475, %v3667
      %v3669 = vpop.f32.mrb[0].mxu0
      %v3670 = vadd.f32 %v3477, %v3669
      %3671 = vmatprep.mubr.bf16.mxu0 %v2530
      %3672 = vmatmul.mubr.bf16.gmra.mrb[0].mxu0 %v2529
      %v3673 = vpop.f32.mrb[0].mxu0
      %v3674 = vadd.f32 %v3481, %v3673
      %v3675 = vpop.f32.mrb[0].mxu0
      %v3676 = vadd.f32 %v3483, %v3675
      %v3677 = vpop.f32.mrb[0].mxu0
      %v3678 = vadd.f32 %v3485, %v3677
      %v3679 = vpop.f32.mrb[0].mxu0
      %v3680 = vadd.f32 %v3487, %v3679
      %3681 = vmatprep.mubr.bf16.mxu0 %v2536
      %3682 = vmatmul.mubr.bf16.gmra.mrb[0].mxu0 %v2535
      %v3683 = vpop.f32.mrb[0].mxu0
      %v3684 = vadd.f32 %v3491, %v3683
      %v3685 = vpop.f32.mrb[0].mxu0
      %v3686 = vadd.f32 %v3493, %v3685
      %v3687 = vpop.f32.mrb[0].mxu0
      %v3688 = vadd.f32 %v3495, %v3687
      %v3689 = vpop.f32.mrb[0].mxu0
      %v3690 = vadd.f32 %v3497, %v3689
      %3691 = vdwg.mxu0
      %s3692 = sadd.s32 %s218, 32
      %s3693 = sshra.s32 %s3692, 3
      %s3694 = sand.u32 %s3692, 7
      %s3695 = smul.u32 %s3693, 6
      %s3696 = smul.addr %s3695, 4
      %s3697 = scalar_lea.vmem %s0, %s3696
      %v3698 = vld [vmem:[%s3697] sm:$0xff]
      %v3699 = vld [vmem:[%s3697 + $0x8] sm:$0xff]
      %v3700 = vld [vmem:[%s3697 + $0x10] sm:$0xff]
      %v3701 = vld [vmem:[%s3697 + $0x18] sm:$0xff]
      %v3702 = vld [vmem:[%s3697 + $0x20] sm:$0xff]
      %v3703 = vld [vmem:[%s3697 + $0x28] sm:$0xff]
      %v3704 = vld [vmem:[%s3697 + $0x30] sm:$0xff]
      %v3705 = vld [vmem:[%s3697 + $0x38] sm:$0xff]
      %v3706 = vld [vmem:[%s3697 + $0x40] sm:$0xff]
      %v3707 = vld [vmem:[%s3697 + $0x48] sm:$0xff]
      %v3708 = vld [vmem:[%s3697 + $0x50] sm:$0xff]
      %v3709 = vld [vmem:[%s3697 + $0x58] sm:$0xff]
      %v3710 = vld [vmem:[%s3697 + $0x60] sm:$0xff]
      %v3711 = vld [vmem:[%s3697 + $0x68] sm:$0xff]
      %v3712 = vld [vmem:[%s3697 + $0x70] sm:$0xff]
      %v3713 = vld [vmem:[%s3697 + $0x78] sm:$0xff]
      %v3714 = vld [vmem:[%s3697 + $0x80] sm:$0xff]
      %v3715 = vld [vmem:[%s3697 + $0x88] sm:$0xff]
      %v3716 = vld [vmem:[%s3697 + $0x90] sm:$0xff]
      %v3717 = vld [vmem:[%s3697 + $0x98] sm:$0xff]
      %v3718 = vld [vmem:[%s3697 + $0xa0] sm:$0xff]
      %v3719 = vld [vmem:[%s3697 + $0xa8] sm:$0xff]
      %v3720 = vld [vmem:[%s3697 + $0xb0] sm:$0xff]
      %v3721 = vld [vmem:[%s3697 + $0xb8] sm:$0xff]
      %v3722 = vld [vmem:[%s3697 + $0xc0] sm:$0xff]
      %v3723 = vld [vmem:[%s3697 + $0xc8] sm:$0xff]
      %v3724 = vld [vmem:[%s3697 + $0xd0] sm:$0xff]
      %v3725 = vld [vmem:[%s3697 + $0xd8] sm:$0xff]
      %v3726 = vld [vmem:[%s3697 + $0xe0] sm:$0xff]
      %v3727 = vld [vmem:[%s3697 + $0xe8] sm:$0xff]
      %v3728 = vld [vmem:[%s3697 + $0xf0] sm:$0xff]
      %v3729 = vld [vmem:[%s3697 + $0xf8] sm:$0xff]
      %v3730 = vld [vmem:[%s3697 + $0x100] sm:$0xff]
      %v3731 = vld [vmem:[%s3697 + $0x108] sm:$0xff]
      %v3732 = vld [vmem:[%s3697 + $0x110] sm:$0xff]
      %v3733 = vld [vmem:[%s3697 + $0x118] sm:$0xff]
      %v3734 = vld [vmem:[%s3697 + $0x120] sm:$0xff]
      %v3735 = vld [vmem:[%s3697 + $0x128] sm:$0xff]
      %v3736 = vld [vmem:[%s3697 + $0x130] sm:$0xff]
      %v3737 = vld [vmem:[%s3697 + $0x138] sm:$0xff]
      %v3738 = vld [vmem:[%s3697 + $0x140] sm:$0xff]
      %v3739 = vld [vmem:[%s3697 + $0x148] sm:$0xff]
      %v3740 = vld [vmem:[%s3697 + $0x150] sm:$0xff]
      %v3741 = vld [vmem:[%s3697 + $0x158] sm:$0xff]
      %v3742 = vld [vmem:[%s3697 + $0x160] sm:$0xff]
      %v3743 = vld [vmem:[%s3697 + $0x168] sm:$0xff]
      %v3744 = vld [vmem:[%s3697 + $0x170] sm:$0xff]
      %v3745 = vld [vmem:[%s3697 + $0x178] sm:$0xff]
      %v3746 = vld [vmem:[%s3697 + $0x180] sm:$0xff]
      %v3747 = vld [vmem:[%s3697 + $0x188] sm:$0xff]
      %v3748 = vld [vmem:[%s3697 + $0x190] sm:$0xff]
      %v3749 = vld [vmem:[%s3697 + $0x198] sm:$0xff]
      %v3750 = vld [vmem:[%s3697 + $0x1a0] sm:$0xff]
      %v3751 = vld [vmem:[%s3697 + $0x1a8] sm:$0xff]
      %v3752 = vld [vmem:[%s3697 + $0x1b0] sm:$0xff]
      %v3753 = vld [vmem:[%s3697 + $0x1b8] sm:$0xff]
      %v3754 = vld [vmem:[%s3697 + $0x1c0] sm:$0xff]
      %v3755 = vld [vmem:[%s3697 + $0x1c8] sm:$0xff]
      %v3756 = vld [vmem:[%s3697 + $0x1d0] sm:$0xff]
      %v3757 = vld [vmem:[%s3697 + $0x1d8] sm:$0xff]
      %v3758 = vld [vmem:[%s3697 + $0x1e0] sm:$0xff]
      %v3759 = vld [vmem:[%s3697 + $0x1e8] sm:$0xff]
      %v3760 = vld [vmem:[%s3697 + $0x1f0] sm:$0xff]
      %v3761 = vld [vmem:[%s3697 + $0x1f8] sm:$0xff]
      %v3762 = vld [vmem:[%s3697 + $0x200] sm:$0xff]
      %v3763 = vld [vmem:[%s3697 + $0x208] sm:$0xff]
      %v3764 = vld [vmem:[%s3697 + $0x210] sm:$0xff]
      %v3765 = vld [vmem:[%s3697 + $0x218] sm:$0xff]
      %v3766 = vld [vmem:[%s3697 + $0x220] sm:$0xff]
      %v3767 = vld [vmem:[%s3697 + $0x228] sm:$0xff]
      %v3768 = vld [vmem:[%s3697 + $0x230] sm:$0xff]
      %v3769 = vld [vmem:[%s3697 + $0x238] sm:$0xff]
      %v3770 = vld [vmem:[%s3697 + $0x240] sm:$0xff]
      %v3771 = vld [vmem:[%s3697 + $0x248] sm:$0xff]
      %v3772 = vld [vmem:[%s3697 + $0x250] sm:$0xff]
      %v3773 = vld [vmem:[%s3697 + $0x258] sm:$0xff]
      %v3774 = vld [vmem:[%s3697 + $0x260] sm:$0xff]
      %v3775 = vld [vmem:[%s3697 + $0x268] sm:$0xff]
      %v3776 = vld [vmem:[%s3697 + $0x270] sm:$0xff]
      %v3777 = vld [vmem:[%s3697 + $0x278] sm:$0xff]
      %v3778 = vld [vmem:[%s3697 + $0x280] sm:$0xff]
      %v3779 = vld [vmem:[%s3697 + $0x288] sm:$0xff]
      %v3780 = vld [vmem:[%s3697 + $0x290] sm:$0xff]
      %v3781 = vld [vmem:[%s3697 + $0x298] sm:$0xff]
      %v3782 = vld [vmem:[%s3697 + $0x2a0] sm:$0xff]
      %v3783 = vld [vmem:[%s3697 + $0x2a8] sm:$0xff]
      %v3784 = vld [vmem:[%s3697 + $0x2b0] sm:$0xff]
      %v3785 = vld [vmem:[%s3697 + $0x2b8] sm:$0xff]
      %v3786 = vld [vmem:[%s3697 + $0x2c0] sm:$0xff]
      %v3787 = vld [vmem:[%s3697 + $0x2c8] sm:$0xff]
      %v3788 = vld [vmem:[%s3697 + $0x2d0] sm:$0xff]
      %v3789 = vld [vmem:[%s3697 + $0x2d8] sm:$0xff]
      %v3790 = vld [vmem:[%s3697 + $0x2e0] sm:$0xff]
      %v3791 = vld [vmem:[%s3697 + $0x2e8] sm:$0xff]
      %v3792 = vld [vmem:[%s3697 + $0x2f0] sm:$0xff]
      %v3793 = vld [vmem:[%s3697 + $0x2f8] sm:$0xff]
      %v3794 = vld [vmem:[%s199 + $0x600] sm:$0xff]
      %v3795 = vld [vmem:[%s199 + $0x608] sm:$0xff]
      %v3796 = vld [vmem:[%s199 + $0x610] sm:$0xff]
      %v3797 = vld [vmem:[%s199 + $0x618] sm:$0xff]
      %v3798 = vld [vmem:[%s199 + $0x620] sm:$0xff]
      %v3799 = vld [vmem:[%s199 + $0x628] sm:$0xff]
      %v3800 = vld [vmem:[%s199 + $0x630] sm:$0xff]
      %v3801 = vld [vmem:[%s199 + $0x638] sm:$0xff]
      %v3802 = vld [vmem:[%s199 + $0x640] sm:$0xff]
      %v3803 = vld [vmem:[%s199 + $0x648] sm:$0xff]
      %v3804 = vld [vmem:[%s199 + $0x650] sm:$0xff]
      %v3805 = vld [vmem:[%s199 + $0x658] sm:$0xff]
      %v3806 = vld [vmem:[%s199 + $0x660] sm:$0xff]
      %v3807 = vld [vmem:[%s199 + $0x668] sm:$0xff]
      %v3808 = vld [vmem:[%s199 + $0x670] sm:$0xff]
      %v3809 = vld [vmem:[%s199 + $0x678] sm:$0xff]
      %v3810 = vld [vmem:[%s199 + $0x680] sm:$0xff]
      %v3811 = vld [vmem:[%s199 + $0x688] sm:$0xff]
      %v3812 = vld [vmem:[%s199 + $0x690] sm:$0xff]
      %v3813 = vld [vmem:[%s199 + $0x698] sm:$0xff]
      %v3814 = vld [vmem:[%s199 + $0x6a0] sm:$0xff]
      %v3815 = vld [vmem:[%s199 + $0x6a8] sm:$0xff]
      %v3816 = vld [vmem:[%s199 + $0x6b0] sm:$0xff]
      %v3817 = vld [vmem:[%s199 + $0x6b8] sm:$0xff]
      %v3818 = vld [vmem:[%s199 + $0x6c0] sm:$0xff]
      %v3819 = vld [vmem:[%s199 + $0x6c8] sm:$0xff]
      %v3820 = vld [vmem:[%s199 + $0x6d0] sm:$0xff]
      %v3821 = vld [vmem:[%s199 + $0x6d8] sm:$0xff]
      %v3822 = vld [vmem:[%s199 + $0x6e0] sm:$0xff]
      %v3823 = vld [vmem:[%s199 + $0x6e8] sm:$0xff]
      %v3824 = vld [vmem:[%s199 + $0x6f0] sm:$0xff]
      %v3825 = vld [vmem:[%s199 + $0x6f8] sm:$0xff]
      %v3826 = vld [vmem:[%s199 + $0x700] sm:$0xff]
      %v3827 = vld [vmem:[%s199 + $0x708] sm:$0xff]
      %v3828 = vld [vmem:[%s199 + $0x710] sm:$0xff]
      %v3829 = vld [vmem:[%s199 + $0x718] sm:$0xff]
      %v3830 = vld [vmem:[%s199 + $0x720] sm:$0xff]
      %v3831 = vld [vmem:[%s199 + $0x728] sm:$0xff]
      %v3832 = vld [vmem:[%s199 + $0x730] sm:$0xff]
      %v3833 = vld [vmem:[%s199 + $0x738] sm:$0xff]
      %v3834 = vld [vmem:[%s199 + $0x740] sm:$0xff]
      %v3835 = vld [vmem:[%s199 + $0x748] sm:$0xff]
      %v3836 = vld [vmem:[%s199 + $0x750] sm:$0xff]
      %v3837 = vld [vmem:[%s199 + $0x758] sm:$0xff]
      %v3838 = vld [vmem:[%s199 + $0x760] sm:$0xff]
      %v3839 = vld [vmem:[%s199 + $0x768] sm:$0xff]
      %v3840 = vld [vmem:[%s199 + $0x770] sm:$0xff]
      %v3841 = vld [vmem:[%s199 + $0x778] sm:$0xff]
      %v3842 = vld [vmem:[%s199 + $0x780] sm:$0xff]
      %v3843 = vld [vmem:[%s199 + $0x788] sm:$0xff]
      %v3844 = vld [vmem:[%s199 + $0x790] sm:$0xff]
      %v3845 = vld [vmem:[%s199 + $0x798] sm:$0xff]
      %v3846 = vld [vmem:[%s199 + $0x7a0] sm:$0xff]
      %v3847 = vld [vmem:[%s199 + $0x7a8] sm:$0xff]
      %v3848 = vld [vmem:[%s199 + $0x7b0] sm:$0xff]
      %v3849 = vld [vmem:[%s199 + $0x7b8] sm:$0xff]
      %v3850 = vld [vmem:[%s199 + $0x7c0] sm:$0xff]
      %v3851 = vld [vmem:[%s199 + $0x7c8] sm:$0xff]
      %v3852 = vld [vmem:[%s199 + $0x7d0] sm:$0xff]
      %v3853 = vld [vmem:[%s199 + $0x7d8] sm:$0xff]
      %v3854 = vld [vmem:[%s199 + $0x7e0] sm:$0xff]
      %v3855 = vld [vmem:[%s199 + $0x7e8] sm:$0xff]
      %v3856 = vld [vmem:[%s199 + $0x7f0] sm:$0xff]
      %v3857 = vld [vmem:[%s199 + $0x7f8] sm:$0xff]
      %v3858 = vld [vmem:[%s199 + $0x800] sm:$0xff]
      %v3859 = vld [vmem:[%s199 + $0x808] sm:$0xff]
      %v3860 = vld [vmem:[%s199 + $0x810] sm:$0xff]
      %v3861 = vld [vmem:[%s199 + $0x818] sm:$0xff]
      %v3862 = vld [vmem:[%s199 + $0x820] sm:$0xff]
      %v3863 = vld [vmem:[%s199 + $0x828] sm:$0xff]
      %v3864 = vld [vmem:[%s199 + $0x830] sm:$0xff]
      %v3865 = vld [vmem:[%s199 + $0x838] sm:$0xff]
      %v3866 = vld [vmem:[%s199 + $0x840] sm:$0xff]
      %v3867 = vld [vmem:[%s199 + $0x848] sm:$0xff]
      %v3868 = vld [vmem:[%s199 + $0x850] sm:$0xff]
      %v3869 = vld [vmem:[%s199 + $0x858] sm:$0xff]
      %v3870 = vld [vmem:[%s199 + $0x860] sm:$0xff]
      %v3871 = vld [vmem:[%s199 + $0x868] sm:$0xff]
      %v3872 = vld [vmem:[%s199 + $0x870] sm:$0xff]
      %v3873 = vld [vmem:[%s199 + $0x878] sm:$0xff]
      %v3874 = vld [vmem:[%s199 + $0x880] sm:$0xff]
      %v3875 = vld [vmem:[%s199 + $0x888] sm:$0xff]
      %v3876 = vld [vmem:[%s199 + $0x890] sm:$0xff]
      %v3877 = vld [vmem:[%s199 + $0x898] sm:$0xff]
      %v3878 = vld [vmem:[%s199 + $0x8a0] sm:$0xff]
      %v3879 = vld [vmem:[%s199 + $0x8a8] sm:$0xff]
      %v3880 = vld [vmem:[%s199 + $0x8b0] sm:$0xff]
      %v3881 = vld [vmem:[%s199 + $0x8b8] sm:$0xff]
      %v3882 = vld [vmem:[%s199 + $0x8c0] sm:$0xff]
      %v3883 = vld [vmem:[%s199 + $0x8c8] sm:$0xff]
      %v3884 = vld [vmem:[%s199 + $0x8d0] sm:$0xff]
      %v3885 = vld [vmem:[%s199 + $0x8d8] sm:$0xff]
      %v3886 = vld [vmem:[%s199 + $0x8e0] sm:$0xff]
      %v3887 = vld [vmem:[%s199 + $0x8e8] sm:$0xff]
      %v3888 = vld [vmem:[%s199 + $0x8f0] sm:$0xff]
      %v3889 = vld [vmem:[%s199 + $0x8f8] sm:$0xff]
      %v3986 = vunpack.c.l.b16 %v3698
      %v3987 = vunpack.c.h.b16 %v3698
      %v3988 = vunpack.c.l.b16 %v3699
      %v3989 = vunpack.c.h.b16 %v3699
      %v3990 = vunpack.c.l.b16 %v3700
      %v3991 = vunpack.c.h.b16 %v3700
      %v3992 = vunpack.c.l.b16 %v3701
      %v3993 = vunpack.c.h.b16 %v3701
      %v3994 = vunpack.c.l.b16 %v3702
      %v3995 = vunpack.c.h.b16 %v3702
      %v3996 = vunpack.c.l.b16 %v3703
      %v3997 = vunpack.c.h.b16 %v3703
      %v3998 = vunpack.c.l.b16 %v3704
      %v3999 = vunpack.c.h.b16 %v3704
      %v4000 = vunpack.c.l.b16 %v3705
      %v4001 = vunpack.c.h.b16 %v3705
      %v4002 = vunpack.c.l.b16 %v3706
      %v4003 = vunpack.c.h.b16 %v3706
      %v4004 = vunpack.c.l.b16 %v3707
      %v4005 = vunpack.c.h.b16 %v3707
      %v4006 = vunpack.c.l.b16 %v3708
      %v4007 = vunpack.c.h.b16 %v3708
      %v4008 = vunpack.c.l.b16 %v3709
      %v4009 = vunpack.c.h.b16 %v3709
      %v4010 = vunpack.c.l.b16 %v3710
      %v4011 = vunpack.c.h.b16 %v3710
      %v4012 = vunpack.c.l.b16 %v3711
      %v4013 = vunpack.c.h.b16 %v3711
      %v4014 = vunpack.c.l.b16 %v3712
      %v4015 = vunpack.c.h.b16 %v3712
      %v4016 = vunpack.c.l.b16 %v3713
      %v4017 = vunpack.c.h.b16 %v3713
      %v4018 = vunpack.c.l.b16 %v3714
      %v4019 = vunpack.c.h.b16 %v3714
      %v4020 = vunpack.c.l.b16 %v3715
      %v4021 = vunpack.c.h.b16 %v3715
      %v4022 = vunpack.c.l.b16 %v3716
      %v4023 = vunpack.c.h.b16 %v3716
      %v4024 = vunpack.c.l.b16 %v3717
      %v4025 = vunpack.c.h.b16 %v3717
      %v4026 = vunpack.c.l.b16 %v3718
      %v4027 = vunpack.c.h.b16 %v3718
      %v4028 = vunpack.c.l.b16 %v3719
      %v4029 = vunpack.c.h.b16 %v3719
      %v4030 = vunpack.c.l.b16 %v3720
      %v4031 = vunpack.c.h.b16 %v3720
      %v4032 = vunpack.c.l.b16 %v3721
      %v4033 = vunpack.c.h.b16 %v3721
      %v4034 = vunpack.c.l.b16 %v3722
      %v4035 = vunpack.c.h.b16 %v3722
      %v4036 = vunpack.c.l.b16 %v3723
      %v4037 = vunpack.c.h.b16 %v3723
      %v4038 = vunpack.c.l.b16 %v3724
      %v4039 = vunpack.c.h.b16 %v3724
      %v4040 = vunpack.c.l.b16 %v3725
      %v4041 = vunpack.c.h.b16 %v3725
      %v4042 = vunpack.c.l.b16 %v3726
      %v4043 = vunpack.c.h.b16 %v3726
      %v4044 = vunpack.c.l.b16 %v3727
      %v4045 = vunpack.c.h.b16 %v3727
      %v4046 = vunpack.c.l.b16 %v3728
      %v4047 = vunpack.c.h.b16 %v3728
      %v4048 = vunpack.c.l.b16 %v3729
      %v4049 = vunpack.c.h.b16 %v3729
      %v4050 = vunpack.c.l.b16 %v3730
      %v4051 = vunpack.c.h.b16 %v3730
      %v4052 = vunpack.c.l.b16 %v3731
      %v4053 = vunpack.c.h.b16 %v3731
      %v4054 = vunpack.c.l.b16 %v3732
      %v4055 = vunpack.c.h.b16 %v3732
      %v4056 = vunpack.c.l.b16 %v3733
      %v4057 = vunpack.c.h.b16 %v3733
      %v4058 = vunpack.c.l.b16 %v3734
      %v4059 = vunpack.c.h.b16 %v3734
      %v4060 = vunpack.c.l.b16 %v3735
      %v4061 = vunpack.c.h.b16 %v3735
      %v4062 = vunpack.c.l.b16 %v3736
      %v4063 = vunpack.c.h.b16 %v3736
      %v4064 = vunpack.c.l.b16 %v3737
      %v4065 = vunpack.c.h.b16 %v3737
      %v4066 = vunpack.c.l.b16 %v3738
      %v4067 = vunpack.c.h.b16 %v3738
      %v4068 = vunpack.c.l.b16 %v3739
      %v4069 = vunpack.c.h.b16 %v3739
      %v4070 = vunpack.c.l.b16 %v3740
      %v4071 = vunpack.c.h.b16 %v3740
      %v4072 = vunpack.c.l.b16 %v3741
      %v4073 = vunpack.c.h.b16 %v3741
      %v4074 = vunpack.c.l.b16 %v3742
      %v4075 = vunpack.c.h.b16 %v3742
      %v4076 = vunpack.c.l.b16 %v3743
      %v4077 = vunpack.c.h.b16 %v3743
      %v4078 = vunpack.c.l.b16 %v3744
      %v4079 = vunpack.c.h.b16 %v3744
      %v4080 = vunpack.c.l.b16 %v3745
      %v4081 = vunpack.c.h.b16 %v3745
      %v4082 = vunpack.c.l.b16 %v3746
      %v4083 = vunpack.c.h.b16 %v3746
      %v4084 = vunpack.c.l.b16 %v3747
      %v4085 = vunpack.c.h.b16 %v3747
      %v4086 = vunpack.c.l.b16 %v3748
      %v4087 = vunpack.c.h.b16 %v3748
      %v4088 = vunpack.c.l.b16 %v3749
      %v4089 = vunpack.c.h.b16 %v3749
      %v4090 = vunpack.c.l.b16 %v3750
      %v4091 = vunpack.c.h.b16 %v3750
      %v4092 = vunpack.c.l.b16 %v3751
      %v4093 = vunpack.c.h.b16 %v3751
      %v4094 = vunpack.c.l.b16 %v3752
      %v4095 = vunpack.c.h.b16 %v3752
      %v4096 = vunpack.c.l.b16 %v3753
      %v4097 = vunpack.c.h.b16 %v3753
      %v4098 = vunpack.c.l.b16 %v3754
      %v4099 = vunpack.c.h.b16 %v3754
      %v4100 = vunpack.c.l.b16 %v3755
      %v4101 = vunpack.c.h.b16 %v3755
      %v4102 = vunpack.c.l.b16 %v3756
      %v4103 = vunpack.c.h.b16 %v3756
      %v4104 = vunpack.c.l.b16 %v3757
      %v4105 = vunpack.c.h.b16 %v3757
      %v4106 = vunpack.c.l.b16 %v3758
      %v4107 = vunpack.c.h.b16 %v3758
      %v4108 = vunpack.c.l.b16 %v3759
      %v4109 = vunpack.c.h.b16 %v3759
      %v4110 = vunpack.c.l.b16 %v3760
      %v4111 = vunpack.c.h.b16 %v3760
      %v4112 = vunpack.c.l.b16 %v3761
      %v4113 = vunpack.c.h.b16 %v3761
      %v4114 = vunpack.c.l.b16 %v3762
      %v4115 = vunpack.c.h.b16 %v3762
      %v4116 = vunpack.c.l.b16 %v3763
      %v4117 = vunpack.c.h.b16 %v3763
      %v4118 = vunpack.c.l.b16 %v3764
      %v4119 = vunpack.c.h.b16 %v3764
      %v4120 = vunpack.c.l.b16 %v3765
      %v4121 = vunpack.c.h.b16 %v3765
      %v4122 = vunpack.c.l.b16 %v3766
      %v4123 = vunpack.c.h.b16 %v3766
      %v4124 = vunpack.c.l.b16 %v3767
      %v4125 = vunpack.c.h.b16 %v3767
      %v4126 = vunpack.c.l.b16 %v3768
      %v4127 = vunpack.c.h.b16 %v3768
      %v4128 = vunpack.c.l.b16 %v3769
      %v4129 = vunpack.c.h.b16 %v3769
      %v4130 = vunpack.c.l.b16 %v3770
      %v4131 = vunpack.c.h.b16 %v3770
      %v4132 = vunpack.c.l.b16 %v3771
      %v4133 = vunpack.c.h.b16 %v3771
      %v4134 = vunpack.c.l.b16 %v3772
      %v4135 = vunpack.c.h.b16 %v3772
      %v4136 = vunpack.c.l.b16 %v3773
      %v4137 = vunpack.c.h.b16 %v3773
      %v4138 = vunpack.c.l.b16 %v3774
      %v4139 = vunpack.c.h.b16 %v3774
      %v4140 = vunpack.c.l.b16 %v3775
      %v4141 = vunpack.c.h.b16 %v3775
      %v4142 = vunpack.c.l.b16 %v3776
      %v4143 = vunpack.c.h.b16 %v3776
      %v4144 = vunpack.c.l.b16 %v3777
      %v4145 = vunpack.c.h.b16 %v3777
      %v4146 = vunpack.c.l.b16 %v3778
      %v4147 = vunpack.c.h.b16 %v3778
      %v4148 = vunpack.c.l.b16 %v3779
      %v4149 = vunpack.c.h.b16 %v3779
      %v4150 = vunpack.c.l.b16 %v3780
      %v4151 = vunpack.c.h.b16 %v3780
      %v4152 = vunpack.c.l.b16 %v3781
      %v4153 = vunpack.c.h.b16 %v3781
      %v4154 = vunpack.c.l.b16 %v3782
      %v4155 = vunpack.c.h.b16 %v3782
      %v4156 = vunpack.c.l.b16 %v3783
      %v4157 = vunpack.c.h.b16 %v3783
      %v4158 = vunpack.c.l.b16 %v3784
      %v4159 = vunpack.c.h.b16 %v3784
      %v4160 = vunpack.c.l.b16 %v3785
      %v4161 = vunpack.c.h.b16 %v3785
      %v4162 = vunpack.c.l.b16 %v3786
      %v4163 = vunpack.c.h.b16 %v3786
      %v4164 = vunpack.c.l.b16 %v3787
      %v4165 = vunpack.c.h.b16 %v3787
      %v4166 = vunpack.c.l.b16 %v3788
      %v4167 = vunpack.c.h.b16 %v3788
      %v4168 = vunpack.c.l.b16 %v3789
      %v4169 = vunpack.c.h.b16 %v3789
      %v4170 = vunpack.c.l.b16 %v3790
      %v4171 = vunpack.c.h.b16 %v3790
      %v4172 = vunpack.c.l.b16 %v3791
      %v4173 = vunpack.c.h.b16 %v3791
      %v4174 = vunpack.c.l.b16 %v3792
      %v4175 = vunpack.c.h.b16 %v3792
      %v4176 = vunpack.c.l.b16 %v3793
      %v4177 = vunpack.c.h.b16 %v3793
      %v4178 = vpack.c.b16 %v3992, %v3986
      %v4179 = vpack.c.b16 %v3993, %v3987
      %v4180 = vpack.c.b16 %v3994, %v3988
      %v4181 = vpack.c.b16 %v3995, %v3989
      %v4182 = vpack.c.b16 %v3996, %v3990
      %v4183 = vpack.c.b16 %v3997, %v3991
      %v4184 = vpack.c.b16 %v4004, %v3998
      %v4185 = vpack.c.b16 %v4005, %v3999
      %v4186 = vpack.c.b16 %v4006, %v4000
      %v4187 = vpack.c.b16 %v4007, %v4001
      %v4188 = vpack.c.b16 %v4008, %v4002
      %v4189 = vpack.c.b16 %v4009, %v4003
      %v4190 = vpack.c.b16 %v4016, %v4010
      %v4191 = vpack.c.b16 %v4017, %v4011
      %v4192 = vpack.c.b16 %v4018, %v4012
      %v4193 = vpack.c.b16 %v4019, %v4013
      %v4194 = vpack.c.b16 %v4020, %v4014
      %v4195 = vpack.c.b16 %v4021, %v4015
      %v4196 = vpack.c.b16 %v4028, %v4022
      %v4197 = vpack.c.b16 %v4029, %v4023
      %v4198 = vpack.c.b16 %v4030, %v4024
      %v4199 = vpack.c.b16 %v4031, %v4025
      %v4200 = vpack.c.b16 %v4032, %v4026
      %v4201 = vpack.c.b16 %v4033, %v4027
      %v4202 = vpack.c.b16 %v4040, %v4034
      %v4203 = vpack.c.b16 %v4041, %v4035
      %v4204 = vpack.c.b16 %v4042, %v4036
      %v4205 = vpack.c.b16 %v4043, %v4037
      %v4206 = vpack.c.b16 %v4044, %v4038
      %v4207 = vpack.c.b16 %v4045, %v4039
      %v4208 = vpack.c.b16 %v4052, %v4046
      %v4209 = vpack.c.b16 %v4053, %v4047
      %v4210 = vpack.c.b16 %v4054, %v4048
      %v4211 = vpack.c.b16 %v4055, %v4049
      %v4212 = vpack.c.b16 %v4056, %v4050
      %v4213 = vpack.c.b16 %v4057, %v4051
      %v4214 = vpack.c.b16 %v4064, %v4058
      %v4215 = vpack.c.b16 %v4065, %v4059
      %v4216 = vpack.c.b16 %v4066, %v4060
      %v4217 = vpack.c.b16 %v4067, %v4061
      %v4218 = vpack.c.b16 %v4068, %v4062
      %v4219 = vpack.c.b16 %v4069, %v4063
      %v4220 = vpack.c.b16 %v4076, %v4070
      %v4221 = vpack.c.b16 %v4077, %v4071
      %v4222 = vpack.c.b16 %v4078, %v4072
      %v4223 = vpack.c.b16 %v4079, %v4073
      %v4224 = vpack.c.b16 %v4080, %v4074
      %v4225 = vpack.c.b16 %v4081, %v4075
      %v4226 = vpack.c.b16 %v4088, %v4082
      %v4227 = vpack.c.b16 %v4089, %v4083
      %v4228 = vpack.c.b16 %v4090, %v4084
      %v4229 = vpack.c.b16 %v4091, %v4085
      %v4230 = vpack.c.b16 %v4092, %v4086
      %v4231 = vpack.c.b16 %v4093, %v4087
      %v4232 = vpack.c.b16 %v4100, %v4094
      %v4233 = vpack.c.b16 %v4101, %v4095
      %v4234 = vpack.c.b16 %v4102, %v4096
      %v4235 = vpack.c.b16 %v4103, %v4097
      %v4236 = vpack.c.b16 %v4104, %v4098
      %v4237 = vpack.c.b16 %v4105, %v4099
      %v4238 = vpack.c.b16 %v4112, %v4106
      %v4239 = vpack.c.b16 %v4113, %v4107
      %v4240 = vpack.c.b16 %v4114, %v4108
      %v4241 = vpack.c.b16 %v4115, %v4109
      %v4242 = vpack.c.b16 %v4116, %v4110
      %v4243 = vpack.c.b16 %v4117, %v4111
      %v4244 = vpack.c.b16 %v4124, %v4118
      %v4245 = vpack.c.b16 %v4125, %v4119
      %v4246 = vpack.c.b16 %v4126, %v4120
      %v4247 = vpack.c.b16 %v4127, %v4121
      %v4248 = vpack.c.b16 %v4128, %v4122
      %v4249 = vpack.c.b16 %v4129, %v4123
      %v4250 = vpack.c.b16 %v4136, %v4130
      %v4251 = vpack.c.b16 %v4137, %v4131
      %v4252 = vpack.c.b16 %v4138, %v4132
      %v4253 = vpack.c.b16 %v4139, %v4133
      %v4254 = vpack.c.b16 %v4140, %v4134
      %v4255 = vpack.c.b16 %v4141, %v4135
      %v4256 = vpack.c.b16 %v4148, %v4142
      %v4257 = vpack.c.b16 %v4149, %v4143
      %v4258 = vpack.c.b16 %v4150, %v4144
      %v4259 = vpack.c.b16 %v4151, %v4145
      %v4260 = vpack.c.b16 %v4152, %v4146
      %v4261 = vpack.c.b16 %v4153, %v4147
      %v4262 = vpack.c.b16 %v4160, %v4154
      %v4263 = vpack.c.b16 %v4161, %v4155
      %v4264 = vpack.c.b16 %v4162, %v4156
      %v4265 = vpack.c.b16 %v4163, %v4157
      %v4266 = vpack.c.b16 %v4164, %v4158
      %v4267 = vpack.c.b16 %v4165, %v4159
      %v4268 = vpack.c.b16 %v4172, %v4166
      %v4269 = vpack.c.b16 %v4173, %v4167
      %v4270 = vpack.c.b16 %v4174, %v4168
      %v4271 = vpack.c.b16 %v4175, %v4169
      %v4272 = vpack.c.b16 %v4176, %v4170
      %v4273 = vpack.c.b16 %v4177, %v4171
      %v4466 = vunpack.c.l.b16 %v3794
      %v4467 = vunpack.c.h.b16 %v3794
      %v4468 = vunpack.c.l.b16 %v3795
      %v4469 = vunpack.c.h.b16 %v3795
      %v4470 = vunpack.c.l.b16 %v3796
      %v4471 = vunpack.c.h.b16 %v3796
      %v4472 = vunpack.c.l.b16 %v3797
      %v4473 = vunpack.c.h.b16 %v3797
      %v4474 = vunpack.c.l.b16 %v3798
      %v4475 = vunpack.c.h.b16 %v3798
      %v4476 = vunpack.c.l.b16 %v3799
      %v4477 = vunpack.c.h.b16 %v3799
      %v4478 = vunpack.c.l.b16 %v3800
      %v4479 = vunpack.c.h.b16 %v3800
      %v4480 = vunpack.c.l.b16 %v3801
      %v4481 = vunpack.c.h.b16 %v3801
      %v4482 = vunpack.c.l.b16 %v3802
      %v4483 = vunpack.c.h.b16 %v3802
      %v4484 = vunpack.c.l.b16 %v3803
      %v4485 = vunpack.c.h.b16 %v3803
      %v4486 = vunpack.c.l.b16 %v3804
      %v4487 = vunpack.c.h.b16 %v3804
      %v4488 = vunpack.c.l.b16 %v3805
      %v4489 = vunpack.c.h.b16 %v3805
      %v4490 = vunpack.c.l.b16 %v3806
      %v4491 = vunpack.c.h.b16 %v3806
      %v4492 = vunpack.c.l.b16 %v3807
      %v4493 = vunpack.c.h.b16 %v3807
      %v4494 = vunpack.c.l.b16 %v3808
      %v4495 = vunpack.c.h.b16 %v3808
      %v4496 = vunpack.c.l.b16 %v3809
      %v4497 = vunpack.c.h.b16 %v3809
      %v4498 = vunpack.c.l.b16 %v3810
      %v4499 = vunpack.c.h.b16 %v3810
      %v4500 = vunpack.c.l.b16 %v3811
      %v4501 = vunpack.c.h.b16 %v3811
      %v4502 = vunpack.c.l.b16 %v3812
      %v4503 = vunpack.c.h.b16 %v3812
      %v4504 = vunpack.c.l.b16 %v3813
      %v4505 = vunpack.c.h.b16 %v3813
      %v4506 = vunpack.c.l.b16 %v3814
      %v4507 = vunpack.c.h.b16 %v3814
      %v4508 = vunpack.c.l.b16 %v3815
      %v4509 = vunpack.c.h.b16 %v3815
      %v4510 = vunpack.c.l.b16 %v3816
      %v4511 = vunpack.c.h.b16 %v3816
      %v4512 = vunpack.c.l.b16 %v3817
      %v4513 = vunpack.c.h.b16 %v3817
      %v4514 = vunpack.c.l.b16 %v3818
      %v4515 = vunpack.c.h.b16 %v3818
      %v4516 = vunpack.c.l.b16 %v3819
      %v4517 = vunpack.c.h.b16 %v3819
      %v4518 = vunpack.c.l.b16 %v3820
      %v4519 = vunpack.c.h.b16 %v3820
      %v4520 = vunpack.c.l.b16 %v3821
      %v4521 = vunpack.c.h.b16 %v3821
      %v4522 = vunpack.c.l.b16 %v3822
      %v4523 = vunpack.c.h.b16 %v3822
      %v4524 = vunpack.c.l.b16 %v3823
      %v4525 = vunpack.c.h.b16 %v3823
      %v4526 = vunpack.c.l.b16 %v3824
      %v4527 = vunpack.c.h.b16 %v3824
      %v4528 = vunpack.c.l.b16 %v3825
      %v4529 = vunpack.c.h.b16 %v3825
      %v4530 = vunpack.c.l.b16 %v3826
      %v4531 = vunpack.c.h.b16 %v3826
      %v4532 = vunpack.c.l.b16 %v3827
      %v4533 = vunpack.c.h.b16 %v3827
      %v4534 = vunpack.c.l.b16 %v3828
      %v4535 = vunpack.c.h.b16 %v3828
      %v4536 = vunpack.c.l.b16 %v3829
      %v4537 = vunpack.c.h.b16 %v3829
      %v4538 = vunpack.c.l.b16 %v3830
      %v4539 = vunpack.c.h.b16 %v3830
      %v4540 = vunpack.c.l.b16 %v3831
      %v4541 = vunpack.c.h.b16 %v3831
      %v4542 = vunpack.c.l.b16 %v3832
      %v4543 = vunpack.c.h.b16 %v3832
      %v4544 = vunpack.c.l.b16 %v3833
      %v4545 = vunpack.c.h.b16 %v3833
      %v4546 = vunpack.c.l.b16 %v3834
      %v4547 = vunpack.c.h.b16 %v3834
      %v4548 = vunpack.c.l.b16 %v3835
      %v4549 = vunpack.c.h.b16 %v3835
      %v4550 = vunpack.c.l.b16 %v3836
      %v4551 = vunpack.c.h.b16 %v3836
      %v4552 = vunpack.c.l.b16 %v3837
      %v4553 = vunpack.c.h.b16 %v3837
      %v4554 = vunpack.c.l.b16 %v3838
      %v4555 = vunpack.c.h.b16 %v3838
      %v4556 = vunpack.c.l.b16 %v3839
      %v4557 = vunpack.c.h.b16 %v3839
      %v4558 = vunpack.c.l.b16 %v3840
      %v4559 = vunpack.c.h.b16 %v3840
      %v4560 = vunpack.c.l.b16 %v3841
      %v4561 = vunpack.c.h.b16 %v3841
      %v4562 = vunpack.c.l.b16 %v3842
      %v4563 = vunpack.c.h.b16 %v3842
      %v4564 = vunpack.c.l.b16 %v3843
      %v4565 = vunpack.c.h.b16 %v3843
      %v4566 = vunpack.c.l.b16 %v3844
      %v4567 = vunpack.c.h.b16 %v3844
      %v4568 = vunpack.c.l.b16 %v3845
      %v4569 = vunpack.c.h.b16 %v3845
      %v4570 = vunpack.c.l.b16 %v3846
      %v4571 = vunpack.c.h.b16 %v3846
      %v4572 = vunpack.c.l.b16 %v3847
      %v4573 = vunpack.c.h.b16 %v3847
      %v4574 = vunpack.c.l.b16 %v3848
      %v4575 = vunpack.c.h.b16 %v3848
      %v4576 = vunpack.c.l.b16 %v3849
      %v4577 = vunpack.c.h.b16 %v3849
      %v4578 = vunpack.c.l.b16 %v3850
      %v4579 = vunpack.c.h.b16 %v3850
      %v4580 = vunpack.c.l.b16 %v3851
      %v4581 = vunpack.c.h.b16 %v3851
      %v4582 = vunpack.c.l.b16 %v3852
      %v4583 = vunpack.c.h.b16 %v3852
      %v4584 = vunpack.c.l.b16 %v3853
      %v4585 = vunpack.c.h.b16 %v3853
      %v4586 = vunpack.c.l.b16 %v3854
      %v4587 = vunpack.c.h.b16 %v3854
      %v4588 = vunpack.c.l.b16 %v3855
      %v4589 = vunpack.c.h.b16 %v3855
      %v4590 = vunpack.c.l.b16 %v3856
      %v4591 = vunpack.c.h.b16 %v3856
      %v4592 = vunpack.c.l.b16 %v3857
      %v4593 = vunpack.c.h.b16 %v3857
      %v4594 = vunpack.c.l.b16 %v3858
      %v4595 = vunpack.c.h.b16 %v3858
      %v4596 = vunpack.c.l.b16 %v3859
      %v4597 = vunpack.c.h.b16 %v3859
      %v4598 = vunpack.c.l.b16 %v3860
      %v4599 = vunpack.c.h.b16 %v3860
      %v4600 = vunpack.c.l.b16 %v3861
      %v4601 = vunpack.c.h.b16 %v3861
      %v4602 = vunpack.c.l.b16 %v3862
      %v4603 = vunpack.c.h.b16 %v3862
      %v4604 = vunpack.c.l.b16 %v3863
      %v4605 = vunpack.c.h.b16 %v3863
      %v4606 = vunpack.c.l.b16 %v3864
      %v4607 = vunpack.c.h.b16 %v3864
      %v4608 = vunpack.c.l.b16 %v3865
      %v4609 = vunpack.c.h.b16 %v3865
      %v4610 = vunpack.c.l.b16 %v3866
      %v4611 = vunpack.c.h.b16 %v3866
      %v4612 = vunpack.c.l.b16 %v3867
      %v4613 = vunpack.c.h.b16 %v3867
      %v4614 = vunpack.c.l.b16 %v3868
      %v4615 = vunpack.c.h.b16 %v3868
      %v4616 = vunpack.c.l.b16 %v3869
      %v4617 = vunpack.c.h.b16 %v3869
      %v4618 = vunpack.c.l.b16 %v3870
      %v4619 = vunpack.c.h.b16 %v3870
      %v4620 = vunpack.c.l.b16 %v3871
      %v4621 = vunpack.c.h.b16 %v3871
      %v4622 = vunpack.c.l.b16 %v3872
      %v4623 = vunpack.c.h.b16 %v3872
      %v4624 = vunpack.c.l.b16 %v3873
      %v4625 = vunpack.c.h.b16 %v3873
      %v4626 = vunpack.c.l.b16 %v3874
      %v4627 = vunpack.c.h.b16 %v3874
      %v4628 = vunpack.c.l.b16 %v3875
      %v4629 = vunpack.c.h.b16 %v3875
      %v4630 = vunpack.c.l.b16 %v3876
      %v4631 = vunpack.c.h.b16 %v3876
      %v4632 = vunpack.c.l.b16 %v3877
      %v4633 = vunpack.c.h.b16 %v3877
      %v4634 = vunpack.c.l.b16 %v3878
      %v4635 = vunpack.c.h.b16 %v3878
      %v4636 = vunpack.c.l.b16 %v3879
      %v4637 = vunpack.c.h.b16 %v3879
      %v4638 = vunpack.c.l.b16 %v3880
      %v4639 = vunpack.c.h.b16 %v3880
      %v4640 = vunpack.c.l.b16 %v3881
      %v4641 = vunpack.c.h.b16 %v3881
      %v4642 = vunpack.c.l.b16 %v3882
      %v4643 = vunpack.c.h.b16 %v3882
      %v4644 = vunpack.c.l.b16 %v3883
      %v4645 = vunpack.c.h.b16 %v3883
      %v4646 = vunpack.c.l.b16 %v3884
      %v4647 = vunpack.c.h.b16 %v3884
      %v4648 = vunpack.c.l.b16 %v3885
      %v4649 = vunpack.c.h.b16 %v3885
      %v4650 = vunpack.c.l.b16 %v3886
      %v4651 = vunpack.c.h.b16 %v3886
      %v4652 = vunpack.c.l.b16 %v3887
      %v4653 = vunpack.c.h.b16 %v3887
      %v4654 = vunpack.c.l.b16 %v3888
      %v4655 = vunpack.c.h.b16 %v3888
      %v4656 = vunpack.c.l.b16 %v3889
      %v4657 = vunpack.c.h.b16 %v3889
      %v4658 = vpack.c.b16 %v4468, %v4466
      %v4659 = vpack.c.b16 %v4469, %v4467
      %v4660 = vpack.c.b16 %v4472, %v4470
      %v4661 = vpack.c.b16 %v4473, %v4471
      %v4662 = vpack.c.b16 %v4476, %v4474
      %v4663 = vpack.c.b16 %v4477, %v4475
      %v4664 = vpack.c.b16 %v4480, %v4478
      %v4665 = vpack.c.b16 %v4481, %v4479
      %v4666 = vpack.c.b16 %v4484, %v4482
      %v4667 = vpack.c.b16 %v4485, %v4483
      %v4668 = vpack.c.b16 %v4488, %v4486
      %v4669 = vpack.c.b16 %v4489, %v4487
      %v4670 = vpack.c.b16 %v4492, %v4490
      %v4671 = vpack.c.b16 %v4493, %v4491
      %v4672 = vpack.c.b16 %v4496, %v4494
      %v4673 = vpack.c.b16 %v4497, %v4495
      %v4674 = vpack.c.b16 %v4500, %v4498
      %v4675 = vpack.c.b16 %v4501, %v4499
      %v4676 = vpack.c.b16 %v4504, %v4502
      %v4677 = vpack.c.b16 %v4505, %v4503
      %v4678 = vpack.c.b16 %v4508, %v4506
      %v4679 = vpack.c.b16 %v4509, %v4507
      %v4680 = vpack.c.b16 %v4512, %v4510
      %v4681 = vpack.c.b16 %v4513, %v4511
      %v4682 = vpack.c.b16 %v4516, %v4514
      %v4683 = vpack.c.b16 %v4517, %v4515
      %v4684 = vpack.c.b16 %v4520, %v4518
      %v4685 = vpack.c.b16 %v4521, %v4519
      %v4686 = vpack.c.b16 %v4524, %v4522
      %v4687 = vpack.c.b16 %v4525, %v4523
      %v4688 = vpack.c.b16 %v4528, %v4526
      %v4689 = vpack.c.b16 %v4529, %v4527
      %v4690 = vpack.c.b16 %v4532, %v4530
      %v4691 = vpack.c.b16 %v4533, %v4531
      %v4692 = vpack.c.b16 %v4536, %v4534
      %v4693 = vpack.c.b16 %v4537, %v4535
      %v4694 = vpack.c.b16 %v4540, %v4538
      %v4695 = vpack.c.b16 %v4541, %v4539
      %v4696 = vpack.c.b16 %v4544, %v4542
      %v4697 = vpack.c.b16 %v4545, %v4543
      %v4698 = vpack.c.b16 %v4548, %v4546
      %v4699 = vpack.c.b16 %v4549, %v4547
      %v4700 = vpack.c.b16 %v4552, %v4550
      %v4701 = vpack.c.b16 %v4553, %v4551
      %v4702 = vpack.c.b16 %v4556, %v4554
      %v4703 = vpack.c.b16 %v4557, %v4555
      %v4704 = vpack.c.b16 %v4560, %v4558
      %v4705 = vpack.c.b16 %v4561, %v4559
      %v4706 = vpack.c.b16 %v4564, %v4562
      %v4707 = vpack.c.b16 %v4565, %v4563
      %v4708 = vpack.c.b16 %v4568, %v4566
      %v4709 = vpack.c.b16 %v4569, %v4567
      %v4710 = vpack.c.b16 %v4572, %v4570
      %v4711 = vpack.c.b16 %v4573, %v4571
      %v4712 = vpack.c.b16 %v4576, %v4574
      %v4713 = vpack.c.b16 %v4577, %v4575
      %v4714 = vpack.c.b16 %v4580, %v4578
      %v4715 = vpack.c.b16 %v4581, %v4579
      %v4716 = vpack.c.b16 %v4584, %v4582
      %v4717 = vpack.c.b16 %v4585, %v4583
      %v4718 = vpack.c.b16 %v4588, %v4586
      %v4719 = vpack.c.b16 %v4589, %v4587
      %v4720 = vpack.c.b16 %v4592, %v4590
      %v4721 = vpack.c.b16 %v4593, %v4591
      %v4722 = vpack.c.b16 %v4596, %v4594
      %v4723 = vpack.c.b16 %v4597, %v4595
      %v4724 = vpack.c.b16 %v4600, %v4598
      %v4725 = vpack.c.b16 %v4601, %v4599
      %v4726 = vpack.c.b16 %v4604, %v4602
      %v4727 = vpack.c.b16 %v4605, %v4603
      %v4728 = vpack.c.b16 %v4608, %v4606
      %v4729 = vpack.c.b16 %v4609, %v4607
      %v4730 = vpack.c.b16 %v4612, %v4610
      %v4731 = vpack.c.b16 %v4613, %v4611
      %v4732 = vpack.c.b16 %v4616, %v4614
      %v4733 = vpack.c.b16 %v4617, %v4615
      %v4734 = vpack.c.b16 %v4620, %v4618
      %v4735 = vpack.c.b16 %v4621, %v4619
      %v4736 = vpack.c.b16 %v4624, %v4622
      %v4737 = vpack.c.b16 %v4625, %v4623
      %v4738 = vpack.c.b16 %v4628, %v4626
      %v4739 = vpack.c.b16 %v4629, %v4627
      %v4740 = vpack.c.b16 %v4632, %v4630
      %v4741 = vpack.c.b16 %v4633, %v4631
      %v4742 = vpack.c.b16 %v4636, %v4634
      %v4743 = vpack.c.b16 %v4637, %v4635
      %v4744 = vpack.c.b16 %v4640, %v4638
      %v4745 = vpack.c.b16 %v4641, %v4639
      %v4746 = vpack.c.b16 %v4644, %v4642
      %v4747 = vpack.c.b16 %v4645, %v4643
      %v4748 = vpack.c.b16 %v4648, %v4646
      %v4749 = vpack.c.b16 %v4649, %v4647
      %v4750 = vpack.c.b16 %v4652, %v4650
      %v4751 = vpack.c.b16 %v4653, %v4651
      %v4752 = vpack.c.b16 %v4656, %v4654
      %v4753 = vpack.c.b16 %v4657, %v4655
      %4850 = vmatprep.subr.bf16.mxu0 %v4659
      %4851 = vmatpush1.bf16.msra.mxu0 %v4658
      %4852 = vmatprep.subr.bf16.mxu0 %v4661
      %4853 = vmatpush1.bf16.msra.mxu0 %v4660
      %4854 = vmatprep.subr.bf16.mxu0 %v4663
      %4855 = vmatpush1.bf16.msra.mxu0 %v4662
      %4856 = vmatprep.subr.bf16.mxu0 %v4665
      %4857 = vmatpush1.bf16.msra.mxu0 %v4664
      %4858 = vmatprep.subr.bf16.mxu0 %v4667
      %4859 = vmatpush1.bf16.msra.mxu0 %v4666
      %4860 = vmatprep.subr.bf16.mxu0 %v4669
      %4861 = vmatpush1.bf16.msra.mxu0 %v4668
      %4862 = vmatprep.subr.bf16.mxu0 %v4671
      %4863 = vmatpush1.bf16.msra.mxu0 %v4670
      %4864 = vmatprep.subr.bf16.mxu0 %v4673
      %4865 = vmatpush1.bf16.msra.mxu0 %v4672
      %4866 = vmatprep.subr.bf16.mxu0 %v4675
      %4867 = vmatpush1.bf16.msra.mxu0 %v4674
      %4868 = vmatprep.subr.bf16.mxu0 %v4677
      %4869 = vmatpush1.bf16.msra.mxu0 %v4676
      %4870 = vmatprep.subr.bf16.mxu0 %v4679
      %4871 = vmatpush1.bf16.msra.mxu0 %v4678
      %4872 = vmatprep.subr.bf16.mxu0 %v4681
      %4873 = vmatpush1.bf16.msra.mxu0 %v4680
      %4874 = vmatprep.subr.bf16.mxu0 %v4683
      %4875 = vmatpush1.bf16.msra.mxu0 %v4682
      %4876 = vmatprep.subr.bf16.mxu0 %v4685
      %4877 = vmatpush1.bf16.msra.mxu0 %v4684
      %4878 = vmatprep.subr.bf16.mxu0 %v4687
      %4879 = vmatpush1.bf16.msra.mxu0 %v4686
      %4880 = vmatprep.subr.bf16.mxu0 %v4689
      %4881 = vmatpush1.bf16.msra.mxu0 %v4688
      %4882 = vmatprep.mubr.bf16.mxu0 %v4179
      %4883 = vmatmul.mubr.bf16.gmra.mrb[0].mxu0 %v4178
      %v4884 = vpop.f32.mrb[0].mxu0
      %v4885 = vadd.f32 0.0, %v4884
      %v4886 = vpop.f32.mrb[0].mxu0
      %v4887 = vadd.f32 0.0, %v4886
      %v4888 = vpop.f32.mrb[0].mxu0
      %v4889 = vadd.f32 0.0, %v4888
      %v4890 = vpop.f32.mrb[0].mxu0
      %v4891 = vadd.f32 0.0, %v4890
      %4892 = vmatprep.mubr.bf16.mxu0 %v4185
      %4893 = vmatmul.mubr.bf16.gmra.mrb[0].mxu0 %v4184
      %v4894 = vpop.f32.mrb[0].mxu0
      %v4895 = vadd.f32 0.0, %v4894
      %v4896 = vpop.f32.mrb[0].mxu0
      %v4897 = vadd.f32 0.0, %v4896
      %v4898 = vpop.f32.mrb[0].mxu0
      %v4899 = vadd.f32 0.0, %v4898
      %v4900 = vpop.f32.mrb[0].mxu0
      %v4901 = vadd.f32 0.0, %v4900
      %4902 = vmatprep.mubr.bf16.mxu0 %v4191
      %4903 = vmatmul.mubr.bf16.gmra.mrb[0].mxu0 %v4190
      %v4904 = vpop.f32.mrb[0].mxu0
      %v4905 = vadd.f32 0.0, %v4904
      %v4906 = vpop.f32.mrb[0].mxu0
      %v4907 = vadd.f32 0.0, %v4906
      %v4908 = vpop.f32.mrb[0].mxu0
      %v4909 = vadd.f32 0.0, %v4908
      %v4910 = vpop.f32.mrb[0].mxu0
      %v4911 = vadd.f32 0.0, %v4910
      %4912 = vmatprep.mubr.bf16.mxu0 %v4197
      %4913 = vmatmul.mubr.bf16.gmra.mrb[0].mxu0 %v4196
      %v4914 = vpop.f32.mrb[0].mxu0
      %v4915 = vadd.f32 0.0, %v4914
      %v4916 = vpop.f32.mrb[0].mxu0
      %v4917 = vadd.f32 0.0, %v4916
      %v4918 = vpop.f32.mrb[0].mxu0
      %v4919 = vadd.f32 0.0, %v4918
      %v4920 = vpop.f32.mrb[0].mxu0
      %v4921 = vadd.f32 0.0, %v4920
      %4922 = vmatprep.mubr.bf16.mxu0 %v4203
      %4923 = vmatmul.mubr.bf16.gmra.mrb[0].mxu0 %v4202
      %v4924 = vpop.f32.mrb[0].mxu0
      %v4925 = vadd.f32 0.0, %v4924
      %v4926 = vpop.f32.mrb[0].mxu0
      %v4927 = vadd.f32 0.0, %v4926
      %v4928 = vpop.f32.mrb[0].mxu0
      %v4929 = vadd.f32 0.0, %v4928
      %v4930 = vpop.f32.mrb[0].mxu0
      %v4931 = vadd.f32 0.0, %v4930
      %4932 = vmatprep.mubr.bf16.mxu0 %v4209
      %4933 = vmatmul.mubr.bf16.gmra.mrb[0].mxu0 %v4208
      %v4934 = vpop.f32.mrb[0].mxu0
      %v4935 = vadd.f32 0.0, %v4934
      %v4936 = vpop.f32.mrb[0].mxu0
      %v4937 = vadd.f32 0.0, %v4936
      %v4938 = vpop.f32.mrb[0].mxu0
      %v4939 = vadd.f32 0.0, %v4938
      %v4940 = vpop.f32.mrb[0].mxu0
      %v4941 = vadd.f32 0.0, %v4940
      %4942 = vmatprep.mubr.bf16.mxu0 %v4215
      %4943 = vmatmul.mubr.bf16.gmra.mrb[0].mxu0 %v4214
      %v4944 = vpop.f32.mrb[0].mxu0
      %v4945 = vadd.f32 0.0, %v4944
      %v4946 = vpop.f32.mrb[0].mxu0
      %v4947 = vadd.f32 0.0, %v4946
      %v4948 = vpop.f32.mrb[0].mxu0
      %v4949 = vadd.f32 0.0, %v4948
      %v4950 = vpop.f32.mrb[0].mxu0
      %v4951 = vadd.f32 0.0, %v4950
      %4952 = vmatprep.mubr.bf16.mxu0 %v4221
      %4953 = vmatmul.mubr.bf16.gmra.mrb[0].mxu0 %v4220
      %v4954 = vpop.f32.mrb[0].mxu0
      %v4955 = vadd.f32 0.0, %v4954
      %v4956 = vpop.f32.mrb[0].mxu0
      %v4957 = vadd.f32 0.0, %v4956
      %v4958 = vpop.f32.mrb[0].mxu0
      %v4959 = vadd.f32 0.0, %v4958
      %v4960 = vpop.f32.mrb[0].mxu0
      %v4961 = vadd.f32 0.0, %v4960
      %4962 = vmatprep.mubr.bf16.mxu0 %v4227
      %4963 = vmatmul.mubr.bf16.gmra.mrb[0].mxu0 %v4226
      %v4964 = vpop.f32.mrb[0].mxu0
      %v4965 = vadd.f32 0.0, %v4964
      %v4966 = vpop.f32.mrb[0].mxu0
      %v4967 = vadd.f32 0.0, %v4966
      %v4968 = vpop.f32.mrb[0].mxu0
      %v4969 = vadd.f32 0.0, %v4968
      %v4970 = vpop.f32.mrb[0].mxu0
      %v4971 = vadd.f32 0.0, %v4970
      %4972 = vmatprep.mubr.bf16.mxu0 %v4233
      %4973 = vmatmul.mubr.bf16.gmra.mrb[0].mxu0 %v4232
      %v4974 = vpop.f32.mrb[0].mxu0
      %v4975 = vadd.f32 0.0, %v4974
      %v4976 = vpop.f32.mrb[0].mxu0
      %v4977 = vadd.f32 0.0, %v4976
      %v4978 = vpop.f32.mrb[0].mxu0
      %v4979 = vadd.f32 0.0, %v4978
      %v4980 = vpop.f32.mrb[0].mxu0
      %v4981 = vadd.f32 0.0, %v4980
      %4982 = vmatprep.mubr.bf16.mxu0 %v4239
      %4983 = vmatmul.mubr.bf16.gmra.mrb[0].mxu0 %v4238
      %v4984 = vpop.f32.mrb[0].mxu0
      %v4985 = vadd.f32 0.0, %v4984
      %v4986 = vpop.f32.mrb[0].mxu0
      %v4987 = vadd.f32 0.0, %v4986
      %v4988 = vpop.f32.mrb[0].mxu0
      %v4989 = vadd.f32 0.0, %v4988
      %v4990 = vpop.f32.mrb[0].mxu0
      %v4991 = vadd.f32 0.0, %v4990
      %4992 = vmatprep.mubr.bf16.mxu0 %v4245
      %4993 = vmatmul.mubr.bf16.gmra.mrb[0].mxu0 %v4244
      %v4994 = vpop.f32.mrb[0].mxu0
      %v4995 = vadd.f32 0.0, %v4994
      %v4996 = vpop.f32.mrb[0].mxu0
      %v4997 = vadd.f32 0.0, %v4996
      %v4998 = vpop.f32.mrb[0].mxu0
      %v4999 = vadd.f32 0.0, %v4998
      %v5000 = vpop.f32.mrb[0].mxu0
      %v5001 = vadd.f32 0.0, %v5000
      %5002 = vmatprep.mubr.bf16.mxu0 %v4251
      %5003 = vmatmul.mubr.bf16.gmra.mrb[0].mxu0 %v4250
      %v5004 = vpop.f32.mrb[0].mxu0
      %v5005 = vadd.f32 0.0, %v5004
      %v5006 = vpop.f32.mrb[0].mxu0
      %v5007 = vadd.f32 0.0, %v5006
      %v5008 = vpop.f32.mrb[0].mxu0
      %v5009 = vadd.f32 0.0, %v5008
      %v5010 = vpop.f32.mrb[0].mxu0
      %v5011 = vadd.f32 0.0, %v5010
      %5012 = vmatprep.mubr.bf16.mxu0 %v4257
      %5013 = vmatmul.mubr.bf16.gmra.mrb[0].mxu0 %v4256
      %v5014 = vpop.f32.mrb[0].mxu0
      %v5015 = vadd.f32 0.0, %v5014
      %v5016 = vpop.f32.mrb[0].mxu0
      %v5017 = vadd.f32 0.0, %v5016
      %v5018 = vpop.f32.mrb[0].mxu0
      %v5019 = vadd.f32 0.0, %v5018
      %v5020 = vpop.f32.mrb[0].mxu0
      %v5021 = vadd.f32 0.0, %v5020
      %5022 = vmatprep.mubr.bf16.mxu0 %v4263
      %5023 = vmatmul.mubr.bf16.gmra.mrb[0].mxu0 %v4262
      %v5024 = vpop.f32.mrb[0].mxu0
      %v5025 = vadd.f32 0.0, %v5024
      %v5026 = vpop.f32.mrb[0].mxu0
      %v5027 = vadd.f32 0.0, %v5026
      %v5028 = vpop.f32.mrb[0].mxu0
      %v5029 = vadd.f32 0.0, %v5028
      %v5030 = vpop.f32.mrb[0].mxu0
      %v5031 = vadd.f32 0.0, %v5030
      %5032 = vmatprep.mubr.bf16.mxu0 %v4269
      %5033 = vmatmul.mubr.bf16.gmra.mrb[0].mxu0 %v4268
      %v5034 = vpop.f32.mrb[0].mxu0
      %v5035 = vadd.f32 0.0, %v5034
      %v5036 = vpop.f32.mrb[0].mxu0
      %v5037 = vadd.f32 0.0, %v5036
      %v5038 = vpop.f32.mrb[0].mxu0
      %v5039 = vadd.f32 0.0, %v5038
      %v5040 = vpop.f32.mrb[0].mxu0
      %v5041 = vadd.f32 0.0, %v5040
      %5042 = vdwg.mxu0
      %5043 = vmatprep.subr.bf16.mxu0 %v4691
      %5044 = vmatpush1.bf16.msra.mxu0 %v4690
      %5045 = vmatprep.subr.bf16.mxu0 %v4693
      %5046 = vmatpush1.bf16.msra.mxu0 %v4692
      %5047 = vmatprep.subr.bf16.mxu0 %v4695
      %5048 = vmatpush1.bf16.msra.mxu0 %v4694
      %5049 = vmatprep.subr.bf16.mxu0 %v4697
      %5050 = vmatpush1.bf16.msra.mxu0 %v4696
      %5051 = vmatprep.subr.bf16.mxu0 %v4699
      %5052 = vmatpush1.bf16.msra.mxu0 %v4698
      %5053 = vmatprep.subr.bf16.mxu0 %v4701
      %5054 = vmatpush1.bf16.msra.mxu0 %v4700
      %5055 = vmatprep.subr.bf16.mxu0 %v4703
      %5056 = vmatpush1.bf16.msra.mxu0 %v4702
      %5057 = vmatprep.subr.bf16.mxu0 %v4705
      %5058 = vmatpush1.bf16.msra.mxu0 %v4704
      %5059 = vmatprep.subr.bf16.mxu0 %v4707
      %5060 = vmatpush1.bf16.msra.mxu0 %v4706
      %5061 = vmatprep.subr.bf16.mxu0 %v4709
      %5062 = vmatpush1.bf16.msra.mxu0 %v4708
      %5063 = vmatprep.subr.bf16.mxu0 %v4711
      %5064 = vmatpush1.bf16.msra.mxu0 %v4710
      %5065 = vmatprep.subr.bf16.mxu0 %v4713
      %5066 = vmatpush1.bf16.msra.mxu0 %v4712
      %5067 = vmatprep.subr.bf16.mxu0 %v4715
      %5068 = vmatpush1.bf16.msra.mxu0 %v4714
      %5069 = vmatprep.subr.bf16.mxu0 %v4717
      %5070 = vmatpush1.bf16.msra.mxu0 %v4716
      %5071 = vmatprep.subr.bf16.mxu0 %v4719
      %5072 = vmatpush1.bf16.msra.mxu0 %v4718
      %5073 = vmatprep.subr.bf16.mxu0 %v4721
      %5074 = vmatpush1.bf16.msra.mxu0 %v4720
      %5075 = vmatprep.mubr.bf16.mxu0 %v4181
      %5076 = vmatmul.mubr.bf16.gmra.mrb[0].mxu0 %v4180
      %v5077 = vpop.f32.mrb[0].mxu0
      %v5078 = vadd.f32 %v4885, %v5077
      %v5079 = vpop.f32.mrb[0].mxu0
      %v5080 = vadd.f32 %v4887, %v5079
      %v5081 = vpop.f32.mrb[0].mxu0
      %v5082 = vadd.f32 %v4889, %v5081
      %v5083 = vpop.f32.mrb[0].mxu0
      %v5084 = vadd.f32 %v4891, %v5083
      %5085 = vmatprep.mubr.bf16.mxu0 %v4187
      %5086 = vmatmul.mubr.bf16.gmra.mrb[0].mxu0 %v4186
      %v5087 = vpop.f32.mrb[0].mxu0
      %v5088 = vadd.f32 %v4895, %v5087
      %v5089 = vpop.f32.mrb[0].mxu0
      %v5090 = vadd.f32 %v4897, %v5089
      %v5091 = vpop.f32.mrb[0].mxu0
      %v5092 = vadd.f32 %v4899, %v5091
      %v5093 = vpop.f32.mrb[0].mxu0
      %v5094 = vadd.f32 %v4901, %v5093
      %5095 = vmatprep.mubr.bf16.mxu0 %v4193
      %5096 = vmatmul.mubr.bf16.gmra.mrb[0].mxu0 %v4192
      %v5097 = vpop.f32.mrb[0].mxu0
      %v5098 = vadd.f32 %v4905, %v5097
      %v5099 = vpop.f32.mrb[0].mxu0
      %v5100 = vadd.f32 %v4907, %v5099
      %v5101 = vpop.f32.mrb[0].mxu0
      %v5102 = vadd.f32 %v4909, %v5101
      %v5103 = vpop.f32.mrb[0].mxu0
      %v5104 = vadd.f32 %v4911, %v5103
      %5105 = vmatprep.mubr.bf16.mxu0 %v4199
      %5106 = vmatmul.mubr.bf16.gmra.mrb[0].mxu0 %v4198
      %v5107 = vpop.f32.mrb[0].mxu0
      %v5108 = vadd.f32 %v4915, %v5107
      %v5109 = vpop.f32.mrb[0].mxu0
      %v5110 = vadd.f32 %v4917, %v5109
      %v5111 = vpop.f32.mrb[0].mxu0
      %v5112 = vadd.f32 %v4919, %v5111
      %v5113 = vpop.f32.mrb[0].mxu0
      %v5114 = vadd.f32 %v4921, %v5113
      %5115 = vmatprep.mubr.bf16.mxu0 %v4205
      %5116 = vmatmul.mubr.bf16.gmra.mrb[0].mxu0 %v4204
      %v5117 = vpop.f32.mrb[0].mxu0
      %v5118 = vadd.f32 %v4925, %v5117
      %v5119 = vpop.f32.mrb[0].mxu0
      %v5120 = vadd.f32 %v4927, %v5119
      %v5121 = vpop.f32.mrb[0].mxu0
      %v5122 = vadd.f32 %v4929, %v5121
      %v5123 = vpop.f32.mrb[0].mxu0
      %v5124 = vadd.f32 %v4931, %v5123
      %5125 = vmatprep.mubr.bf16.mxu0 %v4211
      %5126 = vmatmul.mubr.bf16.gmra.mrb[0].mxu0 %v4210
      %v5127 = vpop.f32.mrb[0].mxu0
      %v5128 = vadd.f32 %v4935, %v5127
      %v5129 = vpop.f32.mrb[0].mxu0
      %v5130 = vadd.f32 %v4937, %v5129
      %v5131 = vpop.f32.mrb[0].mxu0
      %v5132 = vadd.f32 %v4939, %v5131
      %v5133 = vpop.f32.mrb[0].mxu0
      %v5134 = vadd.f32 %v4941, %v5133
      %5135 = vmatprep.mubr.bf16.mxu0 %v4217
      %5136 = vmatmul.mubr.bf16.gmra.mrb[0].mxu0 %v4216
      %v5137 = vpop.f32.mrb[0].mxu0
      %v5138 = vadd.f32 %v4945, %v5137
      %v5139 = vpop.f32.mrb[0].mxu0
      %v5140 = vadd.f32 %v4947, %v5139
      %v5141 = vpop.f32.mrb[0].mxu0
      %v5142 = vadd.f32 %v4949, %v5141
      %v5143 = vpop.f32.mrb[0].mxu0
      %v5144 = vadd.f32 %v4951, %v5143
      %5145 = vmatprep.mubr.bf16.mxu0 %v4223
      %5146 = vmatmul.mubr.bf16.gmra.mrb[0].mxu0 %v4222
      %v5147 = vpop.f32.mrb[0].mxu0
      %v5148 = vadd.f32 %v4955, %v5147
      %v5149 = vpop.f32.mrb[0].mxu0
      %v5150 = vadd.f32 %v4957, %v5149
      %v5151 = vpop.f32.mrb[0].mxu0
      %v5152 = vadd.f32 %v4959, %v5151
      %v5153 = vpop.f32.mrb[0].mxu0
      %v5154 = vadd.f32 %v4961, %v5153
      %5155 = vmatprep.mubr.bf16.mxu0 %v4229
      %5156 = vmatmul.mubr.bf16.gmra.mrb[0].mxu0 %v4228
      %v5157 = vpop.f32.mrb[0].mxu0
      %v5158 = vadd.f32 %v4965, %v5157
      %v5159 = vpop.f32.mrb[0].mxu0
      %v5160 = vadd.f32 %v4967, %v5159
      %v5161 = vpop.f32.mrb[0].mxu0
      %v5162 = vadd.f32 %v4969, %v5161
      %v5163 = vpop.f32.mrb[0].mxu0
      %v5164 = vadd.f32 %v4971, %v5163
      %5165 = vmatprep.mubr.bf16.mxu0 %v4235
      %5166 = vmatmul.mubr.bf16.gmra.mrb[0].mxu0 %v4234
      %v5167 = vpop.f32.mrb[0].mxu0
      %v5168 = vadd.f32 %v4975, %v5167
      %v5169 = vpop.f32.mrb[0].mxu0
      %v5170 = vadd.f32 %v4977, %v5169
      %v5171 = vpop.f32.mrb[0].mxu0
      %v5172 = vadd.f32 %v4979, %v5171
      %v5173 = vpop.f32.mrb[0].mxu0
      %v5174 = vadd.f32 %v4981, %v5173
      %5175 = vmatprep.mubr.bf16.mxu0 %v4241
      %5176 = vmatmul.mubr.bf16.gmra.mrb[0].mxu0 %v4240
      %v5177 = vpop.f32.mrb[0].mxu0
      %v5178 = vadd.f32 %v4985, %v5177
      %v5179 = vpop.f32.mrb[0].mxu0
      %v5180 = vadd.f32 %v4987, %v5179
      %v5181 = vpop.f32.mrb[0].mxu0
      %v5182 = vadd.f32 %v4989, %v5181
      %v5183 = vpop.f32.mrb[0].mxu0
      %v5184 = vadd.f32 %v4991, %v5183
      %5185 = vmatprep.mubr.bf16.mxu0 %v4247
      %5186 = vmatmul.mubr.bf16.gmra.mrb[0].mxu0 %v4246
      %v5187 = vpop.f32.mrb[0].mxu0
      %v5188 = vadd.f32 %v4995, %v5187
      %v5189 = vpop.f32.mrb[0].mxu0
      %v5190 = vadd.f32 %v4997, %v5189
      %v5191 = vpop.f32.mrb[0].mxu0
      %v5192 = vadd.f32 %v4999, %v5191
      %v5193 = vpop.f32.mrb[0].mxu0
      %v5194 = vadd.f32 %v5001, %v5193
      %5195 = vmatprep.mubr.bf16.mxu0 %v4253
      %5196 = vmatmul.mubr.bf16.gmra.mrb[0].mxu0 %v4252
      %v5197 = vpop.f32.mrb[0].mxu0
      %v5198 = vadd.f32 %v5005, %v5197
      %v5199 = vpop.f32.mrb[0].mxu0
      %v5200 = vadd.f32 %v5007, %v5199
      %v5201 = vpop.f32.mrb[0].mxu0
      %v5202 = vadd.f32 %v5009, %v5201
      %v5203 = vpop.f32.mrb[0].mxu0
      %v5204 = vadd.f32 %v5011, %v5203
      %5205 = vmatprep.mubr.bf16.mxu0 %v4259
      %5206 = vmatmul.mubr.bf16.gmra.mrb[0].mxu0 %v4258
      %v5207 = vpop.f32.mrb[0].mxu0
      %v5208 = vadd.f32 %v5015, %v5207
      %v5209 = vpop.f32.mrb[0].mxu0
      %v5210 = vadd.f32 %v5017, %v5209
      %v5211 = vpop.f32.mrb[0].mxu0
      %v5212 = vadd.f32 %v5019, %v5211
      %v5213 = vpop.f32.mrb[0].mxu0
      %v5214 = vadd.f32 %v5021, %v5213
      %5215 = vmatprep.mubr.bf16.mxu0 %v4265
      %5216 = vmatmul.mubr.bf16.gmra.mrb[0].mxu0 %v4264
      %v5217 = vpop.f32.mrb[0].mxu0
      %v5218 = vadd.f32 %v5025, %v5217
      %v5219 = vpop.f32.mrb[0].mxu0
      %v5220 = vadd.f32 %v5027, %v5219
      %v5221 = vpop.f32.mrb[0].mxu0
      %v5222 = vadd.f32 %v5029, %v5221
      %v5223 = vpop.f32.mrb[0].mxu0
      %v5224 = vadd.f32 %v5031, %v5223
      %5225 = vmatprep.mubr.bf16.mxu0 %v4271
      %5226 = vmatmul.mubr.bf16.gmra.mrb[0].mxu0 %v4270
      %v5227 = vpop.f32.mrb[0].mxu0
      %v5228 = vadd.f32 %v5035, %v5227
      %v5229 = vpop.f32.mrb[0].mxu0
      %v5230 = vadd.f32 %v5037, %v5229
      %v5231 = vpop.f32.mrb[0].mxu0
      %v5232 = vadd.f32 %v5039, %v5231
      %v5233 = vpop.f32.mrb[0].mxu0
      %v5234 = vadd.f32 %v5041, %v5233
      %5235 = vdwg.mxu0
      %5236 = vmatprep.subr.bf16.mxu0 %v4723
      %5237 = vmatpush1.bf16.msra.mxu0 %v4722
      %5238 = vmatprep.subr.bf16.mxu0 %v4725
      %5239 = vmatpush1.bf16.msra.mxu0 %v4724
      %5240 = vmatprep.subr.bf16.mxu0 %v4727
      %5241 = vmatpush1.bf16.msra.mxu0 %v4726
      %5242 = vmatprep.subr.bf16.mxu0 %v4729
      %5243 = vmatpush1.bf16.msra.mxu0 %v4728
      %5244 = vmatprep.subr.bf16.mxu0 %v4731
      %5245 = vmatpush1.bf16.msra.mxu0 %v4730
      %5246 = vmatprep.subr.bf16.mxu0 %v4733
      %5247 = vmatpush1.bf16.msra.mxu0 %v4732
      %5248 = vmatprep.subr.bf16.mxu0 %v4735
      %5249 = vmatpush1.bf16.msra.mxu0 %v4734
      %5250 = vmatprep.subr.bf16.mxu0 %v4737
      %5251 = vmatpush1.bf16.msra.mxu0 %v4736
      %5252 = vmatprep.subr.bf16.mxu0 %v4739
      %5253 = vmatpush1.bf16.msra.mxu0 %v4738
      %5254 = vmatprep.subr.bf16.mxu0 %v4741
      %5255 = vmatpush1.bf16.msra.mxu0 %v4740
      %5256 = vmatprep.subr.bf16.mxu0 %v4743
      %5257 = vmatpush1.bf16.msra.mxu0 %v4742
      %5258 = vmatprep.subr.bf16.mxu0 %v4745
      %5259 = vmatpush1.bf16.msra.mxu0 %v4744
      %5260 = vmatprep.subr.bf16.mxu0 %v4747
      %5261 = vmatpush1.bf16.msra.mxu0 %v4746
      %5262 = vmatprep.subr.bf16.mxu0 %v4749
      %5263 = vmatpush1.bf16.msra.mxu0 %v4748
      %5264 = vmatprep.subr.bf16.mxu0 %v4751
      %5265 = vmatpush1.bf16.msra.mxu0 %v4750
      %5266 = vmatprep.subr.bf16.mxu0 %v4753
      %5267 = vmatpush1.bf16.msra.mxu0 %v4752
      %5268 = vmatprep.mubr.bf16.mxu0 %v4183
      %5269 = vmatmul.mubr.bf16.gmra.mrb[0].mxu0 %v4182
      %v5270 = vpop.f32.mrb[0].mxu0
      %v5271 = vadd.f32 %v5078, %v5270
      %v5272 = vpop.f32.mrb[0].mxu0
      %v5273 = vadd.f32 %v5080, %v5272
      %v5274 = vpop.f32.mrb[0].mxu0
      %v5275 = vadd.f32 %v5082, %v5274
      %v5276 = vpop.f32.mrb[0].mxu0
      %v5277 = vadd.f32 %v5084, %v5276
      %5278 = vmatprep.mubr.bf16.mxu0 %v4189
      %5279 = vmatmul.mubr.bf16.gmra.mrb[0].mxu0 %v4188
      %v5280 = vpop.f32.mrb[0].mxu0
      %v5281 = vadd.f32 %v5088, %v5280
      %v5282 = vpop.f32.mrb[0].mxu0
      %v5283 = vadd.f32 %v5090, %v5282
      %v5284 = vpop.f32.mrb[0].mxu0
      %v5285 = vadd.f32 %v5092, %v5284
      %v5286 = vpop.f32.mrb[0].mxu0
      %v5287 = vadd.f32 %v5094, %v5286
      %5288 = vmatprep.mubr.bf16.mxu0 %v4195
      %5289 = vmatmul.mubr.bf16.gmra.mrb[0].mxu0 %v4194
      %v5290 = vpop.f32.mrb[0].mxu0
      %v5291 = vadd.f32 %v5098, %v5290
      %v5292 = vpop.f32.mrb[0].mxu0
      %v5293 = vadd.f32 %v5100, %v5292
      %v5294 = vpop.f32.mrb[0].mxu0
      %v5295 = vadd.f32 %v5102, %v5294
      %v5296 = vpop.f32.mrb[0].mxu0
      %v5297 = vadd.f32 %v5104, %v5296
      %5298 = vmatprep.mubr.bf16.mxu0 %v4201
      %5299 = vmatmul.mubr.bf16.gmra.mrb[0].mxu0 %v4200
      %v5300 = vpop.f32.mrb[0].mxu0
      %v5301 = vadd.f32 %v5108, %v5300
      %v5302 = vpop.f32.mrb[0].mxu0
      %v5303 = vadd.f32 %v5110, %v5302
      %v5304 = vpop.f32.mrb[0].mxu0
      %v5305 = vadd.f32 %v5112, %v5304
      %v5306 = vpop.f32.mrb[0].mxu0
      %v5307 = vadd.f32 %v5114, %v5306
      %5308 = vmatprep.mubr.bf16.mxu0 %v4207
      %5309 = vmatmul.mubr.bf16.gmra.mrb[0].mxu0 %v4206
      %v5310 = vpop.f32.mrb[0].mxu0
      %v5311 = vadd.f32 %v5118, %v5310
      %v5312 = vpop.f32.mrb[0].mxu0
      %v5313 = vadd.f32 %v5120, %v5312
      %v5314 = vpop.f32.mrb[0].mxu0
      %v5315 = vadd.f32 %v5122, %v5314
      %v5316 = vpop.f32.mrb[0].mxu0
      %v5317 = vadd.f32 %v5124, %v5316
      %5318 = vmatprep.mubr.bf16.mxu0 %v4213
      %5319 = vmatmul.mubr.bf16.gmra.mrb[0].mxu0 %v4212
      %v5320 = vpop.f32.mrb[0].mxu0
      %v5321 = vadd.f32 %v5128, %v5320
      %v5322 = vpop.f32.mrb[0].mxu0
      %v5323 = vadd.f32 %v5130, %v5322
      %v5324 = vpop.f32.mrb[0].mxu0
      %v5325 = vadd.f32 %v5132, %v5324
      %v5326 = vpop.f32.mrb[0].mxu0
      %v5327 = vadd.f32 %v5134, %v5326
      %5328 = vmatprep.mubr.bf16.mxu0 %v4219
      %5329 = vmatmul.mubr.bf16.gmra.mrb[0].mxu0 %v4218
      %v5330 = vpop.f32.mrb[0].mxu0
      %v5331 = vadd.f32 %v5138, %v5330
      %v5332 = vpop.f32.mrb[0].mxu0
      %v5333 = vadd.f32 %v5140, %v5332
      %v5334 = vpop.f32.mrb[0].mxu0
      %v5335 = vadd.f32 %v5142, %v5334
      %v5336 = vpop.f32.mrb[0].mxu0
      %v5337 = vadd.f32 %v5144, %v5336
      %5338 = vmatprep.mubr.bf16.mxu0 %v4225
      %5339 = vmatmul.mubr.bf16.gmra.mrb[0].mxu0 %v4224
      %v5340 = vpop.f32.mrb[0].mxu0
      %v5341 = vadd.f32 %v5148, %v5340
      %v5342 = vpop.f32.mrb[0].mxu0
      %v5343 = vadd.f32 %v5150, %v5342
      %v5344 = vpop.f32.mrb[0].mxu0
      %v5345 = vadd.f32 %v5152, %v5344
      %v5346 = vpop.f32.mrb[0].mxu0
      %v5347 = vadd.f32 %v5154, %v5346
      %5348 = vmatprep.mubr.bf16.mxu0 %v4231
      %5349 = vmatmul.mubr.bf16.gmra.mrb[0].mxu0 %v4230
      %v5350 = vpop.f32.mrb[0].mxu0
      %v5351 = vadd.f32 %v5158, %v5350
      %v5352 = vpop.f32.mrb[0].mxu0
      %v5353 = vadd.f32 %v5160, %v5352
      %v5354 = vpop.f32.mrb[0].mxu0
      %v5355 = vadd.f32 %v5162, %v5354
      %v5356 = vpop.f32.mrb[0].mxu0
      %v5357 = vadd.f32 %v5164, %v5356
      %5358 = vmatprep.mubr.bf16.mxu0 %v4237
      %5359 = vmatmul.mubr.bf16.gmra.mrb[0].mxu0 %v4236
      %v5360 = vpop.f32.mrb[0].mxu0
      %v5361 = vadd.f32 %v5168, %v5360
      %v5362 = vpop.f32.mrb[0].mxu0
      %v5363 = vadd.f32 %v5170, %v5362
      %v5364 = vpop.f32.mrb[0].mxu0
      %v5365 = vadd.f32 %v5172, %v5364
      %v5366 = vpop.f32.mrb[0].mxu0
      %v5367 = vadd.f32 %v5174, %v5366
      %5368 = vmatprep.mubr.bf16.mxu0 %v4243
      %5369 = vmatmul.mubr.bf16.gmra.mrb[0].mxu0 %v4242
      %v5370 = vpop.f32.mrb[0].mxu0
      %v5371 = vadd.f32 %v5178, %v5370
      %v5372 = vpop.f32.mrb[0].mxu0
      %v5373 = vadd.f32 %v5180, %v5372
      %v5374 = vpop.f32.mrb[0].mxu0
      %v5375 = vadd.f32 %v5182, %v5374
      %v5376 = vpop.f32.mrb[0].mxu0
      %v5377 = vadd.f32 %v5184, %v5376
      %5378 = vmatprep.mubr.bf16.mxu0 %v4249
      %5379 = vmatmul.mubr.bf16.gmra.mrb[0].mxu0 %v4248
      %v5380 = vpop.f32.mrb[0].mxu0
      %v5381 = vadd.f32 %v5188, %v5380
      %v5382 = vpop.f32.mrb[0].mxu0
      %v5383 = vadd.f32 %v5190, %v5382
      %v5384 = vpop.f32.mrb[0].mxu0
      %v5385 = vadd.f32 %v5192, %v5384
      %v5386 = vpop.f32.mrb[0].mxu0
      %v5387 = vadd.f32 %v5194, %v5386
      %5388 = vmatprep.mubr.bf16.mxu0 %v4255
      %5389 = vmatmul.mubr.bf16.gmra.mrb[0].mxu0 %v4254
      %v5390 = vpop.f32.mrb[0].mxu0
      %v5391 = vadd.f32 %v5198, %v5390
      %v5392 = vpop.f32.mrb[0].mxu0
      %v5393 = vadd.f32 %v5200, %v5392
      %v5394 = vpop.f32.mrb[0].mxu0
      %v5395 = vadd.f32 %v5202, %v5394
      %v5396 = vpop.f32.mrb[0].mxu0
      %v5397 = vadd.f32 %v5204, %v5396
      %5398 = vmatprep.mubr.bf16.mxu0 %v4261
      %5399 = vmatmul.mubr.bf16.gmra.mrb[0].mxu0 %v4260
      %v5400 = vpop.f32.mrb[0].mxu0
      %v5401 = vadd.f32 %v5208, %v5400
      %v5402 = vpop.f32.mrb[0].mxu0
      %v5403 = vadd.f32 %v5210, %v5402
      %v5404 = vpop.f32.mrb[0].mxu0
      %v5405 = vadd.f32 %v5212, %v5404
      %v5406 = vpop.f32.mrb[0].mxu0
      %v5407 = vadd.f32 %v5214, %v5406
      %5408 = vmatprep.mubr.bf16.mxu0 %v4267
      %5409 = vmatmul.mubr.bf16.gmra.mrb[0].mxu0 %v4266
      %v5410 = vpop.f32.mrb[0].mxu0
      %v5411 = vadd.f32 %v5218, %v5410
      %v5412 = vpop.f32.mrb[0].mxu0
      %v5413 = vadd.f32 %v5220, %v5412
      %v5414 = vpop.f32.mrb[0].mxu0
      %v5415 = vadd.f32 %v5222, %v5414
      %v5416 = vpop.f32.mrb[0].mxu0
      %v5417 = vadd.f32 %v5224, %v5416
      %5418 = vmatprep.mubr.bf16.mxu0 %v4273
      %5419 = vmatmul.mubr.bf16.gmra.mrb[0].mxu0 %v4272
      %v5420 = vpop.f32.mrb[0].mxu0
      %v5421 = vadd.f32 %v5228, %v5420
      %v5422 = vpop.f32.mrb[0].mxu0
      %v5423 = vadd.f32 %v5230, %v5422
      %v5424 = vpop.f32.mrb[0].mxu0
      %v5425 = vadd.f32 %v5232, %v5424
      %v5426 = vpop.f32.mrb[0].mxu0
      %v5427 = vadd.f32 %v5234, %v5426
      %5428 = vdwg.mxu0
      %v5429 = vadd.f32 %v3534, %v5271
      %v5430 = vadd.f32 %v3536, %v5273
      %v5431 = vadd.f32 %v3538, %v5275
      %v5432 = vadd.f32 %v3540, %v5277
      %v5433 = vadd.f32 %v3544, %v5281
      %v5434 = vadd.f32 %v3546, %v5283
      %v5435 = vadd.f32 %v3548, %v5285
      %v5436 = vadd.f32 %v3550, %v5287
      %v5437 = vadd.f32 %v3554, %v5291
      %v5438 = vadd.f32 %v3556, %v5293
      %v5439 = vadd.f32 %v3558, %v5295
      %v5440 = vadd.f32 %v3560, %v5297
      %v5441 = vadd.f32 %v3564, %v5301
      %v5442 = vadd.f32 %v3566, %v5303
      %v5443 = vadd.f32 %v3568, %v5305
      %v5444 = vadd.f32 %v3570, %v5307
      %v5445 = vadd.f32 %v3574, %v5311
      %v5446 = vadd.f32 %v3576, %v5313
      %v5447 = vadd.f32 %v3578, %v5315
      %v5448 = vadd.f32 %v3580, %v5317
      %v5449 = vadd.f32 %v3584, %v5321
      %v5450 = vadd.f32 %v3586, %v5323
      %v5451 = vadd.f32 %v3588, %v5325
      %v5452 = vadd.f32 %v3590, %v5327
      %v5453 = vadd.f32 %v3594, %v5331
      %v5454 = vadd.f32 %v3596, %v5333
      %v5455 = vadd.f32 %v3598, %v5335
      %v5456 = vadd.f32 %v3600, %v5337
      %v5457 = vadd.f32 %v3604, %v5341
      %v5458 = vadd.f32 %v3606, %v5343
      %v5459 = vadd.f32 %v3608, %v5345
      %v5460 = vadd.f32 %v3610, %v5347
      %v5461 = vadd.f32 %v3614, %v5351
      %v5462 = vadd.f32 %v3616, %v5353
      %v5463 = vadd.f32 %v3618, %v5355
      %v5464 = vadd.f32 %v3620, %v5357
      %v5465 = vadd.f32 %v3624, %v5361
      %v5466 = vadd.f32 %v3626, %v5363
      %v5467 = vadd.f32 %v3628, %v5365
      %v5468 = vadd.f32 %v3630, %v5367
      %v5469 = vadd.f32 %v3634, %v5371
      %v5470 = vadd.f32 %v3636, %v5373
      %v5471 = vadd.f32 %v3638, %v5375
      %v5472 = vadd.f32 %v3640, %v5377
      %v5473 = vadd.f32 %v3644, %v5381
      %v5474 = vadd.f32 %v3646, %v5383
      %v5475 = vadd.f32 %v3648, %v5385
      %v5476 = vadd.f32 %v3650, %v5387
      %v5477 = vadd.f32 %v3654, %v5391
      %v5478 = vadd.f32 %v3656, %v5393
      %v5479 = vadd.f32 %v3658, %v5395
      %v5480 = vadd.f32 %v3660, %v5397
      %v5481 = vadd.f32 %v3664, %v5401
      %v5482 = vadd.f32 %v3666, %v5403
      %v5483 = vadd.f32 %v3668, %v5405
      %v5484 = vadd.f32 %v3670, %v5407
      %v5485 = vadd.f32 %v3674, %v5411
      %v5486 = vadd.f32 %v3676, %v5413
      %v5487 = vadd.f32 %v3678, %v5415
      %v5488 = vadd.f32 %v3680, %v5417
      %v5489 = vadd.f32 %v3684, %v5421
      %v5490 = vadd.f32 %v3686, %v5423
      %v5491 = vadd.f32 %v3688, %v5425
      %v5492 = vadd.f32 %v3690, %v5427
      %v5493 = vld [vmem:[%s204] sm:$0x3]
      %v5495 = vlaneseq
      %v5496 = vshrl.u32 %v5495, 7
      %v5497 = vsub.s32 0, %v5496
      %v5498 = vrot.slane %v5493, %v5497
      %v5499 = vlaneseq
      %v5500 = vshrl.u32 %v5499, 7
      %v5501 = vsub.s32 1, %v5500
      %v5502 = vrot.slane %v5493, %v5501
      %v5505 = vadd.f32 %v5429, %v5498
      %v5506 = vadd.f32 %v5430, %v5502
      %v5507 = vadd.f32 %v5431, %v5498
      %v5508 = vadd.f32 %v5432, %v5502
      %v5509 = vadd.f32 %v5433, %v5498
      %v5510 = vadd.f32 %v5434, %v5502
      %v5511 = vadd.f32 %v5435, %v5498
      %v5512 = vadd.f32 %v5436, %v5502
      %v5513 = vadd.f32 %v5437, %v5498
      %v5514 = vadd.f32 %v5438, %v5502
      %v5515 = vadd.f32 %v5439, %v5498
      %v5516 = vadd.f32 %v5440, %v5502
      %v5517 = vadd.f32 %v5441, %v5498
      %v5518 = vadd.f32 %v5442, %v5502
      %v5519 = vadd.f32 %v5443, %v5498
      %v5520 = vadd.f32 %v5444, %v5502
      %v5521 = vadd.f32 %v5445, %v5498
      %v5522 = vadd.f32 %v5446, %v5502
      %v5523 = vadd.f32 %v5447, %v5498
      %v5524 = vadd.f32 %v5448, %v5502
      %v5525 = vadd.f32 %v5449, %v5498
      %v5526 = vadd.f32 %v5450, %v5502
      %v5527 = vadd.f32 %v5451, %v5498
      %v5528 = vadd.f32 %v5452, %v5502
      %v5529 = vadd.f32 %v5453, %v5498
      %v5530 = vadd.f32 %v5454, %v5502
      %v5531 = vadd.f32 %v5455, %v5498
      %v5532 = vadd.f32 %v5456, %v5502
      %v5533 = vadd.f32 %v5457, %v5498
      %v5534 = vadd.f32 %v5458, %v5502
      %v5535 = vadd.f32 %v5459, %v5498
      %v5536 = vadd.f32 %v5460, %v5502
      %v5537 = vadd.f32 %v5461, %v5498
      %v5538 = vadd.f32 %v5462, %v5502
      %v5539 = vadd.f32 %v5463, %v5498
      %v5540 = vadd.f32 %v5464, %v5502
      %v5541 = vadd.f32 %v5465, %v5498
      %v5542 = vadd.f32 %v5466, %v5502
      %v5543 = vadd.f32 %v5467, %v5498
      %v5544 = vadd.f32 %v5468, %v5502
      %v5545 = vadd.f32 %v5469, %v5498
      %v5546 = vadd.f32 %v5470, %v5502
      %v5547 = vadd.f32 %v5471, %v5498
      %v5548 = vadd.f32 %v5472, %v5502
      %v5549 = vadd.f32 %v5473, %v5498
      %v5550 = vadd.f32 %v5474, %v5502
      %v5551 = vadd.f32 %v5475, %v5498
      %v5552 = vadd.f32 %v5476, %v5502
      %v5553 = vadd.f32 %v5477, %v5498
      %v5554 = vadd.f32 %v5478, %v5502
      %v5555 = vadd.f32 %v5479, %v5498
      %v5556 = vadd.f32 %v5480, %v5502
      %v5557 = vadd.f32 %v5481, %v5498
      %v5558 = vadd.f32 %v5482, %v5502
      %v5559 = vadd.f32 %v5483, %v5498
      %v5560 = vadd.f32 %v5484, %v5502
      %v5561 = vadd.f32 %v5485, %v5498
      %v5562 = vadd.f32 %v5486, %v5502
      %v5563 = vadd.f32 %v5487, %v5498
      %v5564 = vadd.f32 %v5488, %v5502
      %v5565 = vadd.f32 %v5489, %v5498
      %v5566 = vadd.f32 %v5490, %v5502
      %v5567 = vadd.f32 %v5491, %v5498
      %v5568 = vadd.f32 %v5492, %v5502
      %v5569 = vmax.f32 %v5505, 0.0
      %v5570 = vmax.f32 %v5506, 0.0
      %v5571 = vmax.f32 %v5507, 0.0
      %v5572 = vmax.f32 %v5508, 0.0
      %v5573 = vmax.f32 %v5509, 0.0
      %v5574 = vmax.f32 %v5510, 0.0
      %v5575 = vmax.f32 %v5511, 0.0
      %v5576 = vmax.f32 %v5512, 0.0
      %v5577 = vmax.f32 %v5513, 0.0
      %v5578 = vmax.f32 %v5514, 0.0
      %v5579 = vmax.f32 %v5515, 0.0
      %v5580 = vmax.f32 %v5516, 0.0
      %v5581 = vmax.f32 %v5517, 0.0
      %v5582 = vmax.f32 %v5518, 0.0
      %v5583 = vmax.f32 %v5519, 0.0
      %v5584 = vmax.f32 %v5520, 0.0
      %v5585 = vmax.f32 %v5521, 0.0
      %v5586 = vmax.f32 %v5522, 0.0
      %v5587 = vmax.f32 %v5523, 0.0
      %v5588 = vmax.f32 %v5524, 0.0
      %v5589 = vmax.f32 %v5525, 0.0
      %v5590 = vmax.f32 %v5526, 0.0
      %v5591 = vmax.f32 %v5527, 0.0
      %v5592 = vmax.f32 %v5528, 0.0
      %v5593 = vmax.f32 %v5529, 0.0
      %v5594 = vmax.f32 %v5530, 0.0
      %v5595 = vmax.f32 %v5531, 0.0
      %v5596 = vmax.f32 %v5532, 0.0
      %v5597 = vmax.f32 %v5533, 0.0
      %v5598 = vmax.f32 %v5534, 0.0
      %v5599 = vmax.f32 %v5535, 0.0
      %v5600 = vmax.f32 %v5536, 0.0
      %v5601 = vmax.f32 %v5537, 0.0
      %v5602 = vmax.f32 %v5538, 0.0
      %v5603 = vmax.f32 %v5539, 0.0
      %v5604 = vmax.f32 %v5540, 0.0
      %v5605 = vmax.f32 %v5541, 0.0
      %v5606 = vmax.f32 %v5542, 0.0
      %v5607 = vmax.f32 %v5543, 0.0
      %v5608 = vmax.f32 %v5544, 0.0
      %v5609 = vmax.f32 %v5545, 0.0
      %v5610 = vmax.f32 %v5546, 0.0
      %v5611 = vmax.f32 %v5547, 0.0
      %v5612 = vmax.f32 %v5548, 0.0
      %v5613 = vmax.f32 %v5549, 0.0
      %v5614 = vmax.f32 %v5550, 0.0
      %v5615 = vmax.f32 %v5551, 0.0
      %v5616 = vmax.f32 %v5552, 0.0
      %v5617 = vmax.f32 %v5553, 0.0
      %v5618 = vmax.f32 %v5554, 0.0
      %v5619 = vmax.f32 %v5555, 0.0
      %v5620 = vmax.f32 %v5556, 0.0
      %v5621 = vmax.f32 %v5557, 0.0
      %v5622 = vmax.f32 %v5558, 0.0
      %v5623 = vmax.f32 %v5559, 0.0
      %v5624 = vmax.f32 %v5560, 0.0
      %v5625 = vmax.f32 %v5561, 0.0
      %v5626 = vmax.f32 %v5562, 0.0
      %v5627 = vmax.f32 %v5563, 0.0
      %v5628 = vmax.f32 %v5564, 0.0
      %v5629 = vmax.f32 %v5565, 0.0
      %v5630 = vmax.f32 %v5566, 0.0
      %v5631 = vmax.f32 %v5567, 0.0
      %v5632 = vmax.f32 %v5568, 0.0
      %v5633 = vpack.c.bf16 %v5571, %v5569
      %v5634 = vpack.c.bf16 %v5572, %v5570
      %v5635 = vpack.c.bf16 %v5575, %v5573
      %v5636 = vpack.c.bf16 %v5576, %v5574
      %v5637 = vpack.c.bf16 %v5579, %v5577
      %v5638 = vpack.c.bf16 %v5580, %v5578
      %v5639 = vpack.c.bf16 %v5583, %v5581
      %v5640 = vpack.c.bf16 %v5584, %v5582
      %v5641 = vpack.c.bf16 %v5587, %v5585
      %v5642 = vpack.c.bf16 %v5588, %v5586
      %v5643 = vpack.c.bf16 %v5591, %v5589
      %v5644 = vpack.c.bf16 %v5592, %v5590
      %v5645 = vpack.c.bf16 %v5595, %v5593
      %v5646 = vpack.c.bf16 %v5596, %v5594
      %v5647 = vpack.c.bf16 %v5599, %v5597
      %v5648 = vpack.c.bf16 %v5600, %v5598
      %v5649 = vpack.c.bf16 %v5603, %v5601
      %v5650 = vpack.c.bf16 %v5604, %v5602
      %v5651 = vpack.c.bf16 %v5607, %v5605
      %v5652 = vpack.c.bf16 %v5608, %v5606
      %v5653 = vpack.c.bf16 %v5611, %v5609
      %v5654 = vpack.c.bf16 %v5612, %v5610
      %v5655 = vpack.c.bf16 %v5615, %v5613
      %v5656 = vpack.c.bf16 %v5616, %v5614
      %v5657 = vpack.c.bf16 %v5619, %v5617
      %v5658 = vpack.c.bf16 %v5620, %v5618
      %v5659 = vpack.c.bf16 %v5623, %v5621
      %v5660 = vpack.c.bf16 %v5624, %v5622
      %v5661 = vpack.c.bf16 %v5627, %v5625
      %v5662 = vpack.c.bf16 %v5628, %v5626
      %v5663 = vpack.c.bf16 %v5631, %v5629
      %v5664 = vpack.c.bf16 %v5632, %v5630
      %v5697 = vunpack.c.l.b16 %v5633
      %v5698 = vunpack.c.l.b16 %v5634
      %v5699 = vunpack.c.h.b16 %v5633
      %v5700 = vunpack.c.h.b16 %v5634
      %v5701 = vunpack.c.l.b16 %v5635
      %v5702 = vunpack.c.l.b16 %v5636
      %v5703 = vunpack.c.h.b16 %v5635
      %v5704 = vunpack.c.h.b16 %v5636
      %v5705 = vunpack.c.l.b16 %v5637
      %v5706 = vunpack.c.l.b16 %v5638
      %v5707 = vunpack.c.h.b16 %v5637
      %v5708 = vunpack.c.h.b16 %v5638
      %v5709 = vunpack.c.l.b16 %v5639
      %v5710 = vunpack.c.l.b16 %v5640
      %v5711 = vunpack.c.h.b16 %v5639
      %v5712 = vunpack.c.h.b16 %v5640
      %v5713 = vunpack.c.l.b16 %v5641
      %v5714 = vunpack.c.l.b16 %v5642
      %v5715 = vunpack.c.h.b16 %v5641
      %v5716 = vunpack.c.h.b16 %v5642
      %v5717 = vunpack.c.l.b16 %v5643
      %v5718 = vunpack.c.l.b16 %v5644
      %v5719 = vunpack.c.h.b16 %v5643
      %v5720 = vunpack.c.h.b16 %v5644
      %v5721 = vunpack.c.l.b16 %v5645
      %v5722 = vunpack.c.l.b16 %v5646
      %v5723 = vunpack.c.h.b16 %v5645
      %v5724 = vunpack.c.h.b16 %v5646
      %v5725 = vunpack.c.l.b16 %v5647
      %v5726 = vunpack.c.l.b16 %v5648
      %v5727 = vunpack.c.h.b16 %v5647
      %v5728 = vunpack.c.h.b16 %v5648
      %v5729 = vunpack.c.l.b16 %v5649
      %v5730 = vunpack.c.l.b16 %v5650
      %v5731 = vunpack.c.h.b16 %v5649
      %v5732 = vunpack.c.h.b16 %v5650
      %v5733 = vunpack.c.l.b16 %v5651
      %v5734 = vunpack.c.l.b16 %v5652
      %v5735 = vunpack.c.h.b16 %v5651
      %v5736 = vunpack.c.h.b16 %v5652
      %v5737 = vunpack.c.l.b16 %v5653
      %v5738 = vunpack.c.l.b16 %v5654
      %v5739 = vunpack.c.h.b16 %v5653
      %v5740 = vunpack.c.h.b16 %v5654
      %v5741 = vunpack.c.l.b16 %v5655
      %v5742 = vunpack.c.l.b16 %v5656
      %v5743 = vunpack.c.h.b16 %v5655
      %v5744 = vunpack.c.h.b16 %v5656
      %v5745 = vunpack.c.l.b16 %v5657
      %v5746 = vunpack.c.l.b16 %v5658
      %v5747 = vunpack.c.h.b16 %v5657
      %v5748 = vunpack.c.h.b16 %v5658
      %v5749 = vunpack.c.l.b16 %v5659
      %v5750 = vunpack.c.l.b16 %v5660
      %v5751 = vunpack.c.h.b16 %v5659
      %v5752 = vunpack.c.h.b16 %v5660
      %v5753 = vunpack.c.l.b16 %v5661
      %v5754 = vunpack.c.l.b16 %v5662
      %v5755 = vunpack.c.h.b16 %v5661
      %v5756 = vunpack.c.h.b16 %v5662
      %v5757 = vunpack.c.l.b16 %v5663
      %v5758 = vunpack.c.l.b16 %v5664
      %v5759 = vunpack.c.h.b16 %v5663
      %v5760 = vunpack.c.h.b16 %v5664
      %v5761 = vpack.c.b16 %v5698, %v5697
      %v5762 = vpack.c.b16 %v5700, %v5699
      %v5763 = vpack.c.b16 %v5702, %v5701
      %v5764 = vpack.c.b16 %v5704, %v5703
      %v5765 = vpack.c.b16 %v5706, %v5705
      %v5766 = vpack.c.b16 %v5708, %v5707
      %v5767 = vpack.c.b16 %v5710, %v5709
      %v5768 = vpack.c.b16 %v5712, %v5711
      %v5769 = vpack.c.b16 %v5714, %v5713
      %v5770 = vpack.c.b16 %v5716, %v5715
      %v5771 = vpack.c.b16 %v5718, %v5717
      %v5772 = vpack.c.b16 %v5720, %v5719
      %v5773 = vpack.c.b16 %v5722, %v5721
      %v5774 = vpack.c.b16 %v5724, %v5723
      %v5775 = vpack.c.b16 %v5726, %v5725
      %v5776 = vpack.c.b16 %v5728, %v5727
      %v5777 = vpack.c.b16 %v5730, %v5729
      %v5778 = vpack.c.b16 %v5732, %v5731
      %v5779 = vpack.c.b16 %v5734, %v5733
      %v5780 = vpack.c.b16 %v5736, %v5735
      %v5781 = vpack.c.b16 %v5738, %v5737
      %v5782 = vpack.c.b16 %v5740, %v5739
      %v5783 = vpack.c.b16 %v5742, %v5741
      %v5784 = vpack.c.b16 %v5744, %v5743
      %v5785 = vpack.c.b16 %v5746, %v5745
      %v5786 = vpack.c.b16 %v5748, %v5747
      %v5787 = vpack.c.b16 %v5750, %v5749
      %v5788 = vpack.c.b16 %v5752, %v5751
      %v5789 = vpack.c.b16 %v5754, %v5753
      %v5790 = vpack.c.b16 %v5756, %v5755
      %v5791 = vpack.c.b16 %v5758, %v5757
      %v5792 = vpack.c.b16 %v5760, %v5759
      %5825 = vst [vmem:[%s215] sm:$0xff] %v5761
      %5826 = vst [vmem:[%s215 + $0x8] sm:$0xff] %v5762
      %5827 = vst [vmem:[%s215 + $0x10] sm:$0xff] %v5763
      %5828 = vst [vmem:[%s215 + $0x18] sm:$0xff] %v5764
      %5829 = vst [vmem:[%s215 + $0x20] sm:$0xff] %v5765
      %5830 = vst [vmem:[%s215 + $0x28] sm:$0xff] %v5766
      %5831 = vst [vmem:[%s215 + $0x30] sm:$0xff] %v5767
      %5832 = vst [vmem:[%s215 + $0x38] sm:$0xff] %v5768
      %5833 = vst [vmem:[%s215 + $0x40] sm:$0xff] %v5769
      %5834 = vst [vmem:[%s215 + $0x48] sm:$0xff] %v5770
      %5835 = vst [vmem:[%s215 + $0x50] sm:$0xff] %v5771
      %5836 = vst [vmem:[%s215 + $0x58] sm:$0xff] %v5772
      %5837 = vst [vmem:[%s215 + $0x60] sm:$0xff] %v5773
      %5838 = vst [vmem:[%s215 + $0x68] sm:$0xff] %v5774
      %5839 = vst [vmem:[%s215 + $0x70] sm:$0xff] %v5775
      %5840 = vst [vmem:[%s215 + $0x78] sm:$0xff] %v5776
      %5841 = vst [vmem:[%s215 + $0x80] sm:$0xff] %v5777
      %5842 = vst [vmem:[%s215 + $0x88] sm:$0xff] %v5778
      %5843 = vst [vmem:[%s215 + $0x90] sm:$0xff] %v5779
      %5844 = vst [vmem:[%s215 + $0x98] sm:$0xff] %v5780
      %5845 = vst [vmem:[%s215 + $0xa0] sm:$0xff] %v5781
      %5846 = vst [vmem:[%s215 + $0xa8] sm:$0xff] %v5782
      %5847 = vst [vmem:[%s215 + $0xb0] sm:$0xff] %v5783
      %5848 = vst [vmem:[%s215 + $0xb8] sm:$0xff] %v5784
      %5849 = vst [vmem:[%s215 + $0xc0] sm:$0xff] %v5785
      %5850 = vst [vmem:[%s215 + $0xc8] sm:$0xff] %v5786
      %5851 = vst [vmem:[%s215 + $0xd0] sm:$0xff] %v5787
      %5852 = vst [vmem:[%s215 + $0xd8] sm:$0xff] %v5788
      %5853 = vst [vmem:[%s215 + $0xe0] sm:$0xff] %v5789
      %5854 = vst [vmem:[%s215 + $0xe8] sm:$0xff] %v5790
      %5855 = vst [vmem:[%s215 + $0xf0] sm:$0xff] %v5791
      %5856 = vst [vmem:[%s215 + $0xf8] sm:$0xff] %v5792
      %s5857 = smul.u32 32, %s18
      %s5858 = smul.u32 2, %s19
      %p5859 = scmp.lt.s32.totalorder %s5857, 63
      %s5860 = scalar_select %p5859, %s5857, 63
      %p5861 = scmp.lt.s32.totalorder %s5858, 1
      %s5862 = scalar_select %p5861, %s5858, 1
      %s5863 = smul.addr %s5860, 2
      %s5864 = sadd.s32 %s5862, %s5863
      %s5865 = smul.addr %s5864, 4
      %s5866 = scalar_lea.vmem %s3, %s5865
      // Predicated region
      $region33: #{conv3x3_bn_s1.1} parent=31 // pred_check
        %p5867 = pneg %p119
      $region34: #{conv3x3_bn_s1.1} parent=31 // pred_check_branch
        %5869 = sbr.rel (%p5867) target = $region36
      $region35: #{conv3x3_bn_s1.1} parent=31 // pred_region
        %s5870 = smul.u32 32, %s18
        %s5871 = smul.u32 2, %s19
      $region36: #{conv3x3_bn_s1.1} parent=31 // pred_fallthru
        _
    $region32: #{conv3x3_bn_s1.1} parent=5 // pred_fallthru
      _
    %p5872 = scmp.le.s32.totalorder 2, %s9
    // Predicated region
    $region37: #{conv3x3_bn_s1.1} parent=5 // pred_check
      %p5873 = pneg %p5872
    $region38: #{conv3x3_bn_s1.1} parent=5 // pred_check_branch
      %5875 = sbr.rel (%p5873) target = $region40
    $region39: #{conv3x3_bn_s1.1} parent=5 // pred_region
      %s5876 = ssub.s32 %s9, 2
      // Predicated region
      $region41: #{conv3x3_bn_s1.1} parent=39 // pred_check
        %p5877 = pneg %p125
      $region42: #{conv3x3_bn_s1.1} parent=39 // pred_check_branch
        %5879 = sbr.rel (%p5877) target = $region44
      $region43: #{conv3x3_bn_s1.1} parent=39 // pred_region
        %s5880 = smul.u32 32, %s20
        %s5881 = smul.u32 2, %s21
        %p5882 = scmp.lt.s32.totalorder %s5880, 63
        %s5883 = scalar_select %p5882, %s5880, 63
        %p5884 = scmp.lt.s32.totalorder %s5881, 1
        %s5885 = scalar_select %p5884, %s5881, 1
        %s5886 = smul.addr %s5883, 2
        %s5887 = sadd.s32 %s5885, %s5886
        %s5888 = smul.addr %s5887, 4
        %s5889 = scalar_lea.vmem %s3, %s5888
      $region44: #{conv3x3_bn_s1.1} parent=39 // pred_fallthru
        _
    $region40: #{conv3x3_bn_s1.1} parent=5 // pred_fallthru
      _
  $region6: #{conv3x3_bn_s1.1} parent=0 // loop_footer
    %s13 = sadd.s32 1, %s9
  $region7: #{conv3x3_bn_s1.1} parent=0 // loop_footer_branch
    %8 = sbr.rel target = $region3
  $region8: #{conv3x3_bn_s1.1} parent=0 // loop_exit
    _

</llo_original>
